<compile_context>
chip_gen: v5e
topology: v5e:2x2
jax: 0.10.0
libtpu: 0.0.40
codegen_flags: <defaults>
</compile_context>

<pallas_src>
import math
from functools import partial

import jax
import jax.numpy as jnp
from jax.experimental import pallas as pl
from jax.experimental.pallas import tpu as pltpu


def _rup(x, m):
    return ((x + m - 1) // m) * m


# ----------------------------------------------------------------------------
# GELU (fused into the dwconv kernel epilogue)
# ----------------------------------------------------------------------------
_SQRT_HALF = 0.7071067811865476
_SQRT_2_OVER_PI = 0.7978845608028654


def _erf_lowering_supported():
    """Eagerly probe (outside any jit) whether lax.erf lowers in Mosaic."""
    def k(x_ref, o_ref):
        o_ref[...] = jax.lax.erf(x_ref[...])

    try:
        out = pl.pallas_call(
            k, out_shape=jax.ShapeDtypeStruct((8, 128), jnp.float32)
        )(jnp.zeros((8, 128), jnp.float32))
        jax.block_until_ready(out)
        return True
    except Exception:
        return False


_GELU_EXACT = _erf_lowering_supported()


def _gelu(y, exact):
    if exact:  # exact erf-GELU: matches nn.GELU() default
        return 0.5 * y * (1.0 + jax.lax.erf(y * _SQRT_HALF))
    # TODO(synk): tanh-GELU fallback when erf does not lower in Mosaic
    # (deviates ~1e-3 abs from PyTorch's exact erf GELU).
    return 0.5 * y * (1.0 + jnp.tanh(_SQRT_2_OVER_PI * (y + 0.044715 * y * y * y)))


# ----------------------------------------------------------------------------
# Fused Linear kernel: (M,K) x (K,N) matmul + bias (+ optional ReLU) epilogue
# ----------------------------------------------------------------------------
def _matmul_bias_kernel(a_ref, b_ref, bias_ref, o_ref, acc_ref, *, relu):
    @pl.when(pl.program_id(2) == 0)
    def _():
        acc_ref[...] = jnp.zeros_like(acc_ref)

    a = a_ref[...]
    if a.dtype != jnp.bfloat16:          # bf16 operands on the MXU, f32 acc
        a = a.astype(jnp.bfloat16)
    acc_ref[...] += jnp.dot(a, b_ref[...], preferred_element_type=jnp.float32)

    @pl.when(pl.program_id(2) == pl.num_programs(2) - 1)
    def _():
        y = acc_ref[...] + bias_ref[...]
        if relu:
            y = jnp.maximum(y, 0.0)
        o_ref[...] = y.astype(o_ref.dtype)


def linear_bias(x, w_bf16, bias_1n, *, relu=False, out_dtype=jnp.float32,
                tm=512, tn=512, tk=1024):
    """x: (M, K) f32/bf16, w_bf16: (K, N) bf16 (pre-transposed), bias: (1, N) f32."""
    M, K = x.shape
    K2, N = w_bf16.shape
    assert K == K2
    tm = min(tm, _rup(M, 8))
    tn = min(tn, _rup(N, 128))
    tk = min(tk, _rup(K, 128))
    # v7x megacore: if a single tile covers the whole output, split N (stays
    # lane-dense >=128) or else M so >=2 "parallel" blocks exist.
    if (_rup(M, tm) // tm) * (_rup(N, tn) // tn) < 2:
        if N >= 256 and (N // 2) % 128 == 0:
            tn = N // 2
        elif M >= 16 and (M // 2) % 8 == 0:
            tm = M // 2
    Mp, Kp, Np = _rup(M, tm), _rup(K, tk), _rup(N, tn)
    # Only pad when shapes are not tile-aligned (no-op for the demo shapes).
    if (Mp, Kp) != (M, K):
        x = jnp.pad(x, ((0, Mp - M), (0, Kp - K)))
    if (Kp, Np) != (K, N):
        w_bf16 = jnp.pad(w_bf16, ((0, Kp - K), (0, Np - N)))
    if Np != N:
        bias_1n = jnp.pad(bias_1n, ((0, 0), (0, Np - N)))

    out = pl.pallas_call(
        partial(_matmul_bias_kernel, relu=relu),
        out_shape=jax.ShapeDtypeStruct((Mp, Np), out_dtype),
        grid_spec=pltpu.PrefetchScalarGridSpec(
            num_scalar_prefetch=0,
            grid=(Mp // tm, Np // tn, Kp // tk),
            in_specs=[pl.BlockSpec((tm, tk), lambda i, j, k: (i, k)),
                      pl.BlockSpec((tk, tn), lambda i, j, k: (k, j)),
                      pl.BlockSpec((1, tn), lambda i, j, k: (0, j))],
            out_specs=pl.BlockSpec((tm, tn), lambda i, j, k: (i, j)),
            scratch_shapes=[pltpu.VMEM((tm, tn), jnp.float32)]),
        compiler_params=pltpu.CompilerParams(
            dimension_semantics=("parallel", "parallel", "arbitrary")),
    )(x, w_bf16, bias_1n)
    if (Mp, Np) != (M, N):
        out = out[:M, :N]
    return out


# ----------------------------------------------------------------------------
# Fused depthwise 3x3 conv (stride 1, pad 1) + bias + GELU kernel, NHWC
# ----------------------------------------------------------------------------
def _dwconv_bias_gelu_kernel(x_ref, w_ref, b_ref, o_ref, xp_ref, *, H, W, exact_gelu):
    # In-kernel spatial zero-pad: zero the padded VMEM scratch slab and write
    # the (unpadded) activation block into its interior.  All VMEM traffic.
    xp_ref[...] = jnp.zeros_like(xp_ref)
    xp_ref[:, pl.ds(1, H), pl.ds(1, W), :] = x_ref[...].astype(jnp.float32)

    w = w_ref[...].astype(jnp.float32)        # (9, C), read once per block
    b = b_ref[...].astype(jnp.float32)        # (1, C)
    # f32 accumulation / transcendental math (bf16 only for HBM I/O -- v5e).
    acc = xp_ref[:, pl.ds(0, H), pl.ds(0, W), :] * w[0]
    for t in range(1, 9):
        kh, kw = t // 3, t % 3
        acc = acc + xp_ref[:, pl.ds(kh, H), pl.ds(kw, W), :] * w[t]
    y = _gelu(acc + b, exact_gelu)            # fused bias + GELU epilogue
    o_ref[...] = y.astype(o_ref.dtype)


def dwconv_bias_gelu(x_nhwc, w9c, bias_1c, *, out_dtype=jnp.bfloat16):
    """x: (B, H, W, C); w9c: (9, C) with w9c[kh*3+kw, c] = torch_w[c, 0, kh, kw]."""
    B, H, W, C = x_nhwc.shape
    Cp = _rup(C, 128)
    if Cp != C:                               # keep channels lane-dense (no-op here)
        x_nhwc = jnp.pad(x_nhwc, ((0, 0), (0, 0), (0, 0), (0, Cp - C)))
        w9c = jnp.pad(w9c, ((0, 0), (0, Cp - C)))
        bias_1c = jnp.pad(bias_1c, ((0, 0), (0, Cp - C)))
    out = pl.pallas_call(
        partial(_dwconv_bias_gelu_kernel, H=H, W=W, exact_gelu=_GELU_EXACT),
        out_shape=jax.ShapeDtypeStruct((B, H, W, Cp), out_dtype),
        grid=(B,),
        in_specs=[pl.BlockSpec((1, H, W, Cp), lambda b: (b, 0, 0, 0)),
                  pl.BlockSpec((9, Cp), lambda b: (0, 0)),
                  pl.BlockSpec((1, Cp), lambda b: (0, 0))],
        out_specs=pl.BlockSpec((1, H, W, Cp), lambda b: (b, 0, 0, 0)),
        scratch_shapes=[pltpu.VMEM((1, H + 2, W + 2, Cp), jnp.float32)],
        compiler_params=pltpu.CompilerParams(
            dimension_semantics=("parallel",)),
    )(x_nhwc, w9c, bias_1c)
    if Cp != C:
        out = out[..., :C]
    return out


# ----------------------------------------------------------------------------
# Mlp forward (matches Mlp.forward with drop=0.0)
# ----------------------------------------------------------------------------
def mlp_forward(x, params, H, W, *, linear=False):
    """x: (B, N, C) tokens with N == H*W -> (B, N, out_features) f32."""
    B, N, C = x.shape
    assert N == H * W
    x2 = x.reshape(B * N, C)
    # fc1 (+ ReLU if linear=True); bias fused in the epilogue; bf16 activation out.
    h = linear_bias(x2, params['w1'], params['b1'], relu=linear,
                    out_dtype=jnp.bfloat16)
    hidden = h.shape[-1]
    # DWConv + bias + GELU in one kernel; token n -> spatial (n // W, n % W).
    hc = dwconv_bias_gelu(h.reshape(B, H, W, hidden), params['wdw'], params['bdw'],
                          out_dtype=jnp.bfloat16)
    # fc2 with fused bias (reads bf16 directly).  Dropout(p=0.0) is identity.
    out = linear_bias(hc.reshape(B * N, hidden), params['w2'], params['b2'],
                      out_dtype=jnp.float32)
    return out.reshape(B, N, -1)


# ----------------------------------------------------------------------------
# Pure-JAX f32 reference (PyTorch semantics: exact erf GELU) and parameter init
# ----------------------------------------------------------------------------
def mlp_reference(x, params, H, W, *, linear=False):
    B, N, C = x.shape
    w1 = params['w1'].astype(jnp.float32)
    w2 = params['w2'].astype(jnp.float32)
    h = x.reshape(B * N, C) @ w1 + params['b1']
    if linear:
        h = jnp.maximum(h, 0.0)
    hc = h.reshape(B, H, W, -1)
    xp = jnp.pad(hc, ((0, 0), (1, 1), (1, 1), (0, 0)))
    acc = jnp.zeros_like(hc)
    for t in range(9):
        kh, kw = t // 3, t % 3
        acc = acc + xp[:, kh:kh + H, kw:kw + W, :] * params['wdw'][t]
    hc = jax.nn.gelu(acc + params['bdw'], approximate=False)
    out = hc.reshape(B * N, -1) @ w2 + params['b2']
    return out.reshape(B, N, -1)


def init_params(key, in_features, hidden_features, out_features):
    k1, k2, k3 = jax.random.split(key, 3)

    def trunc_normal(k, shape, std=0.02):   # Linear init: trunc_normal std=0.02
        return std * jax.random.truncated_normal(k, -2.0, 2.0, shape, jnp.float32)

    return {
        # Linear weights stored transposed (in, out), pre-cast to bf16 once;
        # biases stored (1, N) f32 so no per-call reshape/cast.
        'w1': trunc_normal(k1, (in_features, hidden_features)).astype(jnp.bfloat16),
        'b1': jnp.zeros((1, hidden_features), jnp.float32),
        'w2': trunc_normal(k2, (hidden_features, out_features)).astype(jnp.bfloat16),
        'b2': jnp.zeros((1, out_features), jnp.float32),
        # Depthwise Conv2d init: normal(0, sqrt(2/fan_out)), fan_out = 3*3*dim/dim = 9.
        'wdw': jax.random.normal(k3, (9, hidden_features), jnp.float32) * math.sqrt(2.0 / 9.0),
        'bdw': jnp.zeros((1, hidden_features), jnp.float32),
    }


# ----------------------------------------------------------------------------
if __name__ == "__main__":
    # Small shapes implied by the module: tokens on an H x W grid.
    B, H, W = 2, 8, 8
    N = H * W                                   # 64 tokens
    C_IN, C_HID, C_OUT = 128, 256, 128          # in_features, hidden, out

    key = jax.random.PRNGKey(0)
    pkey, xkey = jax.random.split(key)
    params = init_params(pkey, C_IN, C_HID, C_OUT)
    x = jax.random.normal(xkey, (B, N, C_IN), jnp.float32)

    fwd = jax.jit(partial(mlp_forward, H=H, W=W))
    out = fwd(x, params)
    jax.block_until_ready(out)
    assert out.shape == (B, N, C_OUT)

    ref = mlp_reference(x, params, H, W)
    max_err = float(jnp.max(jnp.abs(out - ref)))
    assert jnp.allclose(out, ref, rtol=2e-2, atol=2e-2), f"max abs err {max_err}"
    print("KERNEL_OK")
</pallas_src>

<mosaic_0001>
module attributes {stable_mosaic.version = 11 : i64} {
  func.func @k(%arg0: memref<8x128xf32, #tpu.memory_space<vmem>>, %arg1: memref<8x128xf32, #tpu.memory_space<vmem>>) attributes {dimension_semantics = [], scalar_prefetch = 0 : i64, scratch_operands = 0 : i64, tpu.core_type = #tpu.core_type<tc>} {
    %c0 = arith.constant 0 : index
    %c0_0 = arith.constant 0 : index
    %0 = vector.load %arg0[%c0, %c0_0] : memref<8x128xf32, #tpu.memory_space<vmem>>, vector<8x128xf32>
    %1 = math.erf %0 : vector<8x128xf32>
    %c0_1 = arith.constant 0 : index
    %c0_2 = arith.constant 0 : index
    %2 = vector.load %arg1[%c0_1, %c0_2] : memref<8x128xf32, #tpu.memory_space<vmem>>, vector<8x128xf32>
    tpu.vector_store %arg1[%c0_1, %c0_2], %1 {strides = array<i32>} : memref<8x128xf32, #tpu.memory_space<vmem>>, vector<8x128xf32>,
    return
  }
}

module attributes {stable_mosaic.version = 11 : i64} {
  func.func @_matmul_bias_kernel(%arg0: i32, %arg1: i32, %arg2: i32, %arg3: memref<128x128xf32, #tpu.memory_space<vmem>>, %arg4: memref<128x128xbf16, #tpu.memory_space<vmem>>, %arg5: memref<1x128xf32, #tpu.memory_space<vmem>>, %arg6: memref<128x128xbf16, #tpu.memory_space<vmem>>, %arg7: memref<128x128xf32, #tpu.memory_space<vmem>>) attributes {dimension_semantics = [#tpu.dimension_semantics<parallel>, #tpu.dimension_semantics<parallel>, #tpu.dimension_semantics<arbitrary>], iteration_bounds = array<i64: 1, 2, 1>, scalar_prefetch = 0 : i64, scratch_operands = 1 : i64, tpu.core_type = #tpu.core_type<tc>, window_params = [{transform_indices = @transform_0, window_bounds = array<i64: 128, 128>}, {transform_indices = @transform_1, window_bounds = array<i64: 128, 128>}, {transform_indices = @transform_2, window_bounds = array<i64: 1, 128>}, {transform_indices = @transform_3, window_bounds = array<i64: 128, 128>}]} {
    %c0_i32 = arith.constant 0 : i32
    %0 = arith.cmpi eq, %arg2, %c0_i32 : i32
    %1 = arith.extui %0 : i1 to i32
    %c0_i32_0 = arith.constant 0 : i32
    %2 = arith.cmpi ne, %1, %c0_i32_0 : i32
    scf.if %2 {
      %cst_10 = arith.constant 0.000000e+00 : f32
      %13 = vector.broadcast %cst_10 : f32 to vector<128x128xf32>
      %c0_11 = arith.constant 0 : index
      %c0_12 = arith.constant 0 : index
      %14 = vector.load %arg7[%c0_11, %c0_12] : memref<128x128xf32, #tpu.memory_space<vmem>>, vector<128x128xf32>
      tpu.vector_store %arg7[%c0_11, %c0_12], %13 {strides = array<i32>} : memref<128x128xf32, #tpu.memory_space<vmem>>, vector<128x128xf32>,
    } else {
    }
    %c0 = arith.constant 0 : index
    %c0_1 = arith.constant 0 : index
    %3 = vector.load %arg3[%c0, %c0_1] : memref<128x128xf32, #tpu.memory_space<vmem>>, vector<128x128xf32>
    %4 = arith.truncf %3 : vector<128x128xf32> to vector<128x128xbf16>
    %c0_2 = arith.constant 0 : index
    %c0_3 = arith.constant 0 : index
    %5 = vector.load %arg7[%c0_2, %c0_3] : memref<128x128xf32, #tpu.memory_space<vmem>>, vector<128x128xf32>
    %c0_4 = arith.constant 0 : index
    %c0_5 = arith.constant 0 : index
    %6 = vector.load %arg4[%c0_4, %c0_5] : memref<128x128xbf16, #tpu.memory_space<vmem>>, vector<128x128xbf16>
    %cst = arith.constant dense<0.000000e+00> : vector<128x128xf32>
    %7 = tpu.matmul %4, %6, %cst {dimension_numbers = #tpu.dot_dimension_numbers<[1], [0], [0], [1], [0, 0, 1, 1], [], []>} : vector<128x128xbf16>, vector<128x128xbf16>, vector<128x128xf32> -> vector<128x128xf32>
    %8 = arith.addf %5, %7 : vector<128x128xf32>
    %c0_6 = arith.constant 0 : index
    %c0_7 = arith.constant 0 : index
    %9 = vector.load %arg7[%c0_6, %c0_7] : memref<128x128xf32, #tpu.memory_space<vmem>>, vector<128x128xf32>
    tpu.vector_store %arg7[%c0_6, %c0_7], %8 {strides = array<i32>} : memref<128x128xf32, #tpu.memory_space<vmem>>, vector<128x128xf32>,
    %c0_i32_8 = arith.constant 0 : i32
    %10 = arith.cmpi eq, %arg2, %c0_i32_8 : i32
    %11 = arith.extui %10 : i1 to i32
    %c0_i32_9 = arith.constant 0 : i32
    %12 = arith.cmpi ne, %11, %c0_i32_9 : i32
    scf.if %12 {
      %c0_10 = arith.constant 0 : index
      %c0_11 = arith.constant 0 : index
      %13 = vector.load %arg7[%c0_10, %c0_11] : memref<128x128xf32, #tpu.memory_space<vmem>>, vector<128x128xf32>
      %c0_12 = arith.constant 0 : index
      %c0_13 = arith.constant 0 : index
      %14 = vector.load %arg5[%c0_12, %c0_13] : memref<1x128xf32, #tpu.memory_space<vmem>>, vector<1x128xf32>
      %15 = vector.broadcast %14 : vector<1x128xf32> to vector<128x128xf32>
      %16 = arith.addf %13, %15 : vector<128x128xf32>
      %17 = arith.truncf %16 : vector<128x128xf32> to vector<128x128xbf16>
      %c0_14 = arith.constant 0 : index
      %c0_15 = arith.constant 0 : index
      %18 = vector.load %arg6[%c0_14, %c0_15] : memref<128x128xbf16, #tpu.memory_space<vmem>>, vector<128x128xbf16>
      tpu.vector_store %arg6[%c0_14, %c0_15], %17 {strides = array<i32>} : memref<128x128xbf16, #tpu.memory_space<vmem>>, vector<128x128xbf16>,
    } else {
    }
    return
  }
  func.func @transform_0(%arg0: i32, %arg1: i32, %arg2: i32) -> (i32, i32) {
    %c0_i32 = arith.constant 0 : i32
    return %arg0, %arg2 : i32, i32
  }
  func.func @transform_1(%arg0: i32, %arg1: i32, %arg2: i32) -> (i32, i32) {
    %c0_i32 = arith.constant 0 : i32
    return %arg2, %arg1 : i32, i32
  }
  func.func @transform_2(%arg0: i32, %arg1: i32, %arg2: i32) -> (i32, i32) {
    %c0_i32 = arith.constant 0 : i32
    %c0_i32_0 = arith.constant 0 : i32
    return %c0_i32, %arg1 : i32, i32
  }
  func.func @transform_3(%arg0: i32, %arg1: i32, %arg2: i32) -> (i32, i32) {
    %c0_i32 = arith.constant 0 : i32
    return %arg0, %arg1 : i32, i32
  }
}

module attributes {stable_mosaic.version = 11 : i64} {
  func.func @_dwconv_bias_gelu_kernel(%arg0: i32, %arg1: memref<1x8x8x256xbf16, #tpu.memory_space<vmem>>, %arg2: memref<9x256xf32, #tpu.memory_space<vmem>>, %arg3: memref<1x256xf32, #tpu.memory_space<vmem>>, %arg4: memref<1x8x8x256xbf16, #tpu.memory_space<vmem>>, %arg5: memref<1x10x10x256xf32, #tpu.memory_space<vmem>>) attributes {dimension_semantics = [#tpu.dimension_semantics<parallel>], iteration_bounds = array<i64: 2>, scalar_prefetch = 0 : i64, scratch_operands = 1 : i64, tpu.core_type = #tpu.core_type<tc>, window_params = [{transform_indices = @transform_0, window_bounds = array<i64: 1, 8, 8, 256>}, {pipeline_mode = #tpu.pipeline_mode<synchronous>, transform_indices = @transform_1, window_bounds = array<i64: 9, 256>}, {pipeline_mode = #tpu.pipeline_mode<synchronous>, transform_indices = @transform_2, window_bounds = array<i64: 1, 256>}, {transform_indices = @transform_3, window_bounds = array<i64: 1, 8, 8, 256>}]} {
    %cst = arith.constant 0.000000e+00 : f32
    %0 = vector.broadcast %cst : f32 to vector<1x10x10x256xf32>
    %c0 = arith.constant 0 : index
    %c0_0 = arith.constant 0 : index
    %c0_1 = arith.constant 0 : index
    %c0_2 = arith.constant 0 : index
    %1 = vector.load %arg5[%c0, %c0_0, %c0_1, %c0_2] : memref<1x10x10x256xf32, #tpu.memory_space<vmem>>, vector<1x10x10x256xf32>
    tpu.vector_store %arg5[%c0, %c0_0, %c0_1, %c0_2], %0 {strides = array<i32>} : memref<1x10x10x256xf32, #tpu.memory_space<vmem>>, vector<1x10x10x256xf32>,
    %c0_3 = arith.constant 0 : index
    %c0_4 = arith.constant 0 : index
    %c0_5 = arith.constant 0 : index
    %c0_6 = arith.constant 0 : index
    %2 = vector.load %arg1[%c0_3, %c0_4, %c0_5, %c0_6] : memref<1x8x8x256xbf16, #tpu.memory_space<vmem>>, vector<1x8x8x256xbf16>
    %3 = arith.extf %2 : vector<1x8x8x256xbf16> to vector<1x8x8x256xf32>
    %c0_7 = arith.constant 0 : index
    %c1 = arith.constant 1 : index
    %c1_8 = arith.constant 1 : index
    %c0_9 = arith.constant 0 : index
    %4 = vector.load %arg5[%c0_7, %c1, %c1_8, %c0_9] : memref<1x10x10x256xf32, #tpu.memory_space<vmem>>, vector<1x8x8x256xf32>
    tpu.vector_store %arg5[%c0_7, %c1, %c1_8, %c0_9], %3 {strides = array<i32>} : memref<1x10x10x256xf32, #tpu.memory_space<vmem>>, vector<1x8x8x256xf32>,
    %c0_10 = arith.constant 0 : index
    %c0_11 = arith.constant 0 : index
    %5 = vector.load %arg2[%c0_10, %c0_11] : memref<9x256xf32, #tpu.memory_space<vmem>>, vector<9x256xf32>
    %c0_12 = arith.constant 0 : index
    %c0_13 = arith.constant 0 : index
    %6 = vector.load %arg3[%c0_12, %c0_13] : memref<1x256xf32, #tpu.memory_space<vmem>>, vector<1x256xf32>
    %c0_14 = arith.constant 0 : index
    %c0_15 = arith.constant 0 : index
    %c0_16 = arith.constant 0 : index
    %c0_17 = arith.constant 0 : index
    %7 = vector.load %arg5[%c0_14, %c0_15, %c0_16, %c0_17] : memref<1x10x10x256xf32, #tpu.memory_space<vmem>>, vector<1x8x8x256xf32>
    %8 = vector.extract_strided_slice %5 {offsets = [0, 0], sizes = [1, 256], strides = [1, 1]} : vector<9x256xf32> to vector<1x256xf32>
    %9 = vector.shape_cast %8 : vector<1x256xf32> to vector<256xf32>
    %10 = vector.shape_cast %9 : vector<256xf32> to vector<1x1x1x256xf32>
    %11 = vector.broadcast %10 : vector<1x1x1x256xf32> to vector<1x8x8x256xf32>
    %12 = arith.mulf %7, %11 : vector<1x8x8x256xf32>
    %c0_18 = arith.constant 0 : index
    %c0_19 = arith.constant 0 : index
    %c1_20 = arith.constant 1 : index
    %c0_21 = arith.constant 0 : index
    %13 = vector.load %arg5[%c0_18, %c0_19, %c1_20, %c0_21] : memref<1x10x10x256xf32, #tpu.memory_space<vmem>>, vector<1x8x8x256xf32>
    %14 = vector.extract_strided_slice %5 {offsets = [1, 0], sizes = [1, 256], strides = [1, 1]} : vector<9x256xf32> to vector<1x256xf32>
    %15 = vector.shape_cast %14 : vector<1x256xf32> to vector<256xf32>
    %16 = vector.shape_cast %15 : vector<256xf32> to vector<1x1x1x256xf32>
    %17 = vector.broadcast %16 : vector<1x1x1x256xf32> to vector<1x8x8x256xf32>
    %18 = arith.mulf %13, %17 : vector<1x8x8x256xf32>
    %19 = arith.addf %12, %18 : vector<1x8x8x256xf32>
    %c0_22 = arith.constant 0 : index
    %c0_23 = arith.constant 0 : index
    %c2 = arith.constant 2 : index
    %c0_24 = arith.constant 0 : index
    %20 = vector.load %arg5[%c0_22, %c0_23, %c2, %c0_24] : memref<1x10x10x256xf32, #tpu.memory_space<vmem>>, vector<1x8x8x256xf32>
    %21 = vector.extract_strided_slice %5 {offsets = [2, 0], sizes = [1, 256], strides = [1, 1]} : vector<9x256xf32> to vector<1x256xf32>
    %22 = vector.shape_cast %21 : vector<1x256xf32> to vector<256xf32>
    %23 = vector.shape_cast %22 : vector<256xf32> to vector<1x1x1x256xf32>
    %24 = vector.broadcast %23 : vector<1x1x1x256xf32> to vector<1x8x8x256xf32>
    %25 = arith.mulf %20, %24 : vector<1x8x8x256xf32>
    %26 = arith.addf %19, %25 : vector<1x8x8x256xf32>
    %c0_25 = arith.constant 0 : index
    %c1_26 = arith.constant 1 : index
    %c0_27 = arith.constant 0 : index
    %c0_28 = arith.constant 0 : index
    %27 = vector.load %arg5[%c0_25, %c1_26, %c0_27, %c0_28] : memref<1x10x10x256xf32, #tpu.memory_space<vmem>>, vector<1x8x8x256xf32>
    %28 = vector.extract_strided_slice %5 {offsets = [3, 0], sizes = [1, 256], strides = [1, 1]} : vector<9x256xf32> to vector<1x256xf32>
    %29 = vector.shape_cast %28 : vector<1x256xf32> to vector<256xf32>
    %30 = vector.shape_cast %29 : vector<256xf32> to vector<1x1x1x256xf32>
    %31 = vector.broadcast %30 : vector<1x1x1x256xf32> to vector<1x8x8x256xf32>
    %32 = arith.mulf %27, %31 : vector<1x8x8x256xf32>
    %33 = arith.addf %26, %32 : vector<1x8x8x256xf32>
    %c0_29 = arith.constant 0 : index
    %c1_30 = arith.constant 1 : index
    %c1_31 = arith.constant 1 : index
    %c0_32 = arith.constant 0 : index
    %34 = vector.load %arg5[%c0_29, %c1_30, %c1_31, %c0_32] : memref<1x10x10x256xf32, #tpu.memory_space<vmem>>, vector<1x8x8x256xf32>
    %35 = vector.extract_strided_slice %5 {offsets = [4, 0], sizes = [1, 256], strides = [1, 1]} : vector<9x256xf32> to vector<1x256xf32>
    %36 = vector.shape_cast %35 : vector<1x256xf32> to vector<256xf32>
    %37 = vector.shape_cast %36 : vector<256xf32> to vector<1x1x1x256xf32>
    %38 = vector.broadcast %37 : vector<1x1x1x256xf32> to vector<1x8x8x256xf32>
    %39 = arith.mulf %34, %38 : vector<1x8x8x256xf32>
    %40 = arith.addf %33, %39 : vector<1x8x8x256xf32>
    %c0_33 = arith.constant 0 : index
    %c1_34 = arith.constant 1 : index
    %c2_35 = arith.constant 2 : index
    %c0_36 = arith.constant 0 : index
    %41 = vector.load %arg5[%c0_33, %c1_34, %c2_35, %c0_36] : memref<1x10x10x256xf32, #tpu.memory_space<vmem>>, vector<1x8x8x256xf32>
    %42 = vector.extract_strided_slice %5 {offsets = [5, 0], sizes = [1, 256], strides = [1, 1]} : vector<9x256xf32> to vector<1x256xf32>
    %43 = vector.shape_cast %42 : vector<1x256xf32> to vector<256xf32>
    %44 = vector.shape_cast %43 : vector<256xf32> to vector<1x1x1x256xf32>
    %45 = vector.broadcast %44 : vector<1x1x1x256xf32> to vector<1x8x8x256xf32>
    %46 = arith.mulf %41, %45 : vector<1x8x8x256xf32>
    %47 = arith.addf %40, %46 : vector<1x8x8x256xf32>
    %c0_37 = arith.constant 0 : index
    %c2_38 = arith.constant 2 : index
    %c0_39 = arith.constant 0 : index
    %c0_40 = arith.constant 0 : index
    %48 = vector.load %arg5[%c0_37, %c2_38, %c0_39, %c0_40] : memref<1x10x10x256xf32, #tpu.memory_space<vmem>>, vector<1x8x8x256xf32>
    %49 = vector.extract_strided_slice %5 {offsets = [6, 0], sizes = [1, 256], strides = [1, 1]} : vector<9x256xf32> to vector<1x256xf32>
    %50 = vector.shape_cast %49 : vector<1x256xf32> to vector<256xf32>
    %51 = vector.shape_cast %50 : vector<256xf32> to vector<1x1x1x256xf32>
    %52 = vector.broadcast %51 : vector<1x1x1x256xf32> to vector<1x8x8x256xf32>
    %53 = arith.mulf %48, %52 : vector<1x8x8x256xf32>
    %54 = arith.addf %47, %53 : vector<1x8x8x256xf32>
    %c0_41 = arith.constant 0 : index
    %c2_42 = arith.constant 2 : index
    %c1_43 = arith.constant 1 : index
    %c0_44 = arith.constant 0 : index
    %55 = vector.load %arg5[%c0_41, %c2_42, %c1_43, %c0_44] : memref<1x10x10x256xf32, #tpu.memory_space<vmem>>, vector<1x8x8x256xf32>
    %56 = vector.extract_strided_slice %5 {offsets = [7, 0], sizes = [1, 256], strides = [1, 1]} : vector<9x256xf32> to vector<1x256xf32>
    %57 = vector.shape_cast %56 : vector<1x256xf32> to vector<256xf32>
    %58 = vector.shape_cast %57 : vector<256xf32> to vector<1x1x1x256xf32>
    %59 = vector.broadcast %58 : vector<1x1x1x256xf32> to vector<1x8x8x256xf32>
    %60 = arith.mulf %55, %59 : vector<1x8x8x256xf32>
    %61 = arith.addf %54, %60 : vector<1x8x8x256xf32>
    %c0_45 = arith.constant 0 : index
    %c2_46 = arith.constant 2 : index
    %c2_47 = arith.constant 2 : index
    %c0_48 = arith.constant 0 : index
    %62 = vector.load %arg5[%c0_45, %c2_46, %c2_47, %c0_48] : memref<1x10x10x256xf32, #tpu.memory_space<vmem>>, vector<1x8x8x256xf32>
    %63 = vector.extract_strided_slice %5 {offsets = [8, 0], sizes = [1, 256], strides = [1, 1]} : vector<9x256xf32> to vector<1x256xf32>
    %64 = vector.shape_cast %63 : vector<1x256xf32> to vector<256xf32>
    %65 = vector.shape_cast %64 : vector<256xf32> to vector<1x1x1x256xf32>
    %66 = vector.broadcast %65 : vector<1x1x1x256xf32> to vector<1x8x8x256xf32>
    %67 = arith.mulf %62, %66 : vector<1x8x8x256xf32>
    %68 = arith.addf %61, %67 : vector<1x8x8x256xf32>
    %69 = vector.shape_cast %6 : vector<1x256xf32> to vector<1x1x1x256xf32>
    %70 = vector.broadcast %69 : vector<1x1x1x256xf32> to vector<1x8x8x256xf32>
    %71 = arith.addf %68, %70 : vector<1x8x8x256xf32>
    %cst_49 = arith.constant 5.000000e-01 : f32
    %72 = vector.broadcast %cst_49 : f32 to vector<1x8x8x256xf32>
    %73 = arith.mulf %72, %71 : vector<1x8x8x256xf32>
    %cst_50 = arith.constant 4.471500e-02 : f32
    %74 = vector.broadcast %cst_50 : f32 to vector<1x8x8x256xf32>
    %75 = arith.mulf %74, %71 : vector<1x8x8x256xf32>
    %76 = arith.mulf %75, %71 : vector<1x8x8x256xf32>
    %77 = arith.mulf %76, %71 : vector<1x8x8x256xf32>
    %78 = arith.addf %71, %77 : vector<1x8x8x256xf32>
    %cst_51 = arith.constant 0.797884583 : f32
    %79 = vector.broadcast %cst_51 : f32 to vector<1x8x8x256xf32>
    %80 = arith.mulf %79, %78 : vector<1x8x8x256xf32>
    %81 = math.tanh %80 : vector<1x8x8x256xf32>
    %cst_52 = arith.constant 1.000000e+00 : f32
    %82 = vector.broadcast %cst_52 : f32 to vector<1x8x8x256xf32>
    %83 = arith.addf %82, %81 : vector<1x8x8x256xf32>
    %84 = arith.mulf %73, %83 : vector<1x8x8x256xf32>
    %85 = arith.truncf %84 : vector<1x8x8x256xf32> to vector<1x8x8x256xbf16>
    %c0_53 = arith.constant 0 : index
    %c0_54 = arith.constant 0 : index
    %c0_55 = arith.constant 0 : index
    %c0_56 = arith.constant 0 : index
    %86 = vector.load %arg4[%c0_53, %c0_54, %c0_55, %c0_56] : memref<1x8x8x256xbf16, #tpu.memory_space<vmem>>, vector<1x8x8x256xbf16>
    tpu.vector_store %arg4[%c0_53, %c0_54, %c0_55, %c0_56], %85 {strides = array<i32>} : memref<1x8x8x256xbf16, #tpu.memory_space<vmem>>, vector<1x8x8x256xbf16>,
    return
  }
  func.func @transform_0(%arg0: i32) -> (i32, i32, i32, i32) {
    %c0_i32 = arith.constant 0 : i32
    %c0_i32_0 = arith.constant 0 : i32
    %c0_i32_1 = arith.constant 0 : i32
    %c0_i32_2 = arith.constant 0 : i32
    return %arg0, %c0_i32, %c0_i32_0, %c0_i32_1 : i32, i32, i32, i32
  }
  func.func @transform_1(%arg0: i32) -> (i32, i32) {
    %c0_i32 = arith.constant 0 : i32
    %c0_i32_0 = arith.constant 0 : i32
    %c0_i32_1 = arith.constant 0 : i32
    return %c0_i32, %c0_i32_0 : i32, i32
  }
  func.func @transform_2(%arg0: i32) -> (i32, i32) {
    %c0_i32 = arith.constant 0 : i32
    %c0_i32_0 = arith.constant 0 : i32
    %c0_i32_1 = arith.constant 0 : i32
    return %c0_i32, %c0_i32_0 : i32, i32
  }
  func.func @transform_3(%arg0: i32) -> (i32, i32, i32, i32) {
    %c0_i32 = arith.constant 0 : i32
    %c0_i32_0 = arith.constant 0 : i32
    %c0_i32_1 = arith.constant 0 : i32
    %c0_i32_2 = arith.constant 0 : i32
    return %arg0, %c0_i32, %c0_i32_0, %c0_i32_1 : i32, i32, i32, i32
  }
}

module attributes {stable_mosaic.version = 11 : i64} {
  func.func @_matmul_bias_kernel(%arg0: i32, %arg1: i32, %arg2: i32, %arg3: memref<64x256xbf16, #tpu.memory_space<vmem>>, %arg4: memref<256x128xbf16, #tpu.memory_space<vmem>>, %arg5: memref<1x128xf32, #tpu.memory_space<vmem>>, %arg6: memref<64x128xf32, #tpu.memory_space<vmem>>, %arg7: memref<64x128xf32, #tpu.memory_space<vmem>>) attributes {dimension_semantics = [#tpu.dimension_semantics<parallel>, #tpu.dimension_semantics<parallel>, #tpu.dimension_semantics<arbitrary>], iteration_bounds = array<i64: 2, 1, 1>, scalar_prefetch = 0 : i64, scratch_operands = 1 : i64, tpu.core_type = #tpu.core_type<tc>, window_params = [{transform_indices = @transform_0, window_bounds = array<i64: 64, 256>}, {transform_indices = @transform_1, window_bounds = array<i64: 256, 128>}, {transform_indices = @transform_2, window_bounds = array<i64: 1, 128>}, {transform_indices = @transform_3, window_bounds = array<i64: 64, 128>}]} {
    %c0_i32 = arith.constant 0 : i32
    %0 = arith.cmpi eq, %arg2, %c0_i32 : i32
    %1 = arith.extui %0 : i1 to i32
    %c0_i32_0 = arith.constant 0 : i32
    %2 = arith.cmpi ne, %1, %c0_i32_0 : i32
    scf.if %2 {
      %cst_10 = arith.constant 0.000000e+00 : f32
      %12 = vector.broadcast %cst_10 : f32 to vector<64x128xf32>
      %c0_11 = arith.constant 0 : index
      %c0_12 = arith.constant 0 : index
      %13 = vector.load %arg7[%c0_11, %c0_12] : memref<64x128xf32, #tpu.memory_space<vmem>>, vector<64x128xf32>
      tpu.vector_store %arg7[%c0_11, %c0_12], %12 {strides = array<i32>} : memref<64x128xf32, #tpu.memory_space<vmem>>, vector<64x128xf32>,
    } else {
    }
    %c0 = arith.constant 0 : index
    %c0_1 = arith.constant 0 : index
    %3 = vector.load %arg3[%c0, %c0_1] : memref<64x256xbf16, #tpu.memory_space<vmem>>, vector<64x256xbf16>
    %c0_2 = arith.constant 0 : index
    %c0_3 = arith.constant 0 : index
    %4 = vector.load %arg7[%c0_2, %c0_3] : memref<64x128xf32, #tpu.memory_space<vmem>>, vector<64x128xf32>
    %c0_4 = arith.constant 0 : index
    %c0_5 = arith.constant 0 : index
    %5 = vector.load %arg4[%c0_4, %c0_5] : memref<256x128xbf16, #tpu.memory_space<vmem>>, vector<256x128xbf16>
    %cst = arith.constant dense<0.000000e+00> : vector<64x128xf32>
    %6 = tpu.matmul %3, %5, %cst {dimension_numbers = #tpu.dot_dimension_numbers<[1], [0], [0], [1], [0, 0, 1, 1], [], []>} : vector<64x256xbf16>, vector<256x128xbf16>, vector<64x128xf32> -> vector<64x128xf32>
    %7 = arith.addf %4, %6 : vector<64x128xf32>
    %c0_6 = arith.constant 0 : index
    %c0_7 = arith.constant 0 : index
    %8 = vector.load %arg7[%c0_6, %c0_7] : memref<64x128xf32, #tpu.memory_space<vmem>>, vector<64x128xf32>
    tpu.vector_store %arg7[%c0_6, %c0_7], %7 {strides = array<i32>} : memref<64x128xf32, #tpu.memory_space<vmem>>, vector<64x128xf32>,
    %c0_i32_8 = arith.constant 0 : i32
    %9 = arith.cmpi eq, %arg2, %c0_i32_8 : i32
    %10 = arith.extui %9 : i1 to i32
    %c0_i32_9 = arith.constant 0 : i32
    %11 = arith.cmpi ne, %10, %c0_i32_9 : i32
    scf.if %11 {
      %c0_10 = arith.constant 0 : index
      %c0_11 = arith.constant 0 : index
      %12 = vector.load %arg7[%c0_10, %c0_11] : memref<64x128xf32, #tpu.memory_space<vmem>>, vector<64x128xf32>
      %c0_12 = arith.constant 0 : index
      %c0_13 = arith.constant 0 : index
      %13 = vector.load %arg5[%c0_12, %c0_13] : memref<1x128xf32, #tpu.memory_space<vmem>>, vector<1x128xf32>
      %14 = vector.broadcast %13 : vector<1x128xf32> to vector<64x128xf32>
      %15 = arith.addf %12, %14 : vector<64x128xf32>
      %c0_14 = arith.constant 0 : index
      %c0_15 = arith.constant 0 : index
      %16 = vector.load %arg6[%c0_14, %c0_15] : memref<64x128xf32, #tpu.memory_space<vmem>>, vector<64x128xf32>
      tpu.vector_store %arg6[%c0_14, %c0_15], %15 {strides = array<i32>} : memref<64x128xf32, #tpu.memory_space<vmem>>, vector<64x128xf32>,
    } else {
    }
    return
  }
  func.func @transform_0(%arg0: i32, %arg1: i32, %arg2: i32) -> (i32, i32) {
    %c0_i32 = arith.constant 0 : i32
    return %arg0, %arg2 : i32, i32
  }
  func.func @transform_1(%arg0: i32, %arg1: i32, %arg2: i32) -> (i32, i32) {
    %c0_i32 = arith.constant 0 : i32
    return %arg2, %arg1 : i32, i32
  }
  func.func @transform_2(%arg0: i32, %arg1: i32, %arg2: i32) -> (i32, i32) {
    %c0_i32 = arith.constant 0 : i32
    %c0_i32_0 = arith.constant 0 : i32
    return %c0_i32, %arg1 : i32, i32
  }
  func.func @transform_3(%arg0: i32, %arg1: i32, %arg2: i32) -> (i32, i32) {
    %c0_i32 = arith.constant 0 : i32
    return %arg0, %arg1 : i32, i32
  }
}

</mosaic_0001>

<llo_original>
// kernel: tpu_custom_call.1
$region0: #{tpu_custom_call.1}
  #allocation0 [shape = 'u32[]', space=smem, size = 0x4, offset = 0x4, fixed_abs, tag = 'smem constant byte address 0x4 - core index']
  #allocation1 [shape = 'u32[72,128]{1,0:T(1,128)}', space=vmem, size = 0x9000, scoped, tag = 'internal scratch']
  %s0 = inlined_call_operand.hbm [shape: f32[8,128], index: 0, kind: input, shape index: {}]
  %s1 = inlined_call_operand.hbm [shape: f32[8,128], index: 1, kind: output, shape index: {}]
  %s2 = sld [smem:[#allocation0]]
  $region18: #{tpu_custom_call.1} parent=0
    _
  %s4 = ssub.s32 1, %s2
  %s5 = scalar_select 0, %s4, %s2
  $region1: #{tpu_custom_call.1} parent=0
    #allocation2 [shape = 'u8[4096]{0}', space=vmem, size = 0x1000, scoped, tag = 'input window, operand 0, single buffered']
    #allocation3 [shape = 's32[1]{0}', space=sflag, size = 0x4, scoped, tag = 'scoped memory for tpu_custom_call.1']
    #allocation4 [shape = 's32[1]{0}', space=sflag, size = 0x4, scoped, tag = 'scoped memory for tpu_custom_call.1']
    #allocation5 [shape = 'u8[4096]{0}', space=vmem, size = 0x1000, scoped, tag = 'output window, operand 0, single buffered']
    %6 = vsyncpa [#allocation3], 0
    %7 = vsyncpa [#allocation4], 0
    // Predicated region
    $region2: #{tpu_custom_call.1} parent=1 // pred_check
      _
    $region3: #{tpu_custom_call.1} parent=1 // pred_check_branch
      %9 = sbr.rel (0) target = $region5
    $region4: #{tpu_custom_call.1} parent=1 // pred_region
      %11 = vsyncadd [#allocation3], 0
      %s13 = sshll.u32 %s0, 4
      %s14 = int_to_ptr.hbm [resolvable:$true] %s13
      %s15 = sshll.u32 [#allocation2], 4
      %s16 = int_to_ptr.vmem [resolvable:$true] %s15
      %18 = dma.hbm_to_vmem [thread:$0]  %s14, 128, %s16, [#allocation3]
    $region5: #{tpu_custom_call.1} parent=1 // pred_fallthru
      _
    // Predicated region
    $region6: #{tpu_custom_call.1} parent=1 // pred_check
      _
    $region7: #{tpu_custom_call.1} parent=1 // pred_check_branch
      %20 = sbr.rel (0) target = $region9
    $region8: #{tpu_custom_call.1} parent=1 // pred_region
      %22 = dma.done [#allocation3], 128
    $region9: #{tpu_custom_call.1} parent=1 // pred_fallthru
      _
    %v23 = vld [vmem:[#allocation2] sm:$0xff]
    %v24 = vmul.f32 %v23, %v23
    %v25 = vmin.f32 16.0, %v24
    %v26 = vmul.f32 %v25, 2.1237322e-06
    %v27 = vadd.f32 %v26, 0.00028619796
    %v28 = vmul.f32 %v25, %v27
    %v29 = vadd.f32 %v28, 0.0036580483
    %v30 = vmul.f32 %v25, %v29
    %v31 = vadd.f32 %v30, 0.05243302
    %v32 = vmul.f32 %v25, %v31
    %v33 = vadd.f32 %v32, 0.18741608
    %v34 = vmul.f32 %v25, %v33
    %v35 = vadd.f32 %v34, 1.1283791
    %v36 = vmul.f32 %v23, %v35
    %v37 = vmul.f32 %v25, 3.8918573e-05
    %v38 = vadd.f32 %v37, 0.001143296
    %v39 = vmul.f32 %v25, %v38
    %v40 = vadd.f32 %v39, 0.014752088
    %v41 = vmul.f32 %v25, %v40
    %v42 = vadd.f32 %v41, 0.112945676
    %v43 = vmul.f32 %v25, %v42
    %v44 = vadd.f32 %v43, 0.4994258
    %v45 = vmul.f32 %v25, %v44
    %v46 = vadd.f32 %v45, 1.0
    %v47 = vrcp.pop %v46
    %v48 = vmul.f32 %v46, %v47
    %v49 = vsub.f32 1.0, %v48
    %v50 = vmul.f32 %v47, %v49
    %v51 = vadd.f32 %v47, %v50
    %vm52 = vweird.f32 %v46
    %vm53 = vweird.f32 %v47
    %vm54 = vmor %vm52, %vm53
    %v55 = vsel %vm54, %v47, %v51
    %v56 = vand.u32 2147483647, %v46
    %vm57 = vcmp.eq.f32.partialorder %v56, 8.507059e+37
    %v58 = vand.u32 %v46, 2147483648
    %v59 = vor.u32 1.1754944e-38, %v58
    %v60 = vsel %vm57, %v59, %v55
    %v61 = vmul.f32 %v36, %v60
    %v62 = vmin.f32 %v61, 1.0
    %v63 = vmax.f32 %v62, -1.0
    %64 = vst [vmem:[#allocation5] sm:$0xff] %v63
    // Predicated region
    $region10: #{tpu_custom_call.1} parent=1 // pred_check
      _
    $region11: #{tpu_custom_call.1} parent=1 // pred_check_branch
      %66 = sbr.rel (0) target = $region13
    $region12: #{tpu_custom_call.1} parent=1 // pred_region
      %68 = vsyncadd [#allocation4], 0
      %s70 = sshll.u32 [#allocation5], 4
      %s71 = int_to_ptr.vmem [resolvable:$true] %s70
      %s72 = sshll.u32 %s1, 4
      %s73 = int_to_ptr.hbm [resolvable:$true] %s72
      %75 = dma.vmem_to_hbm [thread:$0]  %s71, 128, %s73, [#allocation4]
    $region13: #{tpu_custom_call.1} parent=1 // pred_fallthru
      _
    // Predicated region
    $region14: #{tpu_custom_call.1} parent=1 // pred_check
      _
    $region15: #{tpu_custom_call.1} parent=1 // pred_check_branch
      %77 = sbr.rel (0) target = $region17
    $region16: #{tpu_custom_call.1} parent=1 // pred_region
      %79 = dma.done [#allocation4], 128
    $region17: #{tpu_custom_call.1} parent=1 // pred_fallthru
      _
    %80 = vsyncpa [#allocation3], 1
    %81 = vsyncpa [#allocation4], 1

// kernel: mlp_forward.3
$region0: #{mlp_forward.3}
  #allocation0 [shape = 'u32[]', space=smem, size = 0x4, offset = 0x4, fixed_abs, tag = 'smem constant byte address 0x4 - core index']
  #allocation1 [shape = 'u32[72,128]{1,0:T(1,128)}', space=vmem, size = 0x9000, scoped, tag = 'internal scratch']
  #allocation2 [shape = 'f32[128,128]{1,0:T(8,128)}', space=vmem, size = 0x10000, scoped, tag = 'scratch operand']
  %s0 = inlined_call_operand.hbm [shape: f32[128,128], index: 0, kind: input, shape index: {}]
  %s1 = inlined_call_operand.hbm [shape: bf16[128,256], index: 1, kind: input, shape index: {}]
  %s2 = inlined_call_operand.hbm [shape: f32[1,256], index: 2, kind: input, shape index: {}]
  %s3 = inlined_call_operand.vmem [shape: bf16[128,256], index: 3, kind: output, shape index: {}]
  %s4 = sld [smem:[#allocation0]]
  $region102: #{mlp_forward.3} parent=0
    _
  %s6 = ssub.s32 1, %s4
  %s7 = scalar_select 0, %s6, %s4
  $region1: #{mlp_forward.3} parent=0
    #allocation3 [shape = 'u8[65536]{0}', space=vmem, size = 0x10000, scoped, tag = 'input window, operand 0, single buffered']
    #allocation4 [shape = 's32[2]{0}', space=sflag, size = 0x8, scoped, tag = 'scoped memory for mlp_forward.3']
    #allocation5 [shape = 'u8[65536]{0}', space=vmem, size = 0x10000, scoped, tag = 'input window, operand 1']
    #allocation6 [shape = 's32[2]{0}', space=sflag, size = 0x8, scoped, tag = 'scoped memory for mlp_forward.3']
    #allocation7 [shape = 'u8[1024]{0}', space=vmem, size = 0x400, scoped, tag = 'input window, operand 2']
    #allocation8 [shape = 'u8[65536]{0}', space=vmem, size = 0x10000, scoped, tag = 'output window, operand 0']
    %8 = vsyncpa [#allocation4], 0
    %9 = vsyncpa [#allocation6], 0
    %s10 = scalar_lea.sflag [#allocation6], 1
    %11 = vsyncpa %s10, 0
    loop: start=0, step=1, limit=4
    $region2: #{mlp_forward.3} parent=1 // loop_pre_header
      _
    $region3: #{mlp_forward.3} parent=1 // loop_header
      %s13 = sphi 0, %s17
      %p14 = scmp.ge.s32.totalorder %s13, 4
      %s20 = sphi 0, %s39
      %s21 = sphi 0, %s35
      %s22 = sphi 0, %s31
      %s23 = sphi 0, %s20
      %s24 = sphi 0, %s21
      %s25 = sphi 0, %s22
      %s26 = sphi 0, %s23
      %s27 = sphi 0, %s24
      %s28 = sphi 0, %s25
      %s44 = sphi 0, %s46
      %s47 = sphi 0, %s44
      %s48 = sphi 0, %s47
      %s64 = sphi 0, %s48
      %s72 = sphi 0, %s74
      %s75 = sphi 0, %s72
      %s76 = sphi 0, %s75
      %s92 = sphi 0, %s76
      %s98 = sphi 0, %s100
      %s101 = sphi 0, %s98
      %s102 = sphi 0, %s101
      %s118 = sphi 0, %s102
      %s126 = sphi 0, %s128
      %s129 = sphi 0, %s126
      %s130 = sphi 0, %s129
      %s146 = sphi 0, %s130
    $region4: #{mlp_forward.3} parent=1 // loop_header_branch
      %16 = sbr.rel (%p14) target = $region8
    $region5: #{mlp_forward.3} parent=1 // loop_body
      %s18 = ssub.s32 %s13, 1
      %s19 = ssub.s32 %s13, 2
      %s29 = sadd.s32 1, %s22
      %p30 = scmp.ge.s32.totalorder %s29, 1
      %s31 = scalar_select %p30, 0, %s29
      %s32 = sadd.s32 1, %s21
      %s33 = scalar_select %p30, %s32, %s21
      %p34 = scmp.ge.s32.totalorder %s33, 2
      %s35 = scalar_select %p34, 0, %s33
      %s36 = sadd.s32 1, %s20
      %s37 = scalar_select %p34, %s36, %s20
      %p38 = scmp.ge.s32.totalorder %s37, 1
      %s39 = scalar_select %p38, 0, %s37
      %s40 = ssub.s32 %s20, %s39
      %s41 = ssub.s32 %s22, %s31
      %s42 = sor.u32 %s40, %s41
      %p43 = scmp.eq.s32.totalorder %s42, 0
      %s45 = sadd.s32 %s44, 1
      %s46 = scalar_select %p43, %s44, %s45
      %p49 = pneg %p43
      %p50 = scmp.eq.s32.totalorder %s13, 1
      %p51 = por %p49, %p50
      %p52 = scmp.ne.s32.totalorder %s44, %s47
      %p53 = scmp.eq.s32.totalorder %s13, 0
      %p54 = por %p52, %p53
      %p55 = scmp.ne.s32.totalorder %s44, %s47
      %p56 = scmp.eq.s32.totalorder %s18, 1
      %p57 = por %p55, %p56
      %p58 = scmp.ne.s32.totalorder %s47, %s48
      %p59 = scmp.eq.s32.totalorder %s18, 0
      %p60 = por %p58, %p59
      %p61 = scmp.ne.s32.totalorder %s47, %s48
      %p62 = scmp.eq.s32.totalorder %s19, 1
      %p63 = por %p61, %p62
      %p65 = scmp.ne.s32.totalorder %s48, %s64
      %p66 = scmp.eq.s32.totalorder %s19, 0
      %p67 = por %p65, %p66
      %s68 = ssub.s32 %s22, %s31
      %s69 = ssub.s32 %s21, %s35
      %s70 = sor.u32 %s68, %s69
      %p71 = scmp.eq.s32.totalorder %s70, 0
      %s73 = sadd.s32 %s72, 1
      %s74 = scalar_select %p71, %s72, %s73
      %p77 = pneg %p71
      %p78 = scmp.eq.s32.totalorder %s13, 1
      %p79 = por %p77, %p78
      %p80 = scmp.ne.s32.totalorder %s72, %s75
      %p81 = scmp.eq.s32.totalorder %s13, 0
      %p82 = por %p80, %p81
      %p83 = scmp.ne.s32.totalorder %s72, %s75
      %p84 = scmp.eq.s32.totalorder %s18, 1
      %p85 = por %p83, %p84
      %p86 = scmp.ne.s32.totalorder %s75, %s76
      %p87 = scmp.eq.s32.totalorder %s18, 0
      %p88 = por %p86, %p87
      %p89 = scmp.ne.s32.totalorder %s75, %s76
      %p90 = scmp.eq.s32.totalorder %s19, 1
      %p91 = por %p89, %p90
      %p93 = scmp.ne.s32.totalorder %s76, %s92
      %p94 = scmp.eq.s32.totalorder %s19, 0
      %p95 = por %p93, %p94
      %s96 = ssub.s32 %s21, %s35
      %p97 = scmp.eq.s32.totalorder %s96, 0
      %s99 = sadd.s32 %s98, 1
      %s100 = scalar_select %p97, %s98, %s99
      %p103 = pneg %p97
      %p104 = scmp.eq.s32.totalorder %s13, 1
      %p105 = por %p103, %p104
      %p106 = scmp.ne.s32.totalorder %s98, %s101
      %p107 = scmp.eq.s32.totalorder %s13, 0
      %p108 = por %p106, %p107
      %p109 = scmp.ne.s32.totalorder %s98, %s101
      %p110 = scmp.eq.s32.totalorder %s18, 1
      %p111 = por %p109, %p110
      %p112 = scmp.ne.s32.totalorder %s101, %s102
      %p113 = scmp.eq.s32.totalorder %s18, 0
      %p114 = por %p112, %p113
      %p115 = scmp.ne.s32.totalorder %s101, %s102
      %p116 = scmp.eq.s32.totalorder %s19, 1
      %p117 = por %p115, %p116
      %p119 = scmp.ne.s32.totalorder %s102, %s118
      %p120 = scmp.eq.s32.totalorder %s19, 0
      %p121 = por %p119, %p120
      %s122 = ssub.s32 %s20, %s39
      %s123 = ssub.s32 %s21, %s35
      %s124 = sor.u32 %s122, %s123
      %p125 = scmp.eq.s32.totalorder %s124, 0
      %s127 = sadd.s32 %s126, 1
      %s128 = scalar_select %p125, %s126, %s127
      %p131 = pneg %p125
      %p132 = scmp.eq.s32.totalorder %s13, 1
      %p133 = por %p131, %p132
      %p134 = scmp.ne.s32.totalorder %s126, %s129
      %p135 = scmp.eq.s32.totalorder %s13, 0
      %p136 = por %p134, %p135
      %p137 = scmp.ne.s32.totalorder %s126, %s129
      %p138 = scmp.eq.s32.totalorder %s18, 1
      %p139 = por %p137, %p138
      %p140 = scmp.ne.s32.totalorder %s129, %s130
      %p141 = scmp.eq.s32.totalorder %s18, 0
      %p142 = por %p140, %p141
      %p143 = scmp.ne.s32.totalorder %s129, %s130
      %p144 = scmp.eq.s32.totalorder %s19, 1
      %p145 = por %p143, %p144
      %p147 = scmp.ne.s32.totalorder %s130, %s146
      %p148 = scmp.eq.s32.totalorder %s19, 0
      %p149 = por %p147, %p148
      %p150 = scmp.le.s32.totalorder 1, %s13
      %p151 = scmp.lt.s32.totalorder %s13, 3
      %p152 = pnand %p150, %p151
      %p153 = pneg %p152
      // Predicated region
      $region9: #{mlp_forward.3} parent=5 // pred_check
        _
      $region10: #{mlp_forward.3} parent=5 // pred_check_branch
        %155 = sbr.rel (%p152) target = $region12
      $region11: #{mlp_forward.3} parent=5 // pred_region
        %s156 = ssub.s32 %s13, 1
        // Predicated region
        $region13: #{mlp_forward.3} parent=11 // pred_check
          %p157 = pneg %p60
        $region14: #{mlp_forward.3} parent=11 // pred_check_branch
          %159 = sbr.rel (%p157) target = $region16
        $region15: #{mlp_forward.3} parent=11 // pred_region
          %s160 = smul.u32 16, %s23
          %162 = vsyncadd [#allocation4], 0
          %s163 = sadd.s32 %s25, %s160
          %s164 = smul.addr %s163, 8
          %s165 = scalar_lea.hbm %s0, %s164
          %s166 = sshll.u32 %s165, 4
          %s167 = int_to_ptr.hbm [resolvable:$true] %s166
          %s168 = sshll.u32 [#allocation3], 4
          %s169 = int_to_ptr.vmem [resolvable:$true] %s168
          %174 = dma.hbm_to_vmem [thread:$0]  %s167, 2048, %s169, [#allocation4], 128, 128, 8
        $region16: #{mlp_forward.3} parent=11 // pred_fallthru
          _
      $region12: #{mlp_forward.3} parent=5 // pred_fallthru
        _
      %p175 = scmp.lt.s32.totalorder %s13, 2
      // Predicated region
      $region17: #{mlp_forward.3} parent=5 // pred_check
        %p176 = pneg %p175
      $region18: #{mlp_forward.3} parent=5 // pred_check_branch
        %178 = sbr.rel (%p176) target = $region20
      $region19: #{mlp_forward.3} parent=5 // pred_region
        // Predicated region
        $region21: #{mlp_forward.3} parent=19 // pred_check
          %p179 = pneg %p82
        $region22: #{mlp_forward.3} parent=19 // pred_check_branch
          %181 = sbr.rel (%p179) target = $region24
        $region23: #{mlp_forward.3} parent=19 // pred_region
          %s182 = sand.u32 %s13, 1
          %s183 = scalar_lea.sflag [#allocation6], %s182
          %s184 = sand.u32 %s72, 1
          %s185 = smul.addr %s184, 64
          %s186 = scalar_lea.vmem [#allocation5], %s185
          %s187 = smul.u32 16, %s22
          %189 = vsyncadd %s183, 0
          %s190 = smul.addr %s187, 2
          %s191 = sadd.s32 %s21, %s190
          %s192 = smul.addr %s191, 4
          %s193 = scalar_lea.hbm %s1, %s192
          %s194 = sshll.u32 %s193, 4
          %s195 = int_to_ptr.hbm [resolvable:$true] %s194
          %s196 = sshll.u32 %s186, 4
          %s197 = int_to_ptr.vmem [resolvable:$true] %s196
          %202 = dma.hbm_to_vmem [thread:$0]  %s195, 1024, %s197, %s183, 128, 64, 4
        $region24: #{mlp_forward.3} parent=19 // pred_fallthru
          _
        // Predicated region
        $region25: #{mlp_forward.3} parent=19 // pred_check
          %p203 = pneg %p108
        $region26: #{mlp_forward.3} parent=19 // pred_check_branch
          %205 = sbr.rel (%p203) target = $region28
        $region27: #{mlp_forward.3} parent=19 // pred_region
          %s206 = sand.u32 %s13, 1
          %s207 = scalar_lea.sflag [#allocation6], %s206
          %s208 = sand.u32 %s98, 1
          %s209 = scalar_lea.vmem [#allocation7], %s208
          %211 = vsyncadd %s207, 0
          %s212 = scalar_lea.hbm %s2, %s21
          %s214 = sshll.u32 %s212, 4
          %s215 = int_to_ptr.hbm [resolvable:$true] %s214
          %s216 = sshll.u32 %s209, 4
          %s217 = int_to_ptr.vmem [resolvable:$true] %s216
          %219 = dma.hbm_to_vmem [thread:$0]  %s215, 16, %s217, %s207
        $region28: #{mlp_forward.3} parent=19 // pred_fallthru
          _
      $region20: #{mlp_forward.3} parent=5 // pred_fallthru
        _
      %p220 = scmp.le.s32.totalorder 1, %s13
      %p221 = scmp.lt.s32.totalorder %s13, 3
      %p222 = pnand %p220, %p221
      %p223 = pneg %p222
      // Predicated region
      $region29: #{mlp_forward.3} parent=5 // pred_check
        _
      $region30: #{mlp_forward.3} parent=5 // pred_check_branch
        %225 = sbr.rel (%p222) target = $region32
      $region31: #{mlp_forward.3} parent=5 // pred_region
        %s226 = ssub.s32 %s13, 1
        // Predicated region
        $region33: #{mlp_forward.3} parent=31 // pred_check
          %p227 = pneg %p60
        $region34: #{mlp_forward.3} parent=31 // pred_check_branch
          %229 = sbr.rel (%p227) target = $region36
        $region35: #{mlp_forward.3} parent=31 // pred_region
          %231 = dma.done [#allocation4], 2048
        $region36: #{mlp_forward.3} parent=31 // pred_fallthru
          _
        %s232 = sand.u32 %s18, 1
        %s233 = scalar_lea.sflag [#allocation6], %s232
        %s234 = sand.u32 %s75, 1
        %s235 = smul.addr %s234, 64
        %s236 = scalar_lea.vmem [#allocation5], %s235
        // Predicated region
        $region37: #{mlp_forward.3} parent=31 // pred_check
          %p237 = pneg %p88
        $region38: #{mlp_forward.3} parent=31 // pred_check_branch
          %239 = sbr.rel (%p237) target = $region40
        $region39: #{mlp_forward.3} parent=31 // pred_region
          %241 = dma.done %s233, 1024
        $region40: #{mlp_forward.3} parent=31 // pred_fallthru
          _
        %s242 = sand.u32 %s18, 1
        %s243 = scalar_lea.sflag [#allocation6], %s242
        %s244 = sand.u32 %s101, 1
        %s245 = scalar_lea.vmem [#allocation7], %s244
        // Predicated region
        $region41: #{mlp_forward.3} parent=31 // pred_check
          %p246 = pneg %p114
        $region42: #{mlp_forward.3} parent=31 // pred_check_branch
          %248 = sbr.rel (%p246) target = $region44
        $region43: #{mlp_forward.3} parent=31 // pred_region
          %250 = dma.done %s243, 16
        $region44: #{mlp_forward.3} parent=31 // pred_fallthru
          _
        %p251 = pneg %p60
        %p252 = pneg %p57
        %s253 = sand.u32 %s18, 1
        %s254 = scalar_lea.sflag [#allocation6], %s253
        %s255 = sand.u32 %s75, 1
        %s256 = smul.addr %s255, 64
        %s257 = scalar_lea.vmem [#allocation5], %s256
        %p258 = pneg %p88
        %p259 = pneg %p85
        %s260 = sand.u32 %s18, 1
        %s261 = scalar_lea.sflag [#allocation6], %s260
        %s262 = sand.u32 %s101, 1
        %s263 = scalar_lea.vmem [#allocation7], %s262
        %p264 = pneg %p114
        %p265 = pneg %p111
        %p266 = pneg %p142
        %p267 = pneg %p139
        %s268 = sand.u32 %s129, 1
        %s269 = sand.u32 %s129, 1
        %s270 = smul.addr %s269, 64
        %s271 = scalar_lea.vmem [#allocation8], %s270
        %s272 = smul.u32 16, %s23
        %s273 = smul.u32 16, %s25
        %s274 = smul.u32 16, %s23
        %p275 = scmp.eq.s32.totalorder %s25, 0
        // Predicated region
        $region45: #{mlp_forward.3} parent=31 // pred_check
          %p276 = pneg %p275
        $region46: #{mlp_forward.3} parent=31 // pred_check_branch
          %278 = sbr.rel (%p276) target = $region48
        $region47: #{mlp_forward.3} parent=31 // pred_region
          %279 = vst [vmem:[#allocation2] sm:$0xff] 0.0
          %280 = vst [vmem:[#allocation2 + $0x8] sm:$0xff] 0.0
          %281 = vst [vmem:[#allocation2 + $0x10] sm:$0xff] 0.0
          %282 = vst [vmem:[#allocation2 + $0x18] sm:$0xff] 0.0
          %283 = vst [vmem:[#allocation2 + $0x20] sm:$0xff] 0.0
          %284 = vst [vmem:[#allocation2 + $0x28] sm:$0xff] 0.0
          %285 = vst [vmem:[#allocation2 + $0x30] sm:$0xff] 0.0
          %286 = vst [vmem:[#allocation2 + $0x38] sm:$0xff] 0.0
          %287 = vst [vmem:[#allocation2 + $0x40] sm:$0xff] 0.0
          %288 = vst [vmem:[#allocation2 + $0x48] sm:$0xff] 0.0
          %289 = vst [vmem:[#allocation2 + $0x50] sm:$0xff] 0.0
          %290 = vst [vmem:[#allocation2 + $0x58] sm:$0xff] 0.0
          %291 = vst [vmem:[#allocation2 + $0x60] sm:$0xff] 0.0
          %292 = vst [vmem:[#allocation2 + $0x68] sm:$0xff] 0.0
          %293 = vst [vmem:[#allocation2 + $0x70] sm:$0xff] 0.0
          %294 = vst [vmem:[#allocation2 + $0x78] sm:$0xff] 0.0
        $region48: #{mlp_forward.3} parent=31 // pred_fallthru
          _
        %v295 = vld [vmem:[#allocation3] sm:$0xff]
        %v296 = vld [vmem:[#allocation3 + $0x8] sm:$0xff]
        %v297 = vld [vmem:[#allocation3 + $0x10] sm:$0xff]
        %v298 = vld [vmem:[#allocation3 + $0x18] sm:$0xff]
        %v299 = vld [vmem:[#allocation3 + $0x20] sm:$0xff]
        %v300 = vld [vmem:[#allocation3 + $0x28] sm:$0xff]
        %v301 = vld [vmem:[#allocation3 + $0x30] sm:$0xff]
        %v302 = vld [vmem:[#allocation3 + $0x38] sm:$0xff]
        %v303 = vld [vmem:[#allocation3 + $0x40] sm:$0xff]
        %v304 = vld [vmem:[#allocation3 + $0x48] sm:$0xff]
        %v305 = vld [vmem:[#allocation3 + $0x50] sm:$0xff]
        %v306 = vld [vmem:[#allocation3 + $0x58] sm:$0xff]
        %v307 = vld [vmem:[#allocation3 + $0x60] sm:$0xff]
        %v308 = vld [vmem:[#allocation3 + $0x68] sm:$0xff]
        %v309 = vld [vmem:[#allocation3 + $0x70] sm:$0xff]
        %v310 = vld [vmem:[#allocation3 + $0x78] sm:$0xff]
        %v311 = vpack.c.bf16 %v296, %v295
        %v312 = vpack.c.bf16 %v298, %v297
        %v313 = vpack.c.bf16 %v300, %v299
        %v314 = vpack.c.bf16 %v302, %v301
        %v315 = vpack.c.bf16 %v304, %v303
        %v316 = vpack.c.bf16 %v306, %v305
        %v317 = vpack.c.bf16 %v308, %v307
        %v318 = vpack.c.bf16 %v310, %v309
        %v319 = vld [vmem:[#allocation2] sm:$0xff]
        %v320 = vld [vmem:[#allocation2 + $0x8] sm:$0xff]
        %v321 = vld [vmem:[#allocation2 + $0x10] sm:$0xff]
        %v322 = vld [vmem:[#allocation2 + $0x18] sm:$0xff]
        %v323 = vld [vmem:[#allocation2 + $0x20] sm:$0xff]
        %v324 = vld [vmem:[#allocation2 + $0x28] sm:$0xff]
        %v325 = vld [vmem:[#allocation2 + $0x30] sm:$0xff]
        %v326 = vld [vmem:[#allocation2 + $0x38] sm:$0xff]
        %v327 = vld [vmem:[#allocation2 + $0x40] sm:$0xff]
        %v328 = vld [vmem:[#allocation2 + $0x48] sm:$0xff]
        %v329 = vld [vmem:[#allocation2 + $0x50] sm:$0xff]
        %v330 = vld [vmem:[#allocation2 + $0x58] sm:$0xff]
        %v331 = vld [vmem:[#allocation2 + $0x60] sm:$0xff]
        %v332 = vld [vmem:[#allocation2 + $0x68] sm:$0xff]
        %v333 = vld [vmem:[#allocation2 + $0x70] sm:$0xff]
        %v334 = vld [vmem:[#allocation2 + $0x78] sm:$0xff]
        %v335 = vld [vmem:[%s236] sm:$0xf]
        %v336 = vld [vmem:[%s236 + $0x4] sm:$0xf]
        %v337 = vld [vmem:[%s236 + $0x8] sm:$0xf]
        %v338 = vld [vmem:[%s236 + $0xc] sm:$0xf]
        %v339 = vld [vmem:[%s236 + $0x10] sm:$0xf]
        %v340 = vld [vmem:[%s236 + $0x14] sm:$0xf]
        %v341 = vld [vmem:[%s236 + $0x18] sm:$0xf]
        %v342 = vld [vmem:[%s236 + $0x1c] sm:$0xf]
        %v343 = vld [vmem:[%s236 + $0x20] sm:$0xf]
        %v344 = vld [vmem:[%s236 + $0x24] sm:$0xf]
        %v345 = vld [vmem:[%s236 + $0x28] sm:$0xf]
        %v346 = vld [vmem:[%s236 + $0x2c] sm:$0xf]
        %v347 = vld [vmem:[%s236 + $0x30] sm:$0xf]
        %v348 = vld [vmem:[%s236 + $0x34] sm:$0xf]
        %v349 = vld [vmem:[%s236 + $0x38] sm:$0xf]
        %v350 = vld [vmem:[%s236 + $0x3c] sm:$0xf]
        %v367 = vunpack.c.l.b16 %v335
        %v368 = vunpack.c.l.b16 %v336
        %v369 = vunpack.c.l.b16 %v337
        %v370 = vunpack.c.l.b16 %v338
        %v371 = vunpack.c.l.b16 %v339
        %v372 = vunpack.c.l.b16 %v340
        %v373 = vunpack.c.l.b16 %v341
        %v374 = vunpack.c.l.b16 %v342
        %v375 = vunpack.c.l.b16 %v343
        %v376 = vunpack.c.l.b16 %v344
        %v377 = vunpack.c.l.b16 %v345
        %v378 = vunpack.c.l.b16 %v346
        %v379 = vunpack.c.l.b16 %v347
        %v380 = vunpack.c.l.b16 %v348
        %v381 = vunpack.c.l.b16 %v349
        %v382 = vunpack.c.l.b16 %v350
        %v383 = vpack.c.b16 %v368, %v367
        %v384 = vpack.c.b16 %v370, %v369
        %v385 = vpack.c.b16 %v372, %v371
        %v386 = vpack.c.b16 %v374, %v373
        %v387 = vpack.c.b16 %v376, %v375
        %v388 = vpack.c.b16 %v378, %v377
        %v389 = vpack.c.b16 %v380, %v379
        %v390 = vpack.c.b16 %v382, %v381
        %399 = vmatpush.bf16.msra.mxu0 %v390
        %400 = vmatpush.bf16.msra.mxu0 %v389
        %401 = vmatpush.bf16.msra.mxu0 %v388
        %402 = vmatpush.bf16.msra.mxu0 %v387
        %403 = vmatpush.bf16.msra.mxu0 %v386
        %404 = vmatpush.bf16.msra.mxu0 %v385
        %405 = vmatpush.bf16.msra.mxu0 %v384
        %406 = vmatpush.bf16.msra.mxu0 %v383
        %407 = vmatmul.bf16.gmra.mxu0 %v311
        %v408 = vpop.f32.mrf.mxu0
        %v409 = vadd.f32 0.0, %v408
        %v410 = vpop.f32.mrf.mxu0
        %v411 = vadd.f32 0.0, %v410
        %412 = vmatmul.bf16.gmra.mxu0 %v312
        %v413 = vpop.f32.mrf.mxu0
        %v414 = vadd.f32 0.0, %v413
        %v415 = vpop.f32.mrf.mxu0
        %v416 = vadd.f32 0.0, %v415
        %417 = vmatmul.bf16.gmra.mxu0 %v313
        %v418 = vpop.f32.mrf.mxu0
        %v419 = vadd.f32 0.0, %v418
        %v420 = vpop.f32.mrf.mxu0
        %v421 = vadd.f32 0.0, %v420
        %422 = vmatmul.bf16.gmra.mxu0 %v314
        %v423 = vpop.f32.mrf.mxu0
        %v424 = vadd.f32 0.0, %v423
        %v425 = vpop.f32.mrf.mxu0
        %v426 = vadd.f32 0.0, %v425
        %427 = vmatmul.bf16.gmra.mxu0 %v315
        %v428 = vpop.f32.mrf.mxu0
        %v429 = vadd.f32 0.0, %v428
        %v430 = vpop.f32.mrf.mxu0
        %v431 = vadd.f32 0.0, %v430
        %432 = vmatmul.bf16.gmra.mxu0 %v316
        %v433 = vpop.f32.mrf.mxu0
        %v434 = vadd.f32 0.0, %v433
        %v435 = vpop.f32.mrf.mxu0
        %v436 = vadd.f32 0.0, %v435
        %437 = vmatmul.bf16.gmra.mxu0 %v317
        %v438 = vpop.f32.mrf.mxu0
        %v439 = vadd.f32 0.0, %v438
        %v440 = vpop.f32.mrf.mxu0
        %v441 = vadd.f32 0.0, %v440
        %442 = vmatmul.bf16.gmra.mxu0 %v318
        %v443 = vpop.f32.mrf.mxu0
        %v444 = vadd.f32 0.0, %v443
        %v445 = vpop.f32.mrf.mxu0
        %v446 = vadd.f32 0.0, %v445
        %447 = vdwg.mxu0
        %v448 = vadd.f32 %v319, %v409
        %v449 = vadd.f32 %v320, %v411
        %v450 = vadd.f32 %v321, %v414
        %v451 = vadd.f32 %v322, %v416
        %v452 = vadd.f32 %v323, %v419
        %v453 = vadd.f32 %v324, %v421
        %v454 = vadd.f32 %v325, %v424
        %v455 = vadd.f32 %v326, %v426
        %v456 = vadd.f32 %v327, %v429
        %v457 = vadd.f32 %v328, %v431
        %v458 = vadd.f32 %v329, %v434
        %v459 = vadd.f32 %v330, %v436
        %v460 = vadd.f32 %v331, %v439
        %v461 = vadd.f32 %v332, %v441
        %v462 = vadd.f32 %v333, %v444
        %v463 = vadd.f32 %v334, %v446
        %464 = vst [vmem:[#allocation2] sm:$0xff] %v448
        %465 = vst [vmem:[#allocation2 + $0x8] sm:$0xff] %v449
        %466 = vst [vmem:[#allocation2 + $0x10] sm:$0xff] %v450
        %467 = vst [vmem:[#allocation2 + $0x18] sm:$0xff] %v451
        %468 = vst [vmem:[#allocation2 + $0x20] sm:$0xff] %v452
        %469 = vst [vmem:[#allocation2 + $0x28] sm:$0xff] %v453
        %470 = vst [vmem:[#allocation2 + $0x30] sm:$0xff] %v454
        %471 = vst [vmem:[#allocation2 + $0x38] sm:$0xff] %v455
        %472 = vst [vmem:[#allocation2 + $0x40] sm:$0xff] %v456
        %473 = vst [vmem:[#allocation2 + $0x48] sm:$0xff] %v457
        %474 = vst [vmem:[#allocation2 + $0x50] sm:$0xff] %v458
        %475 = vst [vmem:[#allocation2 + $0x58] sm:$0xff] %v459
        %476 = vst [vmem:[#allocation2 + $0x60] sm:$0xff] %v460
        %477 = vst [vmem:[#allocation2 + $0x68] sm:$0xff] %v461
        %478 = vst [vmem:[#allocation2 + $0x70] sm:$0xff] %v462
        %479 = vst [vmem:[#allocation2 + $0x78] sm:$0xff] %v463
        // Predicated region
        $region49: #{mlp_forward.3} parent=31 // pred_check
          %p480 = pneg %p275
        $region50: #{mlp_forward.3} parent=31 // pred_check_branch
          %482 = sbr.rel (%p480) target = $region52
        $region51: #{mlp_forward.3} parent=31 // pred_region
          %v483 = vld [vmem:[#allocation2] sm:$0xff]
          %v484 = vld [vmem:[#allocation2 + $0x8] sm:$0xff]
          %v485 = vld [vmem:[#allocation2 + $0x10] sm:$0xff]
          %v486 = vld [vmem:[#allocation2 + $0x18] sm:$0xff]
          %v487 = vld [vmem:[#allocation2 + $0x20] sm:$0xff]
          %v488 = vld [vmem:[#allocation2 + $0x28] sm:$0xff]
          %v489 = vld [vmem:[#allocation2 + $0x30] sm:$0xff]
          %v490 = vld [vmem:[#allocation2 + $0x38] sm:$0xff]
          %v491 = vld [vmem:[#allocation2 + $0x40] sm:$0xff]
          %v492 = vld [vmem:[#allocation2 + $0x48] sm:$0xff]
          %v493 = vld [vmem:[#allocation2 + $0x50] sm:$0xff]
          %v494 = vld [vmem:[#allocation2 + $0x58] sm:$0xff]
          %v495 = vld [vmem:[#allocation2 + $0x60] sm:$0xff]
          %v496 = vld [vmem:[#allocation2 + $0x68] sm:$0xff]
          %v497 = vld [vmem:[#allocation2 + $0x70] sm:$0xff]
          %v498 = vld [vmem:[#allocation2 + $0x78] sm:$0xff]
          %v499 = vld [vmem:[%s245] sm:$0x1]
          %v501 = vperm.slane %v499, 0
          %v503 = vadd.f32 %v483, %v501
          %v504 = vadd.f32 %v484, %v501
          %v505 = vadd.f32 %v485, %v501
          %v506 = vadd.f32 %v486, %v501
          %v507 = vadd.f32 %v487, %v501
          %v508 = vadd.f32 %v488, %v501
          %v509 = vadd.f32 %v489, %v501
          %v510 = vadd.f32 %v490, %v501
          %v511 = vadd.f32 %v491, %v501
          %v512 = vadd.f32 %v492, %v501
          %v513 = vadd.f32 %v493, %v501
          %v514 = vadd.f32 %v494, %v501
          %v515 = vadd.f32 %v495, %v501
          %v516 = vadd.f32 %v496, %v501
          %v517 = vadd.f32 %v497, %v501
          %v518 = vadd.f32 %v498, %v501
          %v519 = vpack.c.bf16 %v503, %v503
          %v520 = vpack.c.bf16 %v504, %v504
          %v521 = vpack.c.bf16 %v505, %v505
          %v522 = vpack.c.bf16 %v506, %v506
          %v523 = vpack.c.bf16 %v507, %v507
          %v524 = vpack.c.bf16 %v508, %v508
          %v525 = vpack.c.bf16 %v509, %v509
          %v526 = vpack.c.bf16 %v510, %v510
          %v527 = vpack.c.bf16 %v511, %v511
          %v528 = vpack.c.bf16 %v512, %v512
          %v529 = vpack.c.bf16 %v513, %v513
          %v530 = vpack.c.bf16 %v514, %v514
          %v531 = vpack.c.bf16 %v515, %v515
          %v532 = vpack.c.bf16 %v516, %v516
          %v533 = vpack.c.bf16 %v517, %v517
          %v534 = vpack.c.bf16 %v518, %v518
          %535 = vst [vmem:[%s271] sm:$0xf] %v519
          %536 = vst [vmem:[%s271 + $0x4] sm:$0xf] %v520
          %537 = vst [vmem:[%s271 + $0x8] sm:$0xf] %v521
          %538 = vst [vmem:[%s271 + $0xc] sm:$0xf] %v522
          %539 = vst [vmem:[%s271 + $0x10] sm:$0xf] %v523
          %540 = vst [vmem:[%s271 + $0x14] sm:$0xf] %v524
          %541 = vst [vmem:[%s271 + $0x18] sm:$0xf] %v525
          %542 = vst [vmem:[%s271 + $0x1c] sm:$0xf] %v526
          %543 = vst [vmem:[%s271 + $0x20] sm:$0xf] %v527
          %544 = vst [vmem:[%s271 + $0x24] sm:$0xf] %v528
          %545 = vst [vmem:[%s271 + $0x28] sm:$0xf] %v529
          %546 = vst [vmem:[%s271 + $0x2c] sm:$0xf] %v530
          %547 = vst [vmem:[%s271 + $0x30] sm:$0xf] %v531
          %548 = vst [vmem:[%s271 + $0x34] sm:$0xf] %v532
          %549 = vst [vmem:[%s271 + $0x38] sm:$0xf] %v533
          %550 = vst [vmem:[%s271 + $0x3c] sm:$0xf] %v534
        $region52: #{mlp_forward.3} parent=31 // pred_fallthru
          _
        %s551 = sand.u32 %s129, 1
        %s552 = sand.u32 %s129, 1
        %s553 = smul.addr %s552, 64
        %s554 = scalar_lea.vmem [#allocation8], %s553
        // Predicated region
        $region53: #{mlp_forward.3} parent=31 // pred_check
          %p555 = pneg %p139
        $region54: #{mlp_forward.3} parent=31 // pred_check_branch
          %557 = sbr.rel (%p555) target = $region56
        $region55: #{mlp_forward.3} parent=31 // pred_region
          %s558 = smul.u32 16, %s23
          %s559 = smul.addr %s558, 2
          %s560 = sadd.s32 %s24, %s559
          %s561 = smul.addr %s560, 4
          %s562 = scalar_lea.vmem %s3, %s561
          // Predicated region
          $region57: #{mlp_forward.3} parent=55 // pred_check
            _
          $region58: #{mlp_forward.3} parent=55 // pred_check_branch
            %564 = sbr.rel (0) target = $region60
          $region59: #{mlp_forward.3} parent=55 // pred_region
            // Predicated region
            $region61: #{mlp_forward.3} parent=59 // pred_check
              _
            $region62: #{mlp_forward.3} parent=59 // pred_check_branch
              %566 = sbr.rel target = $region64
            $region63: #{mlp_forward.3} parent=59 // pred_region
              // Predicated region
              $region76: #{mlp_forward.3} parent=63 // pred_check
                _
              $region77: #{mlp_forward.3} parent=63 // pred_check_branch
                %612 = sbr.rel (0) target = $region79
              $region78: #{mlp_forward.3} parent=63 // pred_region
                loop: start=0, step=1, limit=1
                $region80: #{mlp_forward.3} parent=78 // loop_pre_header
                  _
                $region81: #{mlp_forward.3} parent=78 // loop_header
                  %s614 = sphi 0, %s618
                  %p615 = scmp.ge.s32.totalorder %s614, 1
                  %s619 = sphi %s554, %s554
                  %s620 = sphi %s562, %s562
                $region82: #{mlp_forward.3} parent=78 // loop_header_branch
                  %617 = sbr.rel (%p615) target = $region86
                $region83: #{mlp_forward.3} parent=78 // loop_body
                  _
                $region84: #{mlp_forward.3} parent=78 // loop_footer
                  %s618 = sadd.s32 1, %s614
                $region85: #{mlp_forward.3} parent=78 // loop_footer_branch
                  %613 = sbr.rel target = $region81
                $region86: #{mlp_forward.3} parent=78 // loop_exit
                  _
                %s622 = ssub.s32 16, 1
                loop: start=0, step=1, limit=1
                $region87: #{mlp_forward.3} parent=78 // loop_pre_header
                  _
                $region88: #{mlp_forward.3} parent=78 // loop_header
                  %s624 = sphi 0, %s628
                  %p625 = scmp.ge.s32.totalorder %s624, 1
                  %s629 = sphi %s554, %s554
                  %s630 = sphi %s562, %s562
                $region89: #{mlp_forward.3} parent=78 // loop_header_branch
                  %627 = sbr.rel (%p625) target = $region93
                $region90: #{mlp_forward.3} parent=78 // loop_body
                  %v631 = vld [vmem:[%s629] sm:%s622]
                  %632 = vst [vmem:[%s630] sm:%s622] %v631
                  %v633 = vld [vmem:[%s629 + $0x4] sm:%s622]
                  %634 = vst [vmem:[%s630 + $0x8] sm:%s622] %v633
                  %v635 = vld [vmem:[%s629 + $0x8] sm:%s622]
                  %636 = vst [vmem:[%s630 + $0x10] sm:%s622] %v635
                  %v637 = vld [vmem:[%s629 + $0xc] sm:%s622]
                  %638 = vst [vmem:[%s630 + $0x18] sm:%s622] %v637
                  %v639 = vld [vmem:[%s629 + $0x10] sm:%s622]
                  %640 = vst [vmem:[%s630 + $0x20] sm:%s622] %v639
                  %v641 = vld [vmem:[%s629 + $0x14] sm:%s622]
                  %642 = vst [vmem:[%s630 + $0x28] sm:%s622] %v641
                  %v643 = vld [vmem:[%s629 + $0x18] sm:%s622]
                  %644 = vst [vmem:[%s630 + $0x30] sm:%s622] %v643
                  %v645 = vld [vmem:[%s629 + $0x1c] sm:%s622]
                  %646 = vst [vmem:[%s630 + $0x38] sm:%s622] %v645
                  %v647 = vld [vmem:[%s629 + $0x20] sm:%s622]
                  %648 = vst [vmem:[%s630 + $0x40] sm:%s622] %v647
                  %v649 = vld [vmem:[%s629 + $0x24] sm:%s622]
                  %650 = vst [vmem:[%s630 + $0x48] sm:%s622] %v649
                  %v651 = vld [vmem:[%s629 + $0x28] sm:%s622]
                  %652 = vst [vmem:[%s630 + $0x50] sm:%s622] %v651
                  %v653 = vld [vmem:[%s629 + $0x2c] sm:%s622]
                  %654 = vst [vmem:[%s630 + $0x58] sm:%s622] %v653
                  %v655 = vld [vmem:[%s629 + $0x30] sm:%s622]
                  %656 = vst [vmem:[%s630 + $0x60] sm:%s622] %v655
                  %v657 = vld [vmem:[%s629 + $0x34] sm:%s622]
                  %658 = vst [vmem:[%s630 + $0x68] sm:%s622] %v657
                  %v659 = vld [vmem:[%s629 + $0x38] sm:%s622]
                  %660 = vst [vmem:[%s630 + $0x70] sm:%s622] %v659
                  %v661 = vld [vmem:[%s629 + $0x3c] sm:%s622]
                  %662 = vst [vmem:[%s630 + $0x78] sm:%s622] %v661
                $region91: #{mlp_forward.3} parent=78 // loop_footer
                  %s628 = sadd.s32 1, %s624
                $region92: #{mlp_forward.3} parent=78 // loop_footer_branch
                  %623 = sbr.rel target = $region88
                $region93: #{mlp_forward.3} parent=78 // loop_exit
                  _
              $region79: #{mlp_forward.3} parent=63 // pred_fallthru
                _
            $region64: #{mlp_forward.3} parent=59 // pred_fallthru
              _
            // Predicated region
            $region65: #{mlp_forward.3} parent=59 // pred_check
              _
            $region66: #{mlp_forward.3} parent=59 // pred_check_branch
              %568 = sbr.rel (0) target = $region68
            $region67: #{mlp_forward.3} parent=59 // pred_region
              %s570 = ssub.s32 16, 1
              loop: start=0, step=1, limit=1
              $region69: #{mlp_forward.3} parent=67 // loop_pre_header
                _
              $region70: #{mlp_forward.3} parent=67 // loop_header
                %s572 = sphi 0, %s576
                %p573 = scmp.ge.s32.totalorder %s572, 1
                %s577 = sphi %s554, %s554
                %s578 = sphi %s562, %s562
              $region71: #{mlp_forward.3} parent=67 // loop_header_branch
                %575 = sbr.rel (%p573) target = $region75
              $region72: #{mlp_forward.3} parent=67 // loop_body
                %v579 = vld [vmem:[%s577] sm:%s570]
                %580 = vst [vmem:[%s578] sm:%s570] %v579
                %v581 = vld [vmem:[%s577 + $0x4] sm:%s570]
                %582 = vst [vmem:[%s578 + $0x8] sm:%s570] %v581
                %v583 = vld [vmem:[%s577 + $0x8] sm:%s570]
                %584 = vst [vmem:[%s578 + $0x10] sm:%s570] %v583
                %v585 = vld [vmem:[%s577 + $0xc] sm:%s570]
                %586 = vst [vmem:[%s578 + $0x18] sm:%s570] %v585
                %v587 = vld [vmem:[%s577 + $0x10] sm:%s570]
                %588 = vst [vmem:[%s578 + $0x20] sm:%s570] %v587
                %v589 = vld [vmem:[%s577 + $0x14] sm:%s570]
                %590 = vst [vmem:[%s578 + $0x28] sm:%s570] %v589
                %v591 = vld [vmem:[%s577 + $0x18] sm:%s570]
                %592 = vst [vmem:[%s578 + $0x30] sm:%s570] %v591
                %v593 = vld [vmem:[%s577 + $0x1c] sm:%s570]
                %594 = vst [vmem:[%s578 + $0x38] sm:%s570] %v593
                %v595 = vld [vmem:[%s577 + $0x20] sm:%s570]
                %596 = vst [vmem:[%s578 + $0x40] sm:%s570] %v595
                %v597 = vld [vmem:[%s577 + $0x24] sm:%s570]
                %598 = vst [vmem:[%s578 + $0x48] sm:%s570] %v597
                %v599 = vld [vmem:[%s577 + $0x28] sm:%s570]
                %600 = vst [vmem:[%s578 + $0x50] sm:%s570] %v599
                %v601 = vld [vmem:[%s577 + $0x2c] sm:%s570]
                %602 = vst [vmem:[%s578 + $0x58] sm:%s570] %v601
                %v603 = vld [vmem:[%s577 + $0x30] sm:%s570]
                %604 = vst [vmem:[%s578 + $0x60] sm:%s570] %v603
                %v605 = vld [vmem:[%s577 + $0x34] sm:%s570]
                %606 = vst [vmem:[%s578 + $0x68] sm:%s570] %v605
                %v607 = vld [vmem:[%s577 + $0x38] sm:%s570]
                %608 = vst [vmem:[%s578 + $0x70] sm:%s570] %v607
                %v609 = vld [vmem:[%s577 + $0x3c] sm:%s570]
                %610 = vst [vmem:[%s578 + $0x78] sm:%s570] %v609
              $region73: #{mlp_forward.3} parent=67 // loop_footer
                %s576 = sadd.s32 1, %s572
              $region74: #{mlp_forward.3} parent=67 // loop_footer_branch
                %571 = sbr.rel target = $region70
              $region75: #{mlp_forward.3} parent=67 // loop_exit
                _
            $region68: #{mlp_forward.3} parent=59 // pred_fallthru
              _
          $region60: #{mlp_forward.3} parent=55 // pred_fallthru
            _
          %663 = vnop
        $region56: #{mlp_forward.3} parent=31 // pred_fallthru
          _
      $region32: #{mlp_forward.3} parent=5 // pred_fallthru
        _
      %p664 = scmp.le.s32.totalorder 2, %s13
      // Predicated region
      $region94: #{mlp_forward.3} parent=5 // pred_check
        %p665 = pneg %p664
      $region95: #{mlp_forward.3} parent=5 // pred_check_branch
        %667 = sbr.rel (%p665) target = $region97
      $region96: #{mlp_forward.3} parent=5 // pred_region
        %s668 = ssub.s32 %s13, 2
        // Predicated region
        $region98: #{mlp_forward.3} parent=96 // pred_check
          %p669 = pneg %p145
        $region99: #{mlp_forward.3} parent=96 // pred_check_branch
          %671 = sbr.rel (%p669) target = $region101
        $region100: #{mlp_forward.3} parent=96 // pred_region
          %s672 = sand.u32 %s130, 1
          %s673 = sand.u32 %s130, 1
          %s674 = smul.addr %s673, 64
          %s675 = scalar_lea.vmem [#allocation8], %s674
        $region101: #{mlp_forward.3} parent=96 // pred_fallthru
          _
      $region97: #{mlp_forward.3} parent=5 // pred_fallthru
        _
    $region6: #{mlp_forward.3} parent=1 // loop_footer
      %s17 = sadd.s32 1, %s13
    $region7: #{mlp_forward.3} parent=1 // loop_footer_branch
      %12 = sbr.rel target = $region3
    $region8: #{mlp_forward.3} parent=1 // loop_exit
      _
    %676 = vsyncpa [#allocation4], 1
    %s677 = scalar_lea.sflag [#allocation4], 1
    %678 = vsyncpa %s677, 1
    %679 = vsyncpa [#allocation6], 1
    %s680 = scalar_lea.sflag [#allocation6], 1
    %681 = vsyncpa %s680, 1

// kernel: mlp_forward.5
$region0: #{mlp_forward.5}
  #allocation0 [shape = 'u32[]', space=smem, size = 0x4, offset = 0x4, fixed_abs, tag = 'smem constant byte address 0x4 - core index']
  #allocation1 [shape = 'u32[72,128]{1,0:T(1,128)}', space=vmem, size = 0x9000, scoped, tag = 'internal scratch']
  #allocation2 [shape = 'f32[64,128]{1,0:T(8,128)}', space=vmem, size = 0x8000, scoped, tag = 'scratch operand']
  %s0 = inlined_call_operand.vmem [shape: bf16[128,256], index: 0, kind: input, shape index: {}]
  %s1 = inlined_call_operand.hbm [shape: bf16[256,128], index: 1, kind: input, shape index: {}]
  %s2 = inlined_call_operand.vmem [shape: f32[1,128], index: 2, kind: input, shape index: {}]
  %s3 = inlined_call_operand.hbm [shape: f32[128,128], index: 3, kind: output, shape index: {}]
  %s4 = sld [smem:[#allocation0]]
  $region57: #{mlp_forward.5} parent=0
    _
  %s6 = ssub.s32 1, %s4
  %s7 = scalar_select 0, %s6, %s4
  $region1: #{mlp_forward.5} parent=0
    #allocation3 [shape = 'u8[65536]{0}', space=vmem, size = 0x10000, scoped, tag = 'input window, operand 1, single buffered']
    #allocation4 [shape = 's32[2]{0}', space=sflag, size = 0x8, scoped, tag = 'scoped memory for mlp_forward.5']
    #allocation5 [shape = 's32[2]{0}', space=sflag, size = 0x8, scoped, tag = 'scoped memory for mlp_forward.5']
    #allocation6 [shape = 'u8[65536]{0}', space=vmem, size = 0x10000, scoped, tag = 'output window, operand 0']
    %8 = vsyncpa [#allocation4], 0
    %9 = vsyncpa [#allocation5], 0
    %s10 = scalar_lea.sflag [#allocation5], 1
    %11 = vsyncpa %s10, 0
    loop: start=0, step=1, limit=4
    $region2: #{mlp_forward.5} parent=1 // loop_pre_header
      _
    $region3: #{mlp_forward.5} parent=1 // loop_header
      %s13 = sphi 0, %s17
      %p14 = scmp.ge.s32.totalorder %s13, 4
      %s20 = sphi 0, %s39
      %s21 = sphi 0, %s35
      %s22 = sphi 0, %s31
      %s23 = sphi 0, %s20
      %s24 = sphi 0, %s21
      %s25 = sphi 0, %s22
      %s26 = sphi 0, %s23
      %s27 = sphi 0, %s24
      %s28 = sphi 0, %s25
      %s44 = sphi 0, %s46
      %s47 = sphi 0, %s44
      %s48 = sphi 0, %s47
      %s64 = sphi 0, %s48
      %s72 = sphi 0, %s74
      %s75 = sphi 0, %s72
      %s76 = sphi 0, %s75
      %s92 = sphi 0, %s76
      %s98 = sphi 0, %s100
      %s101 = sphi 0, %s98
      %s102 = sphi 0, %s101
      %s118 = sphi 0, %s102
      %s126 = sphi 0, %s128
      %s129 = sphi 0, %s126
      %s130 = sphi 0, %s129
      %s146 = sphi 0, %s130
    $region4: #{mlp_forward.5} parent=1 // loop_header_branch
      %16 = sbr.rel (%p14) target = $region8
    $region5: #{mlp_forward.5} parent=1 // loop_body
      %s18 = ssub.s32 %s13, 1
      %s19 = ssub.s32 %s13, 2
      %s29 = sadd.s32 1, %s22
      %p30 = scmp.ge.s32.totalorder %s29, 1
      %s31 = scalar_select %p30, 0, %s29
      %s32 = sadd.s32 1, %s21
      %s33 = scalar_select %p30, %s32, %s21
      %p34 = scmp.ge.s32.totalorder %s33, 1
      %s35 = scalar_select %p34, 0, %s33
      %s36 = sadd.s32 1, %s20
      %s37 = scalar_select %p34, %s36, %s20
      %p38 = scmp.ge.s32.totalorder %s37, 2
      %s39 = scalar_select %p38, 0, %s37
      %s40 = ssub.s32 %s20, %s39
      %s41 = ssub.s32 %s22, %s31
      %s42 = sor.u32 %s40, %s41
      %p43 = scmp.eq.s32.totalorder %s42, 0
      %s45 = sadd.s32 %s44, 1
      %s46 = scalar_select %p43, %s44, %s45
      %p49 = pneg %p43
      %p50 = scmp.eq.s32.totalorder %s13, 1
      %p51 = por %p49, %p50
      %p52 = scmp.ne.s32.totalorder %s44, %s47
      %p53 = scmp.eq.s32.totalorder %s13, 0
      %p54 = por %p52, %p53
      %p55 = scmp.ne.s32.totalorder %s44, %s47
      %p56 = scmp.eq.s32.totalorder %s18, 1
      %p57 = por %p55, %p56
      %p58 = scmp.ne.s32.totalorder %s47, %s48
      %p59 = scmp.eq.s32.totalorder %s18, 0
      %p60 = por %p58, %p59
      %p61 = scmp.ne.s32.totalorder %s47, %s48
      %p62 = scmp.eq.s32.totalorder %s19, 1
      %p63 = por %p61, %p62
      %p65 = scmp.ne.s32.totalorder %s48, %s64
      %p66 = scmp.eq.s32.totalorder %s19, 0
      %p67 = por %p65, %p66
      %s68 = ssub.s32 %s22, %s31
      %s69 = ssub.s32 %s21, %s35
      %s70 = sor.u32 %s68, %s69
      %p71 = scmp.eq.s32.totalorder %s70, 0
      %s73 = sadd.s32 %s72, 1
      %s74 = scalar_select %p71, %s72, %s73
      %p77 = pneg %p71
      %p78 = scmp.eq.s32.totalorder %s13, 1
      %p79 = por %p77, %p78
      %p80 = scmp.ne.s32.totalorder %s72, %s75
      %p81 = scmp.eq.s32.totalorder %s13, 0
      %p82 = por %p80, %p81
      %p83 = scmp.ne.s32.totalorder %s72, %s75
      %p84 = scmp.eq.s32.totalorder %s18, 1
      %p85 = por %p83, %p84
      %p86 = scmp.ne.s32.totalorder %s75, %s76
      %p87 = scmp.eq.s32.totalorder %s18, 0
      %p88 = por %p86, %p87
      %p89 = scmp.ne.s32.totalorder %s75, %s76
      %p90 = scmp.eq.s32.totalorder %s19, 1
      %p91 = por %p89, %p90
      %p93 = scmp.ne.s32.totalorder %s76, %s92
      %p94 = scmp.eq.s32.totalorder %s19, 0
      %p95 = por %p93, %p94
      %s96 = ssub.s32 %s21, %s35
      %p97 = scmp.eq.s32.totalorder %s96, 0
      %s99 = sadd.s32 %s98, 1
      %s100 = scalar_select %p97, %s98, %s99
      %p103 = pneg %p97
      %p104 = scmp.eq.s32.totalorder %s13, 1
      %p105 = por %p103, %p104
      %p106 = scmp.ne.s32.totalorder %s98, %s101
      %p107 = scmp.eq.s32.totalorder %s13, 0
      %p108 = por %p106, %p107
      %p109 = scmp.ne.s32.totalorder %s98, %s101
      %p110 = scmp.eq.s32.totalorder %s18, 1
      %p111 = por %p109, %p110
      %p112 = scmp.ne.s32.totalorder %s101, %s102
      %p113 = scmp.eq.s32.totalorder %s18, 0
      %p114 = por %p112, %p113
      %p115 = scmp.ne.s32.totalorder %s101, %s102
      %p116 = scmp.eq.s32.totalorder %s19, 1
      %p117 = por %p115, %p116
      %p119 = scmp.ne.s32.totalorder %s102, %s118
      %p120 = scmp.eq.s32.totalorder %s19, 0
      %p121 = por %p119, %p120
      %s122 = ssub.s32 %s20, %s39
      %s123 = ssub.s32 %s21, %s35
      %s124 = sor.u32 %s122, %s123
      %p125 = scmp.eq.s32.totalorder %s124, 0
      %s127 = sadd.s32 %s126, 1
      %s128 = scalar_select %p125, %s126, %s127
      %p131 = pneg %p125
      %p132 = scmp.eq.s32.totalorder %s13, 1
      %p133 = por %p131, %p132
      %p134 = scmp.ne.s32.totalorder %s126, %s129
      %p135 = scmp.eq.s32.totalorder %s13, 0
      %p136 = por %p134, %p135
      %p137 = scmp.ne.s32.totalorder %s126, %s129
      %p138 = scmp.eq.s32.totalorder %s18, 1
      %p139 = por %p137, %p138
      %p140 = scmp.ne.s32.totalorder %s129, %s130
      %p141 = scmp.eq.s32.totalorder %s18, 0
      %p142 = por %p140, %p141
      %p143 = scmp.ne.s32.totalorder %s129, %s130
      %p144 = scmp.eq.s32.totalorder %s19, 1
      %p145 = por %p143, %p144
      %p147 = scmp.ne.s32.totalorder %s130, %s146
      %p148 = scmp.eq.s32.totalorder %s19, 0
      %p149 = por %p147, %p148
      %p150 = scmp.le.s32.totalorder 1, %s13
      %p151 = scmp.lt.s32.totalorder %s13, 3
      %p152 = pnand %p150, %p151
      %p153 = pneg %p152
      // Predicated region
      $region9: #{mlp_forward.5} parent=5 // pred_check
        _
      $region10: #{mlp_forward.5} parent=5 // pred_check_branch
        %155 = sbr.rel (%p152) target = $region12
      $region11: #{mlp_forward.5} parent=5 // pred_region
        %s156 = ssub.s32 %s13, 1
        // Predicated region
        $region13: #{mlp_forward.5} parent=11 // pred_check
          %p157 = pneg %p88
        $region14: #{mlp_forward.5} parent=11 // pred_check_branch
          %159 = sbr.rel (%p157) target = $region16
        $region15: #{mlp_forward.5} parent=11 // pred_region
          %s160 = smul.u32 32, %s25
          %162 = vsyncadd [#allocation4], 0
          %s163 = sadd.s32 %s24, %s160
          %s164 = smul.addr %s163, 4
          %s165 = scalar_lea.hbm %s1, %s164
          %s166 = sshll.u32 %s165, 4
          %s167 = int_to_ptr.hbm [resolvable:$true] %s166
          %s168 = sshll.u32 [#allocation3], 4
          %s169 = int_to_ptr.vmem [resolvable:$true] %s168
          %174 = dma.hbm_to_vmem [thread:$0]  %s167, 2048, %s169, [#allocation4], 64, 64, 4
        $region16: #{mlp_forward.5} parent=11 // pred_fallthru
          _
        // Predicated region
        $region17: #{mlp_forward.5} parent=11 // pred_check
          %p175 = pneg %p114
        $region18: #{mlp_forward.5} parent=11 // pred_check_branch
          %177 = sbr.rel (%p175) target = $region20
        $region19: #{mlp_forward.5} parent=11 // pred_region
          %p178 = scmp.lt.s32.totalorder %s24, 0
          %s179 = scalar_select %p178, %s24, 0
          %s180 = scalar_lea.vmem %s2, %s179
        $region20: #{mlp_forward.5} parent=11 // pred_fallthru
          _
      $region12: #{mlp_forward.5} parent=5 // pred_fallthru
        _
      %p181 = scmp.lt.s32.totalorder %s13, 2
      // Predicated region
      $region21: #{mlp_forward.5} parent=5 // pred_check
        %p182 = pneg %p181
      $region22: #{mlp_forward.5} parent=5 // pred_check_branch
        %184 = sbr.rel (%p182) target = $region24
      $region23: #{mlp_forward.5} parent=5 // pred_region
        // Predicated region
        $region25: #{mlp_forward.5} parent=23 // pred_check
          %p185 = pneg %p54
        $region26: #{mlp_forward.5} parent=23 // pred_check_branch
          %187 = sbr.rel (%p185) target = $region28
        $region27: #{mlp_forward.5} parent=23 // pred_region
          %s188 = smul.u32 8, %s20
          %s189 = smul.u32 2, %s22
          %p190 = scmp.lt.s32.totalorder %s188, 15
          %s191 = scalar_select %p190, %s188, 15
          %p192 = scmp.lt.s32.totalorder %s189, 1
          %s193 = scalar_select %p192, %s189, 1
          %s194 = smul.addr %s191, 2
          %s195 = sadd.s32 %s193, %s194
          %s196 = smul.addr %s195, 4
          %s197 = scalar_lea.vmem %s0, %s196
          %s198 = smul.u32 8, %s20
          %s199 = smul.u32 2, %s22
        $region28: #{mlp_forward.5} parent=23 // pred_fallthru
          _
      $region24: #{mlp_forward.5} parent=5 // pred_fallthru
        _
      %p200 = scmp.le.s32.totalorder 1, %s13
      %p201 = scmp.lt.s32.totalorder %s13, 3
      %p202 = pnand %p200, %p201
      %p203 = pneg %p202
      // Predicated region
      $region29: #{mlp_forward.5} parent=5 // pred_check
        _
      $region30: #{mlp_forward.5} parent=5 // pred_check_branch
        %205 = sbr.rel (%p202) target = $region32
      $region31: #{mlp_forward.5} parent=5 // pred_region
        %s206 = ssub.s32 %s13, 1
        // Predicated region
        $region33: #{mlp_forward.5} parent=31 // pred_check
          %p207 = pneg %p88
        $region34: #{mlp_forward.5} parent=31 // pred_check_branch
          %209 = sbr.rel (%p207) target = $region36
        $region35: #{mlp_forward.5} parent=31 // pred_region
          %211 = dma.done [#allocation4], 2048
        $region36: #{mlp_forward.5} parent=31 // pred_fallthru
          _
        %s212 = smul.u32 8, %s23
        %s213 = smul.u32 2, %s25
        %p214 = scmp.lt.s32.totalorder %s212, 15
        %s215 = scalar_select %p214, %s212, 15
        %p216 = scmp.lt.s32.totalorder %s213, 1
        %s217 = scalar_select %p216, %s213, 1
        %s218 = smul.addr %s215, 2
        %s219 = sadd.s32 %s217, %s218
        %s220 = smul.addr %s219, 4
        %s221 = scalar_lea.vmem %s0, %s220
        %p222 = pneg %p60
        %p223 = pneg %p57
        %p224 = pneg %p88
        %p225 = pneg %p85
        %p226 = scmp.lt.s32.totalorder %s24, 0
        %s227 = scalar_select %p226, %s24, 0
        %s228 = scalar_lea.vmem %s2, %s227
        %p229 = pneg %p114
        %p230 = pneg %p111
        %p231 = pneg %p142
        %p232 = pneg %p139
        %s233 = sand.u32 %s129, 1
        %s234 = scalar_lea.sflag [#allocation5], %s233
        %s235 = sand.u32 %s129, 1
        %s236 = smul.addr %s235, 64
        %s237 = scalar_lea.vmem [#allocation6], %s236
        %s238 = smul.u32 8, %s23
        %s239 = smul.u32 2, %s25
        %p240 = scmp.lt.s32.totalorder %s238, 15
        %s241 = scalar_select %p240, %s238, 15
        %p242 = scmp.lt.s32.totalorder %s239, 1
        %s243 = scalar_select %p242, %s239, 1
        %s244 = smul.addr %s241, 2
        %s245 = sadd.s32 %s243, %s244
        %s246 = smul.addr %s245, 4
        %s247 = scalar_lea.vmem %s0, %s246
        %s248 = smul.u32 8, %s23
        %s249 = smul.u32 2, %s25
        %s250 = smul.u32 32, %s25
        %p251 = scmp.lt.s32.totalorder %s24, 0
        %s252 = scalar_select %p251, %s24, 0
        %s253 = scalar_lea.vmem %s2, %s252
        %s254 = smul.u32 8, %s23
        %p255 = scmp.eq.s32.totalorder %s25, 0
        // Predicated region
        $region37: #{mlp_forward.5} parent=31 // pred_check
          %p256 = pneg %p255
        $region38: #{mlp_forward.5} parent=31 // pred_check_branch
          %258 = sbr.rel (%p256) target = $region40
        $region39: #{mlp_forward.5} parent=31 // pred_region
          %259 = vst [vmem:[#allocation2] sm:$0xff] 0.0
          %260 = vst [vmem:[#allocation2 + $0x8] sm:$0xff] 0.0
          %261 = vst [vmem:[#allocation2 + $0x10] sm:$0xff] 0.0
          %262 = vst [vmem:[#allocation2 + $0x18] sm:$0xff] 0.0
          %263 = vst [vmem:[#allocation2 + $0x20] sm:$0xff] 0.0
          %264 = vst [vmem:[#allocation2 + $0x28] sm:$0xff] 0.0
          %265 = vst [vmem:[#allocation2 + $0x30] sm:$0xff] 0.0
          %266 = vst [vmem:[#allocation2 + $0x38] sm:$0xff] 0.0
        $region40: #{mlp_forward.5} parent=31 // pred_fallthru
          _
        %v267 = vld [vmem:[%s247] sm:$0xff]
        %v268 = vld [vmem:[%s247 + $0x8] sm:$0xff]
        %v269 = vld [vmem:[%s247 + $0x10] sm:$0xff]
        %v270 = vld [vmem:[%s247 + $0x18] sm:$0xff]
        %v271 = vld [vmem:[%s247 + $0x20] sm:$0xff]
        %v272 = vld [vmem:[%s247 + $0x28] sm:$0xff]
        %v273 = vld [vmem:[%s247 + $0x30] sm:$0xff]
        %v274 = vld [vmem:[%s247 + $0x38] sm:$0xff]
        %v275 = vld [vmem:[#allocation2] sm:$0xff]
        %v276 = vld [vmem:[#allocation2 + $0x8] sm:$0xff]
        %v277 = vld [vmem:[#allocation2 + $0x10] sm:$0xff]
        %v278 = vld [vmem:[#allocation2 + $0x18] sm:$0xff]
        %v279 = vld [vmem:[#allocation2 + $0x20] sm:$0xff]
        %v280 = vld [vmem:[#allocation2 + $0x28] sm:$0xff]
        %v281 = vld [vmem:[#allocation2 + $0x30] sm:$0xff]
        %v282 = vld [vmem:[#allocation2 + $0x38] sm:$0xff]
        %v283 = vld [vmem:[#allocation3] sm:$0xf]
        %v284 = vld [vmem:[#allocation3 + $0x4] sm:$0xf]
        %v285 = vld [vmem:[#allocation3 + $0x8] sm:$0xf]
        %v286 = vld [vmem:[#allocation3 + $0xc] sm:$0xf]
        %v287 = vld [vmem:[#allocation3 + $0x10] sm:$0xf]
        %v288 = vld [vmem:[#allocation3 + $0x14] sm:$0xf]
        %v289 = vld [vmem:[#allocation3 + $0x18] sm:$0xf]
        %v290 = vld [vmem:[#allocation3 + $0x1c] sm:$0xf]
        %v291 = vld [vmem:[#allocation3 + $0x20] sm:$0xf]
        %v292 = vld [vmem:[#allocation3 + $0x24] sm:$0xf]
        %v293 = vld [vmem:[#allocation3 + $0x28] sm:$0xf]
        %v294 = vld [vmem:[#allocation3 + $0x2c] sm:$0xf]
        %v295 = vld [vmem:[#allocation3 + $0x30] sm:$0xf]
        %v296 = vld [vmem:[#allocation3 + $0x34] sm:$0xf]
        %v297 = vld [vmem:[#allocation3 + $0x38] sm:$0xf]
        %v298 = vld [vmem:[#allocation3 + $0x3c] sm:$0xf]
        %v299 = vld [vmem:[#allocation3 + $0x40] sm:$0xf]
        %v300 = vld [vmem:[#allocation3 + $0x44] sm:$0xf]
        %v301 = vld [vmem:[#allocation3 + $0x48] sm:$0xf]
        %v302 = vld [vmem:[#allocation3 + $0x4c] sm:$0xf]
        %v303 = vld [vmem:[#allocation3 + $0x50] sm:$0xf]
        %v304 = vld [vmem:[#allocation3 + $0x54] sm:$0xf]
        %v305 = vld [vmem:[#allocation3 + $0x58] sm:$0xf]
        %v306 = vld [vmem:[#allocation3 + $0x5c] sm:$0xf]
        %v307 = vld [vmem:[#allocation3 + $0x60] sm:$0xf]
        %v308 = vld [vmem:[#allocation3 + $0x64] sm:$0xf]
        %v309 = vld [vmem:[#allocation3 + $0x68] sm:$0xf]
        %v310 = vld [vmem:[#allocation3 + $0x6c] sm:$0xf]
        %v311 = vld [vmem:[#allocation3 + $0x70] sm:$0xf]
        %v312 = vld [vmem:[#allocation3 + $0x74] sm:$0xf]
        %v313 = vld [vmem:[#allocation3 + $0x78] sm:$0xf]
        %v314 = vld [vmem:[#allocation3 + $0x7c] sm:$0xf]
        %v323 = vunpack.c.l.b16 %v267
        %v324 = vunpack.c.h.b16 %v267
        %v325 = vunpack.c.l.b16 %v268
        %v326 = vunpack.c.h.b16 %v268
        %v327 = vunpack.c.l.b16 %v269
        %v328 = vunpack.c.h.b16 %v269
        %v329 = vunpack.c.l.b16 %v270
        %v330 = vunpack.c.h.b16 %v270
        %v331 = vunpack.c.l.b16 %v271
        %v332 = vunpack.c.h.b16 %v271
        %v333 = vunpack.c.l.b16 %v272
        %v334 = vunpack.c.h.b16 %v272
        %v335 = vunpack.c.l.b16 %v273
        %v336 = vunpack.c.h.b16 %v273
        %v337 = vunpack.c.l.b16 %v274
        %v338 = vunpack.c.h.b16 %v274
        %v339 = vpack.c.b16 %v325, %v323
        %v340 = vpack.c.b16 %v326, %v324
        %v341 = vpack.c.b16 %v329, %v327
        %v342 = vpack.c.b16 %v330, %v328
        %v343 = vpack.c.b16 %v333, %v331
        %v344 = vpack.c.b16 %v334, %v332
        %v345 = vpack.c.b16 %v337, %v335
        %v346 = vpack.c.b16 %v338, %v336
        %v387 = vunpack.c.l.b16 %v283
        %v388 = vunpack.c.l.b16 %v284
        %v389 = vunpack.c.l.b16 %v285
        %v390 = vunpack.c.l.b16 %v286
        %v391 = vunpack.c.l.b16 %v287
        %v392 = vunpack.c.l.b16 %v288
        %v393 = vunpack.c.l.b16 %v289
        %v394 = vunpack.c.l.b16 %v290
        %v395 = vunpack.c.l.b16 %v291
        %v396 = vunpack.c.l.b16 %v292
        %v397 = vunpack.c.l.b16 %v293
        %v398 = vunpack.c.l.b16 %v294
        %v399 = vunpack.c.l.b16 %v295
        %v400 = vunpack.c.l.b16 %v296
        %v401 = vunpack.c.l.b16 %v297
        %v402 = vunpack.c.l.b16 %v298
        %v403 = vunpack.c.l.b16 %v299
        %v404 = vunpack.c.l.b16 %v300
        %v405 = vunpack.c.l.b16 %v301
        %v406 = vunpack.c.l.b16 %v302
        %v407 = vunpack.c.l.b16 %v303
        %v408 = vunpack.c.l.b16 %v304
        %v409 = vunpack.c.l.b16 %v305
        %v410 = vunpack.c.l.b16 %v306
        %v411 = vunpack.c.l.b16 %v307
        %v412 = vunpack.c.l.b16 %v308
        %v413 = vunpack.c.l.b16 %v309
        %v414 = vunpack.c.l.b16 %v310
        %v415 = vunpack.c.l.b16 %v311
        %v416 = vunpack.c.l.b16 %v312
        %v417 = vunpack.c.l.b16 %v313
        %v418 = vunpack.c.l.b16 %v314
        %v419 = vpack.c.b16 %v388, %v387
        %v420 = vpack.c.b16 %v390, %v389
        %v421 = vpack.c.b16 %v392, %v391
        %v422 = vpack.c.b16 %v394, %v393
        %v423 = vpack.c.b16 %v396, %v395
        %v424 = vpack.c.b16 %v398, %v397
        %v425 = vpack.c.b16 %v400, %v399
        %v426 = vpack.c.b16 %v402, %v401
        %v427 = vpack.c.b16 %v404, %v403
        %v428 = vpack.c.b16 %v406, %v405
        %v429 = vpack.c.b16 %v408, %v407
        %v430 = vpack.c.b16 %v410, %v409
        %v431 = vpack.c.b16 %v412, %v411
        %v432 = vpack.c.b16 %v414, %v413
        %v433 = vpack.c.b16 %v416, %v415
        %v434 = vpack.c.b16 %v418, %v417
        %451 = vmatpush.bf16.msra.mxu0 %v426
        %452 = vmatpush.bf16.msra.mxu0 %v425
        %453 = vmatpush.bf16.msra.mxu0 %v424
        %454 = vmatpush.bf16.msra.mxu0 %v423
        %455 = vmatpush.bf16.msra.mxu0 %v422
        %456 = vmatpush.bf16.msra.mxu0 %v421
        %457 = vmatpush.bf16.msra.mxu0 %v420
        %458 = vmatpush.bf16.msra.mxu0 %v419
        %459 = vmatmul.bf16.gmra.mxu0 %v339
        %v460 = vpop.f32.mrf.mxu0
        %v461 = vadd.f32 0.0, %v460
        %v462 = vpop.f32.mrf.mxu0
        %v463 = vadd.f32 0.0, %v462
        %464 = vmatmul.bf16.gmra.mxu0 %v341
        %v465 = vpop.f32.mrf.mxu0
        %v466 = vadd.f32 0.0, %v465
        %v467 = vpop.f32.mrf.mxu0
        %v468 = vadd.f32 0.0, %v467
        %469 = vmatmul.bf16.gmra.mxu0 %v343
        %v470 = vpop.f32.mrf.mxu0
        %v471 = vadd.f32 0.0, %v470
        %v472 = vpop.f32.mrf.mxu0
        %v473 = vadd.f32 0.0, %v472
        %474 = vmatmul.bf16.gmra.mxu0 %v345
        %v475 = vpop.f32.mrf.mxu0
        %v476 = vadd.f32 0.0, %v475
        %v477 = vpop.f32.mrf.mxu0
        %v478 = vadd.f32 0.0, %v477
        %479 = vdwg.mxu0
        %480 = vmatpush.bf16.msra.mxu0 %v434
        %481 = vmatpush.bf16.msra.mxu0 %v433
        %482 = vmatpush.bf16.msra.mxu0 %v432
        %483 = vmatpush.bf16.msra.mxu0 %v431
        %484 = vmatpush.bf16.msra.mxu0 %v430
        %485 = vmatpush.bf16.msra.mxu0 %v429
        %486 = vmatpush.bf16.msra.mxu0 %v428
        %487 = vmatpush.bf16.msra.mxu0 %v427
        %488 = vmatmul.bf16.gmra.mxu0 %v340
        %v489 = vpop.f32.mrf.mxu0
        %v490 = vadd.f32 %v461, %v489
        %v491 = vpop.f32.mrf.mxu0
        %v492 = vadd.f32 %v463, %v491
        %493 = vmatmul.bf16.gmra.mxu0 %v342
        %v494 = vpop.f32.mrf.mxu0
        %v495 = vadd.f32 %v466, %v494
        %v496 = vpop.f32.mrf.mxu0
        %v497 = vadd.f32 %v468, %v496
        %498 = vmatmul.bf16.gmra.mxu0 %v344
        %v499 = vpop.f32.mrf.mxu0
        %v500 = vadd.f32 %v471, %v499
        %v501 = vpop.f32.mrf.mxu0
        %v502 = vadd.f32 %v473, %v501
        %503 = vmatmul.bf16.gmra.mxu0 %v346
        %v504 = vpop.f32.mrf.mxu0
        %v505 = vadd.f32 %v476, %v504
        %v506 = vpop.f32.mrf.mxu0
        %v507 = vadd.f32 %v478, %v506
        %508 = vdwg.mxu0
        %v509 = vadd.f32 %v275, %v490
        %v510 = vadd.f32 %v276, %v492
        %v511 = vadd.f32 %v277, %v495
        %v512 = vadd.f32 %v278, %v497
        %v513 = vadd.f32 %v279, %v500
        %v514 = vadd.f32 %v280, %v502
        %v515 = vadd.f32 %v281, %v505
        %v516 = vadd.f32 %v282, %v507
        %517 = vst [vmem:[#allocation2] sm:$0xff] %v509
        %518 = vst [vmem:[#allocation2 + $0x8] sm:$0xff] %v510
        %519 = vst [vmem:[#allocation2 + $0x10] sm:$0xff] %v511
        %520 = vst [vmem:[#allocation2 + $0x18] sm:$0xff] %v512
        %521 = vst [vmem:[#allocation2 + $0x20] sm:$0xff] %v513
        %522 = vst [vmem:[#allocation2 + $0x28] sm:$0xff] %v514
        %523 = vst [vmem:[#allocation2 + $0x30] sm:$0xff] %v515
        %524 = vst [vmem:[#allocation2 + $0x38] sm:$0xff] %v516
        // Predicated region
        $region41: #{mlp_forward.5} parent=31 // pred_check
          %p525 = pneg %p255
        $region42: #{mlp_forward.5} parent=31 // pred_check_branch
          %527 = sbr.rel (%p525) target = $region44
        $region43: #{mlp_forward.5} parent=31 // pred_region
          %v528 = vld [vmem:[#allocation2] sm:$0xff]
          %v529 = vld [vmem:[#allocation2 + $0x8] sm:$0xff]
          %v530 = vld [vmem:[#allocation2 + $0x10] sm:$0xff]
          %v531 = vld [vmem:[#allocation2 + $0x18] sm:$0xff]
          %v532 = vld [vmem:[#allocation2 + $0x20] sm:$0xff]
          %v533 = vld [vmem:[#allocation2 + $0x28] sm:$0xff]
          %v534 = vld [vmem:[#allocation2 + $0x30] sm:$0xff]
          %v535 = vld [vmem:[#allocation2 + $0x38] sm:$0xff]
          %v536 = vld [vmem:[%s253] sm:$0x1]
          %v538 = vperm.slane %v536, 0
          %v540 = vadd.f32 %v528, %v538
          %v541 = vadd.f32 %v529, %v538
          %v542 = vadd.f32 %v530, %v538
          %v543 = vadd.f32 %v531, %v538
          %v544 = vadd.f32 %v532, %v538
          %v545 = vadd.f32 %v533, %v538
          %v546 = vadd.f32 %v534, %v538
          %v547 = vadd.f32 %v535, %v538
          %548 = vst [vmem:[%s237] sm:$0xff] %v540
          %549 = vst [vmem:[%s237 + $0x8] sm:$0xff] %v541
          %550 = vst [vmem:[%s237 + $0x10] sm:$0xff] %v542
          %551 = vst [vmem:[%s237 + $0x18] sm:$0xff] %v543
          %552 = vst [vmem:[%s237 + $0x20] sm:$0xff] %v544
          %553 = vst [vmem:[%s237 + $0x28] sm:$0xff] %v545
          %554 = vst [vmem:[%s237 + $0x30] sm:$0xff] %v546
          %555 = vst [vmem:[%s237 + $0x38] sm:$0xff] %v547
        $region44: #{mlp_forward.5} parent=31 // pred_fallthru
          _
        %s556 = sand.u32 %s129, 1
        %s557 = scalar_lea.sflag [#allocation5], %s556
        %s558 = sand.u32 %s129, 1
        %s559 = smul.addr %s558, 64
        %s560 = scalar_lea.vmem [#allocation6], %s559
        // Predicated region
        $region45: #{mlp_forward.5} parent=31 // pred_check
          %p561 = pneg %p139
        $region46: #{mlp_forward.5} parent=31 // pred_check_branch
          %563 = sbr.rel (%p561) target = $region48
        $region47: #{mlp_forward.5} parent=31 // pred_region
          %s564 = smul.u32 8, %s23
          %566 = vsyncadd %s557, 0
          %s567 = sadd.s32 %s24, %s564
          %s568 = smul.addr %s567, 8
          %s569 = scalar_lea.hbm %s3, %s568
          %s570 = sshll.u32 %s560, 4
          %s571 = int_to_ptr.vmem [resolvable:$true] %s570
          %s572 = sshll.u32 %s569, 4
          %s573 = int_to_ptr.hbm [resolvable:$true] %s572
          %578 = dma.vmem_to_hbm [thread:$0]  %s571, 1024, %s573, %s557, 128, 128, 8
        $region48: #{mlp_forward.5} parent=31 // pred_fallthru
          _
      $region32: #{mlp_forward.5} parent=5 // pred_fallthru
        _
      %p579 = scmp.le.s32.totalorder 2, %s13
      // Predicated region
      $region49: #{mlp_forward.5} parent=5 // pred_check
        %p580 = pneg %p579
      $region50: #{mlp_forward.5} parent=5 // pred_check_branch
        %582 = sbr.rel (%p580) target = $region52
      $region51: #{mlp_forward.5} parent=5 // pred_region
        %s583 = ssub.s32 %s13, 2
        // Predicated region
        $region53: #{mlp_forward.5} parent=51 // pred_check
          %p584 = pneg %p145
        $region54: #{mlp_forward.5} parent=51 // pred_check_branch
          %586 = sbr.rel (%p584) target = $region56
        $region55: #{mlp_forward.5} parent=51 // pred_region
          %s587 = sand.u32 %s130, 1
          %s588 = scalar_lea.sflag [#allocation5], %s587
          %s589 = sand.u32 %s130, 1
          %s590 = smul.addr %s589, 64
          %s591 = scalar_lea.vmem [#allocation6], %s590
          %593 = dma.done %s588, 1024
        $region56: #{mlp_forward.5} parent=51 // pred_fallthru
          _
      $region52: #{mlp_forward.5} parent=5 // pred_fallthru
        _
    $region6: #{mlp_forward.5} parent=1 // loop_footer
      %s17 = sadd.s32 1, %s13
    $region7: #{mlp_forward.5} parent=1 // loop_footer_branch
      %12 = sbr.rel target = $region3
    $region8: #{mlp_forward.5} parent=1 // loop_exit
      _
    %594 = vsyncpa [#allocation4], 1
    %s595 = scalar_lea.sflag [#allocation4], 1
    %596 = vsyncpa %s595, 1
    %597 = vsyncpa [#allocation5], 1
    %s598 = scalar_lea.sflag [#allocation5], 1
    %599 = vsyncpa %s598, 1

// kernel: mlp_forward.4
$region0: #{mlp_forward.4}
  #allocation0 [shape = 'u32[]', space=smem, size = 0x4, offset = 0x4, fixed_abs, tag = 'smem constant byte address 0x4 - core index']
  #allocation1 [shape = 'u32[72,128]{1,0:T(1,128)}', space=vmem, size = 0x9000, scoped, tag = 'internal scratch']
  #allocation2 [shape = 'f32[1,10,10,256]{3,2,1,0:T(8,128)}', space=vmem, size = 0x28000, scoped, tag = 'scratch operand']
  %s0 = inlined_call_operand.vmem [shape: bf16[2,8,8,256], index: 0, kind: input, shape index: {}]
  %s1 = inlined_call_operand.hbm [shape: f32[9,256], index: 1, kind: input, shape index: {}]
  %s2 = inlined_call_operand.vmem [shape: f32[1,256], index: 2, kind: input, shape index: {}]
  %s3 = inlined_call_operand.vmem [shape: bf16[2,8,8,256], index: 3, kind: output, shape index: {}]
  %s4 = sld [smem:[#allocation0]]
  $region49: #{mlp_forward.4} parent=0
    _
  %s6 = ssub.s32 1, %s4
  %s7 = scalar_select 0, %s6, %s4
  $region1: #{mlp_forward.4} parent=0
    #allocation3 [shape = 'u8[16384]{0}', space=vmem, size = 0x4000, scoped, tag = 'input window, operand 1, single buffered']
    #allocation4 [shape = 's32[2]{0}', space=sflag, size = 0x8, scoped, tag = 'scoped memory for mlp_forward.4']
    %8 = vsyncpa [#allocation4], 0
    loop: start=0, step=1, limit=4
    $region2: #{mlp_forward.4} parent=1 // loop_pre_header
      _
    $region3: #{mlp_forward.4} parent=1 // loop_header
      %s10 = sphi 0, %s14
      %p11 = scmp.ge.s32.totalorder %s10, 4
      %s20 = sphi 0, %s22
      %s23 = sphi 0, %s20
      %s24 = sphi 0, %s23
      %s40 = sphi 0, %s24
      %s44 = sphi 0, %s44
      %s46 = sphi 0, %s44
      %s47 = sphi 0, %s46
      %s61 = sphi 0, %s47
      %s65 = sphi 0, %s65
      %s67 = sphi 0, %s65
      %s68 = sphi 0, %s67
      %s82 = sphi 0, %s68
      %s88 = sphi 0, %s90
      %s91 = sphi 0, %s88
      %s92 = sphi 0, %s91
      %s108 = sphi 0, %s92
    $region4: #{mlp_forward.4} parent=1 // loop_header_branch
      %13 = sbr.rel (%p11) target = $region8
    $region5: #{mlp_forward.4} parent=1 // loop_body
      %s15 = ssub.s32 %s10, 1
      %s16 = ssub.s32 %s10, 2
      %s17 = sadd.s32 %s10, 1
      %s18 = ssub.s32 %s10, %s17
      %p19 = scmp.eq.s32.totalorder %s18, 0
      %s21 = sadd.s32 %s20, 1
      %s22 = scalar_select %p19, %s20, %s21
      %p25 = pneg %p19
      %p26 = scmp.eq.s32.totalorder %s10, 1
      %p27 = por %p25, %p26
      %p28 = scmp.ne.s32.totalorder %s20, %s23
      %p29 = scmp.eq.s32.totalorder %s10, 0
      %p30 = por %p28, %p29
      %p31 = scmp.ne.s32.totalorder %s20, %s23
      %p32 = scmp.eq.s32.totalorder %s15, 1
      %p33 = por %p31, %p32
      %p34 = scmp.ne.s32.totalorder %s23, %s24
      %p35 = scmp.eq.s32.totalorder %s15, 0
      %p36 = por %p34, %p35
      %p37 = scmp.ne.s32.totalorder %s23, %s24
      %p38 = scmp.eq.s32.totalorder %s16, 1
      %p39 = por %p37, %p38
      %p41 = scmp.ne.s32.totalorder %s24, %s40
      %p42 = scmp.eq.s32.totalorder %s16, 0
      %p43 = por %p41, %p42
      %s45 = sadd.s32 %s44, 1
      %p48 = scmp.eq.s32.totalorder %s10, 1
      %p49 = scmp.ne.s32.totalorder %s44, %s46
      %p50 = scmp.eq.s32.totalorder %s10, 0
      %p51 = por %p49, %p50
      %p52 = scmp.ne.s32.totalorder %s44, %s46
      %p53 = scmp.eq.s32.totalorder %s15, 1
      %p54 = por %p52, %p53
      %p55 = scmp.ne.s32.totalorder %s46, %s47
      %p56 = scmp.eq.s32.totalorder %s15, 0
      %p57 = por %p55, %p56
      %p58 = scmp.ne.s32.totalorder %s46, %s47
      %p59 = scmp.eq.s32.totalorder %s16, 1
      %p60 = por %p58, %p59
      %p62 = scmp.ne.s32.totalorder %s47, %s61
      %p63 = scmp.eq.s32.totalorder %s16, 0
      %p64 = por %p62, %p63
      %s66 = sadd.s32 %s65, 1
      %p69 = scmp.eq.s32.totalorder %s10, 1
      %p70 = scmp.ne.s32.totalorder %s65, %s67
      %p71 = scmp.eq.s32.totalorder %s10, 0
      %p72 = por %p70, %p71
      %p73 = scmp.ne.s32.totalorder %s65, %s67
      %p74 = scmp.eq.s32.totalorder %s15, 1
      %p75 = por %p73, %p74
      %p76 = scmp.ne.s32.totalorder %s67, %s68
      %p77 = scmp.eq.s32.totalorder %s15, 0
      %p78 = por %p76, %p77
      %p79 = scmp.ne.s32.totalorder %s67, %s68
      %p80 = scmp.eq.s32.totalorder %s16, 1
      %p81 = por %p79, %p80
      %p83 = scmp.ne.s32.totalorder %s68, %s82
      %p84 = scmp.eq.s32.totalorder %s16, 0
      %p85 = por %p83, %p84
      %s86 = ssub.s32 %s10, %s17
      %p87 = scmp.eq.s32.totalorder %s86, 0
      %s89 = sadd.s32 %s88, 1
      %s90 = scalar_select %p87, %s88, %s89
      %p93 = pneg %p87
      %p94 = scmp.eq.s32.totalorder %s10, 1
      %p95 = por %p93, %p94
      %p96 = scmp.ne.s32.totalorder %s88, %s91
      %p97 = scmp.eq.s32.totalorder %s10, 0
      %p98 = por %p96, %p97
      %p99 = scmp.ne.s32.totalorder %s88, %s91
      %p100 = scmp.eq.s32.totalorder %s15, 1
      %p101 = por %p99, %p100
      %p102 = scmp.ne.s32.totalorder %s91, %s92
      %p103 = scmp.eq.s32.totalorder %s15, 0
      %p104 = por %p102, %p103
      %p105 = scmp.ne.s32.totalorder %s91, %s92
      %p106 = scmp.eq.s32.totalorder %s16, 1
      %p107 = por %p105, %p106
      %p109 = scmp.ne.s32.totalorder %s92, %s108
      %p110 = scmp.eq.s32.totalorder %s16, 0
      %p111 = por %p109, %p110
      %p112 = scmp.le.s32.totalorder 1, %s10
      %p113 = scmp.lt.s32.totalorder %s10, 3
      %p114 = pnand %p112, %p113
      %p115 = pneg %p114
      // Predicated region
      $region9: #{mlp_forward.4} parent=5 // pred_check
        _
      $region10: #{mlp_forward.4} parent=5 // pred_check_branch
        %117 = sbr.rel (%p114) target = $region12
      $region11: #{mlp_forward.4} parent=5 // pred_region
        %s118 = ssub.s32 %s10, 1
        // Predicated region
        $region13: #{mlp_forward.4} parent=11 // pred_check
          %p119 = pneg %p57
        $region14: #{mlp_forward.4} parent=11 // pred_check_branch
          %121 = sbr.rel (%p119) target = $region16
        $region15: #{mlp_forward.4} parent=11 // pred_region
          %123 = vsyncadd [#allocation4], 0
          %s124 = sshll.u32 %s1, 4
          %s125 = int_to_ptr.hbm [resolvable:$true] %s124
          %s126 = sshll.u32 [#allocation3], 4
          %s127 = int_to_ptr.vmem [resolvable:$true] %s126
          %132 = dma.hbm_to_vmem [thread:$0]  %s125, 512, %s127, [#allocation4], 256, 256, 16
        $region16: #{mlp_forward.4} parent=11 // pred_fallthru
          _
        // Predicated region
        $region17: #{mlp_forward.4} parent=11 // pred_check
          %p133 = pneg %p78
        $region18: #{mlp_forward.4} parent=11 // pred_check_branch
          %135 = sbr.rel (%p133) target = $region20
        $region19: #{mlp_forward.4} parent=11 // pred_region
          _
        $region20: #{mlp_forward.4} parent=11 // pred_fallthru
          _
      $region12: #{mlp_forward.4} parent=5 // pred_fallthru
        _
      %p136 = scmp.lt.s32.totalorder %s10, 2
      // Predicated region
      $region21: #{mlp_forward.4} parent=5 // pred_check
        %p137 = pneg %p136
      $region22: #{mlp_forward.4} parent=5 // pred_check_branch
        %139 = sbr.rel (%p137) target = $region24
      $region23: #{mlp_forward.4} parent=5 // pred_region
        // Predicated region
        $region25: #{mlp_forward.4} parent=23 // pred_check
          %p140 = pneg %p30
        $region26: #{mlp_forward.4} parent=23 // pred_check_branch
          %142 = sbr.rel (%p140) target = $region28
        $region27: #{mlp_forward.4} parent=23 // pred_region
          %p143 = scmp.lt.s32.totalorder %s10, 1
          %s144 = scalar_select %p143, %s10, 1
          %s145 = smul.addr %s144, 16
          %s146 = smul.addr %s145, 4
          %s147 = scalar_lea.vmem %s0, %s146
        $region28: #{mlp_forward.4} parent=23 // pred_fallthru
          _
      $region24: #{mlp_forward.4} parent=5 // pred_fallthru
        _
      %p148 = scmp.le.s32.totalorder 1, %s10
      %p149 = scmp.lt.s32.totalorder %s10, 3
      %p150 = pnand %p148, %p149
      %p151 = pneg %p150
      // Predicated region
      $region29: #{mlp_forward.4} parent=5 // pred_check
        _
      $region30: #{mlp_forward.4} parent=5 // pred_check_branch
        %153 = sbr.rel (%p150) target = $region32
      $region31: #{mlp_forward.4} parent=5 // pred_region
        %s154 = ssub.s32 %s10, 1
        // Predicated region
        $region33: #{mlp_forward.4} parent=31 // pred_check
          %p155 = pneg %p57
        $region34: #{mlp_forward.4} parent=31 // pred_check_branch
          %157 = sbr.rel (%p155) target = $region36
        $region35: #{mlp_forward.4} parent=31 // pred_region
          %159 = dma.done [#allocation4], 512
        $region36: #{mlp_forward.4} parent=31 // pred_fallthru
          _
        %p160 = scmp.lt.s32.totalorder %s15, 1
        %s161 = scalar_select %p160, %s15, 1
        %s162 = smul.addr %s161, 16
        %s163 = smul.addr %s162, 4
        %s164 = scalar_lea.vmem %s0, %s163
        %p165 = pneg %p36
        %p166 = pneg %p33
        %p167 = pneg %p57
        %p168 = pneg %p54
        %p169 = pneg %p78
        %p170 = pneg %p75
        %p171 = pneg %p104
        %p172 = pneg %p101
        %p173 = scmp.lt.s32.totalorder %s15, 1
        %s174 = scalar_select %p173, %s15, 1
        %s175 = smul.addr %s174, 16
        %s176 = smul.addr %s175, 4
        %s177 = scalar_lea.vmem %s3, %s176
        %p178 = scmp.lt.s32.totalorder %s15, 1
        %s179 = scalar_select %p178, %s15, 1
        %s180 = smul.addr %s179, 16
        %s181 = smul.addr %s180, 4
        %s182 = scalar_lea.vmem %s0, %s181
        %p183 = scmp.lt.s32.totalorder %s15, 1
        %s184 = scalar_select %p183, %s15, 1
        %s185 = smul.addr %s184, 16
        %s186 = smul.addr %s185, 4
        %s187 = scalar_lea.vmem %s3, %s186
        %188 = vst [vmem:[#allocation2] sm:$0xff] 0.0
        %189 = vst [vmem:[#allocation2 + $0x8] sm:$0xff] 0.0
        %190 = vst [vmem:[#allocation2 + $0x10] sm:$0x3] 0.0
        %191 = vst [vmem:[#allocation2 + $0x18] sm:$0x3] 0.0
        %192 = vst [vmem:[#allocation2 + $0x20] sm:$0xff] 0.0
        %193 = vst [vmem:[#allocation2 + $0x28] sm:$0xff] 0.0
        %194 = vst [vmem:[#allocation2 + $0x30] sm:$0x3] 0.0
        %195 = vst [vmem:[#allocation2 + $0x38] sm:$0x3] 0.0
        %196 = vst [vmem:[#allocation2 + $0x40] sm:$0xff] 0.0
        %197 = vst [vmem:[#allocation2 + $0x48] sm:$0xff] 0.0
        %198 = vst [vmem:[#allocation2 + $0x50] sm:$0x3] 0.0
        %199 = vst [vmem:[#allocation2 + $0x58] sm:$0x3] 0.0
        %200 = vst [vmem:[#allocation2 + $0x60] sm:$0xff] 0.0
        %201 = vst [vmem:[#allocation2 + $0x68] sm:$0xff] 0.0
        %202 = vst [vmem:[#allocation2 + $0x70] sm:$0x3] 0.0
        %203 = vst [vmem:[#allocation2 + $0x78] sm:$0x3] 0.0
        %204 = vst [vmem:[#allocation2 + $0x80] sm:$0xff] 0.0
        %205 = vst [vmem:[#allocation2 + $0x88] sm:$0xff] 0.0
        %206 = vst [vmem:[#allocation2 + $0x90] sm:$0x3] 0.0
        %207 = vst [vmem:[#allocation2 + $0x98] sm:$0x3] 0.0
        %208 = vst [vmem:[#allocation2 + $0xa0] sm:$0xff] 0.0
        %209 = vst [vmem:[#allocation2 + $0xa8] sm:$0xff] 0.0
        %210 = vst [vmem:[#allocation2 + $0xb0] sm:$0x3] 0.0
        %211 = vst [vmem:[#allocation2 + $0xb8] sm:$0x3] 0.0
        %212 = vst [vmem:[#allocation2 + $0xc0] sm:$0xff] 0.0
        %213 = vst [vmem:[#allocation2 + $0xc8] sm:$0xff] 0.0
        %214 = vst [vmem:[#allocation2 + $0xd0] sm:$0x3] 0.0
        %215 = vst [vmem:[#allocation2 + $0xd8] sm:$0x3] 0.0
        %216 = vst [vmem:[#allocation2 + $0xe0] sm:$0xff] 0.0
        %217 = vst [vmem:[#allocation2 + $0xe8] sm:$0xff] 0.0
        %218 = vst [vmem:[#allocation2 + $0xf0] sm:$0x3] 0.0
        %219 = vst [vmem:[#allocation2 + $0xf8] sm:$0x3] 0.0
        %220 = vst [vmem:[#allocation2 + $0x100] sm:$0xff] 0.0
        %221 = vst [vmem:[#allocation2 + $0x108] sm:$0xff] 0.0
        %222 = vst [vmem:[#allocation2 + $0x110] sm:$0x3] 0.0
        %223 = vst [vmem:[#allocation2 + $0x118] sm:$0x3] 0.0
        %224 = vst [vmem:[#allocation2 + $0x120] sm:$0xff] 0.0
        %225 = vst [vmem:[#allocation2 + $0x128] sm:$0xff] 0.0
        %226 = vst [vmem:[#allocation2 + $0x130] sm:$0x3] 0.0
        %227 = vst [vmem:[#allocation2 + $0x138] sm:$0x3] 0.0
        %v228 = vld [vmem:[%s182] sm:$0xff]
        %v229 = vld [vmem:[%s182 + $0x8] sm:$0xff]
        %v230 = vld [vmem:[%s182 + $0x10] sm:$0xff]
        %v231 = vld [vmem:[%s182 + $0x18] sm:$0xff]
        %v232 = vld [vmem:[%s182 + $0x20] sm:$0xff]
        %v233 = vld [vmem:[%s182 + $0x28] sm:$0xff]
        %v234 = vld [vmem:[%s182 + $0x30] sm:$0xff]
        %v235 = vld [vmem:[%s182 + $0x38] sm:$0xff]
        %v236 = vunpack.c.l.bf16 %v228
        %v237 = vunpack.c.h.bf16 %v228
        %v238 = vunpack.c.l.bf16 %v229
        %v239 = vunpack.c.h.bf16 %v229
        %v240 = vunpack.c.l.bf16 %v230
        %v241 = vunpack.c.h.bf16 %v230
        %v242 = vunpack.c.l.bf16 %v231
        %v243 = vunpack.c.h.bf16 %v231
        %v244 = vunpack.c.l.bf16 %v232
        %v245 = vunpack.c.h.bf16 %v232
        %v246 = vunpack.c.l.bf16 %v233
        %v247 = vunpack.c.h.bf16 %v233
        %v248 = vunpack.c.l.bf16 %v234
        %v249 = vunpack.c.h.bf16 %v234
        %v250 = vunpack.c.l.bf16 %v235
        %v251 = vunpack.c.h.bf16 %v235
        %v268 = vrot.slane %v236, 7
        %v269 = vrot.slane %v237, 7
        %v270 = vrot.slane %v238, 7
        %v271 = vrot.slane %v239, 7
        %v272 = vrot.slane %v240, 7
        %v273 = vrot.slane %v241, 7
        %v274 = vrot.slane %v242, 7
        %v275 = vrot.slane %v243, 7
        %v276 = vrot.slane %v244, 7
        %v277 = vrot.slane %v245, 7
        %v278 = vrot.slane %v246, 7
        %v279 = vrot.slane %v247, 7
        %v280 = vrot.slane %v248, 7
        %v281 = vrot.slane %v249, 7
        %v282 = vrot.slane %v250, 7
        %v283 = vrot.slane %v251, 7
        %s300 = scalar_lea.vmem [#allocation2], 32
        %301 = vst [vmem:[%s300] sm:$0xfe] %v268
        %302 = vst [vmem:[%s300 + $0x8] sm:$0xfe] %v269
        %303 = vst [vmem:[%s300 + $0x10] sm:$0x1] %v268
        %304 = vst [vmem:[%s300 + $0x18] sm:$0x1] %v269
        %305 = vst [vmem:[%s300 + $0x20] sm:$0xfe] %v270
        %306 = vst [vmem:[%s300 + $0x28] sm:$0xfe] %v271
        %307 = vst [vmem:[%s300 + $0x30] sm:$0x1] %v270
        %308 = vst [vmem:[%s300 + $0x38] sm:$0x1] %v271
        %309 = vst [vmem:[%s300 + $0x40] sm:$0xfe] %v272
        %310 = vst [vmem:[%s300 + $0x48] sm:$0xfe] %v273
        %311 = vst [vmem:[%s300 + $0x50] sm:$0x1] %v272
        %312 = vst [vmem:[%s300 + $0x58] sm:$0x1] %v273
        %313 = vst [vmem:[%s300 + $0x60] sm:$0xfe] %v274
        %314 = vst [vmem:[%s300 + $0x68] sm:$0xfe] %v275
        %315 = vst [vmem:[%s300 + $0x70] sm:$0x1] %v274
        %316 = vst [vmem:[%s300 + $0x78] sm:$0x1] %v275
        %317 = vst [vmem:[%s300 + $0x80] sm:$0xfe] %v276
        %318 = vst [vmem:[%s300 + $0x88] sm:$0xfe] %v277
        %319 = vst [vmem:[%s300 + $0x90] sm:$0x1] %v276
        %320 = vst [vmem:[%s300 + $0x98] sm:$0x1] %v277
        %321 = vst [vmem:[%s300 + $0xa0] sm:$0xfe] %v278
        %322 = vst [vmem:[%s300 + $0xa8] sm:$0xfe] %v279
        %323 = vst [vmem:[%s300 + $0xb0] sm:$0x1] %v278
        %324 = vst [vmem:[%s300 + $0xb8] sm:$0x1] %v279
        %325 = vst [vmem:[%s300 + $0xc0] sm:$0xfe] %v280
        %326 = vst [vmem:[%s300 + $0xc8] sm:$0xfe] %v281
        %327 = vst [vmem:[%s300 + $0xd0] sm:$0x1] %v280
        %328 = vst [vmem:[%s300 + $0xd8] sm:$0x1] %v281
        %329 = vst [vmem:[%s300 + $0xe0] sm:$0xfe] %v282
        %330 = vst [vmem:[%s300 + $0xe8] sm:$0xfe] %v283
        %331 = vst [vmem:[%s300 + $0xf0] sm:$0x1] %v282
        %332 = vst [vmem:[%s300 + $0xf8] sm:$0x1] %v283
        %v333 = vld [vmem:[#allocation3] sm:$0xff]
        %v334 = vld [vmem:[#allocation3 + $0x8] sm:$0xff]
        %v335 = vld [vmem:[#allocation3 + $0x10] sm:$0x1]
        %v336 = vld [vmem:[#allocation3 + $0x18] sm:$0x1]
        %v337 = vld [vmem:[%s2] sm:$0x3]
        %v338 = vld [vmem:[#allocation2] sm:$0xff]
        %v339 = vld [vmem:[#allocation2 + $0x8] sm:$0xff]
        %v340 = vld [vmem:[#allocation2 + $0x20] sm:$0xff]
        %v341 = vld [vmem:[#allocation2 + $0x28] sm:$0xff]
        %v342 = vld [vmem:[#allocation2 + $0x40] sm:$0xff]
        %v343 = vld [vmem:[#allocation2 + $0x48] sm:$0xff]
        %v344 = vld [vmem:[#allocation2 + $0x60] sm:$0xff]
        %v345 = vld [vmem:[#allocation2 + $0x68] sm:$0xff]
        %v346 = vld [vmem:[#allocation2 + $0x80] sm:$0xff]
        %v347 = vld [vmem:[#allocation2 + $0x88] sm:$0xff]
        %v348 = vld [vmem:[#allocation2 + $0xa0] sm:$0xff]
        %v349 = vld [vmem:[#allocation2 + $0xa8] sm:$0xff]
        %v350 = vld [vmem:[#allocation2 + $0xc0] sm:$0xff]
        %v351 = vld [vmem:[#allocation2 + $0xc8] sm:$0xff]
        %v352 = vld [vmem:[#allocation2 + $0xe0] sm:$0xff]
        %v353 = vld [vmem:[#allocation2 + $0xe8] sm:$0xff]
        %v354 = vperm.slane %v333, 0
        %v355 = vperm.slane %v334, 0
        %v356 = vmul.f32 %v338, %v354
        %v357 = vmul.f32 %v339, %v355
        %v358 = vmul.f32 %v340, %v354
        %v359 = vmul.f32 %v341, %v355
        %v360 = vmul.f32 %v342, %v354
        %v361 = vmul.f32 %v343, %v355
        %v362 = vmul.f32 %v344, %v354
        %v363 = vmul.f32 %v345, %v355
        %v364 = vmul.f32 %v346, %v354
        %v365 = vmul.f32 %v347, %v355
        %v366 = vmul.f32 %v348, %v354
        %v367 = vmul.f32 %v349, %v355
        %v368 = vmul.f32 %v350, %v354
        %v369 = vmul.f32 %v351, %v355
        %v370 = vmul.f32 %v352, %v354
        %v371 = vmul.f32 %v353, %v355
        %v372 = vld [vmem:[#allocation2] sm:$0xfe]
        %v373 = vld [vmem:[#allocation2 + $0x8] sm:$0xfe]
        %v374 = vld [vmem:[#allocation2 + $0x10] sm:$0x1]
        %v375 = vld [vmem:[#allocation2 + $0x18] sm:$0x1]
        %v376 = vld [vmem:[#allocation2 + $0x20] sm:$0xfe]
        %v377 = vld [vmem:[#allocation2 + $0x28] sm:$0xfe]
        %v378 = vld [vmem:[#allocation2 + $0x30] sm:$0x1]
        %v379 = vld [vmem:[#allocation2 + $0x38] sm:$0x1]
        %v380 = vld [vmem:[#allocation2 + $0x40] sm:$0xfe]
        %v381 = vld [vmem:[#allocation2 + $0x48] sm:$0xfe]
        %v382 = vld [vmem:[#allocation2 + $0x50] sm:$0x1]
        %v383 = vld [vmem:[#allocation2 + $0x58] sm:$0x1]
        %v384 = vld [vmem:[#allocation2 + $0x60] sm:$0xfe]
        %v385 = vld [vmem:[#allocation2 + $0x68] sm:$0xfe]
        %v386 = vld [vmem:[#allocation2 + $0x70] sm:$0x1]
        %v387 = vld [vmem:[#allocation2 + $0x78] sm:$0x1]
        %v388 = vld [vmem:[#allocation2 + $0x80] sm:$0xfe]
        %v389 = vld [vmem:[#allocation2 + $0x88] sm:$0xfe]
        %v390 = vld [vmem:[#allocation2 + $0x90] sm:$0x1]
        %v391 = vld [vmem:[#allocation2 + $0x98] sm:$0x1]
        %v392 = vld [vmem:[#allocation2 + $0xa0] sm:$0xfe]
        %v393 = vld [vmem:[#allocation2 + $0xa8] sm:$0xfe]
        %v394 = vld [vmem:[#allocation2 + $0xb0] sm:$0x1]
        %v395 = vld [vmem:[#allocation2 + $0xb8] sm:$0x1]
        %v396 = vld [vmem:[#allocation2 + $0xc0] sm:$0xfe]
        %v397 = vld [vmem:[#allocation2 + $0xc8] sm:$0xfe]
        %v398 = vld [vmem:[#allocation2 + $0xd0] sm:$0x1]
        %v399 = vld [vmem:[#allocation2 + $0xd8] sm:$0x1]
        %v400 = vld [vmem:[#allocation2 + $0xe0] sm:$0xfe]
        %v401 = vld [vmem:[#allocation2 + $0xe8] sm:$0xfe]
        %v402 = vld [vmem:[#allocation2 + $0xf0] sm:$0x1]
        %v403 = vld [vmem:[#allocation2 + $0xf8] sm:$0x1]
        %v404 = vperm.slane %v333, 1
        %v405 = vperm.slane %v334, 1
        %v406 = vmul.f32 %v372, %v404
        %v407 = vmul.f32 %v373, %v405
        %v408 = vmul.f32 %v374, %v404
        %v409 = vmul.f32 %v375, %v405
        %v410 = vmul.f32 %v376, %v404
        %v411 = vmul.f32 %v377, %v405
        %v412 = vmul.f32 %v378, %v404
        %v413 = vmul.f32 %v379, %v405
        %v414 = vmul.f32 %v380, %v404
        %v415 = vmul.f32 %v381, %v405
        %v416 = vmul.f32 %v382, %v404
        %v417 = vmul.f32 %v383, %v405
        %v418 = vmul.f32 %v384, %v404
        %v419 = vmul.f32 %v385, %v405
        %v420 = vmul.f32 %v386, %v404
        %v421 = vmul.f32 %v387, %v405
        %v422 = vmul.f32 %v388, %v404
        %v423 = vmul.f32 %v389, %v405
        %v424 = vmul.f32 %v390, %v404
        %v425 = vmul.f32 %v391, %v405
        %v426 = vmul.f32 %v392, %v404
        %v427 = vmul.f32 %v393, %v405
        %v428 = vmul.f32 %v394, %v404
        %v429 = vmul.f32 %v395, %v405
        %v430 = vmul.f32 %v396, %v404
        %v431 = vmul.f32 %v397, %v405
        %v432 = vmul.f32 %v398, %v404
        %v433 = vmul.f32 %v399, %v405
        %v434 = vmul.f32 %v400, %v404
        %v435 = vmul.f32 %v401, %v405
        %v436 = vmul.f32 %v402, %v404
        %v437 = vmul.f32 %v403, %v405
        %vm470 = vcmask 1046528
        %v471 = vrot.slane %v406, 1
        %v472 = vrot.slane %v408, 1
        %v473 = vsel %vm470, %v471, %v472
        %v474 = vrot.slane %v407, 1
        %v475 = vrot.slane %v409, 1
        %v476 = vsel %vm470, %v474, %v475
        %v477 = vrot.slane %v410, 1
        %v478 = vrot.slane %v412, 1
        %v479 = vsel %vm470, %v477, %v478
        %v480 = vrot.slane %v411, 1
        %v481 = vrot.slane %v413, 1
        %v482 = vsel %vm470, %v480, %v481
        %v483 = vrot.slane %v414, 1
        %v484 = vrot.slane %v416, 1
        %v485 = vsel %vm470, %v483, %v484
        %v486 = vrot.slane %v415, 1
        %v487 = vrot.slane %v417, 1
        %v488 = vsel %vm470, %v486, %v487
        %v489 = vrot.slane %v418, 1
        %v490 = vrot.slane %v420, 1
        %v491 = vsel %vm470, %v489, %v490
        %v492 = vrot.slane %v419, 1
        %v493 = vrot.slane %v421, 1
        %v494 = vsel %vm470, %v492, %v493
        %v495 = vrot.slane %v422, 1
        %v496 = vrot.slane %v424, 1
        %v497 = vsel %vm470, %v495, %v496
        %v498 = vrot.slane %v423, 1
        %v499 = vrot.slane %v425, 1
        %v500 = vsel %vm470, %v498, %v499
        %v501 = vrot.slane %v426, 1
        %v502 = vrot.slane %v428, 1
        %v503 = vsel %vm470, %v501, %v502
        %v504 = vrot.slane %v427, 1
        %v505 = vrot.slane %v429, 1
        %v506 = vsel %vm470, %v504, %v505
        %v507 = vrot.slane %v430, 1
        %v508 = vrot.slane %v432, 1
        %v509 = vsel %vm470, %v507, %v508
        %v510 = vrot.slane %v431, 1
        %v511 = vrot.slane %v433, 1
        %v512 = vsel %vm470, %v510, %v511
        %v513 = vrot.slane %v434, 1
        %v514 = vrot.slane %v436, 1
        %v515 = vsel %vm470, %v513, %v514
        %v516 = vrot.slane %v435, 1
        %v517 = vrot.slane %v437, 1
        %v518 = vsel %vm470, %v516, %v517
        %v535 = vadd.f32 %v356, %v473
        %v536 = vadd.f32 %v357, %v476
        %v537 = vadd.f32 %v358, %v479
        %v538 = vadd.f32 %v359, %v482
        %v539 = vadd.f32 %v360, %v485
        %v540 = vadd.f32 %v361, %v488
        %v541 = vadd.f32 %v362, %v491
        %v542 = vadd.f32 %v363, %v494
        %v543 = vadd.f32 %v364, %v497
        %v544 = vadd.f32 %v365, %v500
        %v545 = vadd.f32 %v366, %v503
        %v546 = vadd.f32 %v367, %v506
        %v547 = vadd.f32 %v368, %v509
        %v548 = vadd.f32 %v369, %v512
        %v549 = vadd.f32 %v370, %v515
        %v550 = vadd.f32 %v371, %v518
        %v551 = vld [vmem:[#allocation2] sm:$0xfc]
        %v552 = vld [vmem:[#allocation2 + $0x8] sm:$0xfc]
        %v553 = vld [vmem:[#allocation2 + $0x10] sm:$0x3]
        %v554 = vld [vmem:[#allocation2 + $0x18] sm:$0x3]
        %v555 = vld [vmem:[#allocation2 + $0x20] sm:$0xfc]
        %v556 = vld [vmem:[#allocation2 + $0x28] sm:$0xfc]
        %v557 = vld [vmem:[#allocation2 + $0x30] sm:$0x3]
        %v558 = vld [vmem:[#allocation2 + $0x38] sm:$0x3]
        %v559 = vld [vmem:[#allocation2 + $0x40] sm:$0xfc]
        %v560 = vld [vmem:[#allocation2 + $0x48] sm:$0xfc]
        %v561 = vld [vmem:[#allocation2 + $0x50] sm:$0x3]
        %v562 = vld [vmem:[#allocation2 + $0x58] sm:$0x3]
        %v563 = vld [vmem:[#allocation2 + $0x60] sm:$0xfc]
        %v564 = vld [vmem:[#allocation2 + $0x68] sm:$0xfc]
        %v565 = vld [vmem:[#allocation2 + $0x70] sm:$0x3]
        %v566 = vld [vmem:[#allocation2 + $0x78] sm:$0x3]
        %v567 = vld [vmem:[#allocation2 + $0x80] sm:$0xfc]
        %v568 = vld [vmem:[#allocation2 + $0x88] sm:$0xfc]
        %v569 = vld [vmem:[#allocation2 + $0x90] sm:$0x3]
        %v570 = vld [vmem:[#allocation2 + $0x98] sm:$0x3]
        %v571 = vld [vmem:[#allocation2 + $0xa0] sm:$0xfc]
        %v572 = vld [vmem:[#allocation2 + $0xa8] sm:$0xfc]
        %v573 = vld [vmem:[#allocation2 + $0xb0] sm:$0x3]
        %v574 = vld [vmem:[#allocation2 + $0xb8] sm:$0x3]
        %v575 = vld [vmem:[#allocation2 + $0xc0] sm:$0xfc]
        %v576 = vld [vmem:[#allocation2 + $0xc8] sm:$0xfc]
        %v577 = vld [vmem:[#allocation2 + $0xd0] sm:$0x3]
        %v578 = vld [vmem:[#allocation2 + $0xd8] sm:$0x3]
        %v579 = vld [vmem:[#allocation2 + $0xe0] sm:$0xfc]
        %v580 = vld [vmem:[#allocation2 + $0xe8] sm:$0xfc]
        %v581 = vld [vmem:[#allocation2 + $0xf0] sm:$0x3]
        %v582 = vld [vmem:[#allocation2 + $0xf8] sm:$0x3]
        %v583 = vperm.slane %v333, 2
        %v584 = vperm.slane %v334, 2
        %v585 = vmul.f32 %v551, %v583
        %v586 = vmul.f32 %v552, %v584
        %v587 = vmul.f32 %v553, %v583
        %v588 = vmul.f32 %v554, %v584
        %v589 = vmul.f32 %v555, %v583
        %v590 = vmul.f32 %v556, %v584
        %v591 = vmul.f32 %v557, %v583
        %v592 = vmul.f32 %v558, %v584
        %v593 = vmul.f32 %v559, %v583
        %v594 = vmul.f32 %v560, %v584
        %v595 = vmul.f32 %v561, %v583
        %v596 = vmul.f32 %v562, %v584
        %v597 = vmul.f32 %v563, %v583
        %v598 = vmul.f32 %v564, %v584
        %v599 = vmul.f32 %v565, %v583
        %v600 = vmul.f32 %v566, %v584
        %v601 = vmul.f32 %v567, %v583
        %v602 = vmul.f32 %v568, %v584
        %v603 = vmul.f32 %v569, %v583
        %v604 = vmul.f32 %v570, %v584
        %v605 = vmul.f32 %v571, %v583
        %v606 = vmul.f32 %v572, %v584
        %v607 = vmul.f32 %v573, %v583
        %v608 = vmul.f32 %v574, %v584
        %v609 = vmul.f32 %v575, %v583
        %v610 = vmul.f32 %v576, %v584
        %v611 = vmul.f32 %v577, %v583
        %v612 = vmul.f32 %v578, %v584
        %v613 = vmul.f32 %v579, %v583
        %v614 = vmul.f32 %v580, %v584
        %v615 = vmul.f32 %v581, %v583
        %v616 = vmul.f32 %v582, %v584
        %vm649 = vcmask 1045504
        %v650 = vrot.slane %v585, 2
        %v651 = vrot.slane %v587, 2
        %v652 = vsel %vm649, %v650, %v651
        %v653 = vrot.slane %v586, 2
        %v654 = vrot.slane %v588, 2
        %v655 = vsel %vm649, %v653, %v654
        %v656 = vrot.slane %v589, 2
        %v657 = vrot.slane %v591, 2
        %v658 = vsel %vm649, %v656, %v657
        %v659 = vrot.slane %v590, 2
        %v660 = vrot.slane %v592, 2
        %v661 = vsel %vm649, %v659, %v660
        %v662 = vrot.slane %v593, 2
        %v663 = vrot.slane %v595, 2
        %v664 = vsel %vm649, %v662, %v663
        %v665 = vrot.slane %v594, 2
        %v666 = vrot.slane %v596, 2
        %v667 = vsel %vm649, %v665, %v666
        %v668 = vrot.slane %v597, 2
        %v669 = vrot.slane %v599, 2
        %v670 = vsel %vm649, %v668, %v669
        %v671 = vrot.slane %v598, 2
        %v672 = vrot.slane %v600, 2
        %v673 = vsel %vm649, %v671, %v672
        %v674 = vrot.slane %v601, 2
        %v675 = vrot.slane %v603, 2
        %v676 = vsel %vm649, %v674, %v675
        %v677 = vrot.slane %v602, 2
        %v678 = vrot.slane %v604, 2
        %v679 = vsel %vm649, %v677, %v678
        %v680 = vrot.slane %v605, 2
        %v681 = vrot.slane %v607, 2
        %v682 = vsel %vm649, %v680, %v681
        %v683 = vrot.slane %v606, 2
        %v684 = vrot.slane %v608, 2
        %v685 = vsel %vm649, %v683, %v684
        %v686 = vrot.slane %v609, 2
        %v687 = vrot.slane %v611, 2
        %v688 = vsel %vm649, %v686, %v687
        %v689 = vrot.slane %v610, 2
        %v690 = vrot.slane %v612, 2
        %v691 = vsel %vm649, %v689, %v690
        %v692 = vrot.slane %v613, 2
        %v693 = vrot.slane %v615, 2
        %v694 = vsel %vm649, %v692, %v693
        %v695 = vrot.slane %v614, 2
        %v696 = vrot.slane %v616, 2
        %v697 = vsel %vm649, %v695, %v696
        %v714 = vadd.f32 %v535, %v652
        %v715 = vadd.f32 %v536, %v655
        %v716 = vadd.f32 %v537, %v658
        %v717 = vadd.f32 %v538, %v661
        %v718 = vadd.f32 %v539, %v664
        %v719 = vadd.f32 %v540, %v667
        %v720 = vadd.f32 %v541, %v670
        %v721 = vadd.f32 %v542, %v673
        %v722 = vadd.f32 %v543, %v676
        %v723 = vadd.f32 %v544, %v679
        %v724 = vadd.f32 %v545, %v682
        %v725 = vadd.f32 %v546, %v685
        %v726 = vadd.f32 %v547, %v688
        %v727 = vadd.f32 %v548, %v691
        %v728 = vadd.f32 %v549, %v694
        %v729 = vadd.f32 %v550, %v697
        %v730 = vld [vmem:[%s300] sm:$0xff]
        %v731 = vld [vmem:[%s300 + $0x8] sm:$0xff]
        %v732 = vld [vmem:[%s300 + $0x20] sm:$0xff]
        %v733 = vld [vmem:[%s300 + $0x28] sm:$0xff]
        %v734 = vld [vmem:[%s300 + $0x40] sm:$0xff]
        %v735 = vld [vmem:[%s300 + $0x48] sm:$0xff]
        %v736 = vld [vmem:[%s300 + $0x60] sm:$0xff]
        %v737 = vld [vmem:[%s300 + $0x68] sm:$0xff]
        %v738 = vld [vmem:[%s300 + $0x80] sm:$0xff]
        %v739 = vld [vmem:[%s300 + $0x88] sm:$0xff]
        %v740 = vld [vmem:[%s300 + $0xa0] sm:$0xff]
        %v741 = vld [vmem:[%s300 + $0xa8] sm:$0xff]
        %v742 = vld [vmem:[%s300 + $0xc0] sm:$0xff]
        %v743 = vld [vmem:[%s300 + $0xc8] sm:$0xff]
        %v744 = vld [vmem:[%s300 + $0xe0] sm:$0xff]
        %v745 = vld [vmem:[%s300 + $0xe8] sm:$0xff]
        %v746 = vperm.slane %v333, 3
        %v747 = vperm.slane %v334, 3
        %v748 = vmul.f32 %v730, %v746
        %v749 = vmul.f32 %v731, %v747
        %v750 = vmul.f32 %v732, %v746
        %v751 = vmul.f32 %v733, %v747
        %v752 = vmul.f32 %v734, %v746
        %v753 = vmul.f32 %v735, %v747
        %v754 = vmul.f32 %v736, %v746
        %v755 = vmul.f32 %v737, %v747
        %v756 = vmul.f32 %v738, %v746
        %v757 = vmul.f32 %v739, %v747
        %v758 = vmul.f32 %v740, %v746
        %v759 = vmul.f32 %v741, %v747
        %v760 = vmul.f32 %v742, %v746
        %v761 = vmul.f32 %v743, %v747
        %v762 = vmul.f32 %v744, %v746
        %v763 = vmul.f32 %v745, %v747
        %v764 = vadd.f32 %v714, %v748
        %v765 = vadd.f32 %v715, %v749
        %v766 = vadd.f32 %v716, %v750
        %v767 = vadd.f32 %v717, %v751
        %v768 = vadd.f32 %v718, %v752
        %v769 = vadd.f32 %v719, %v753
        %v770 = vadd.f32 %v720, %v754
        %v771 = vadd.f32 %v721, %v755
        %v772 = vadd.f32 %v722, %v756
        %v773 = vadd.f32 %v723, %v757
        %v774 = vadd.f32 %v724, %v758
        %v775 = vadd.f32 %v725, %v759
        %v776 = vadd.f32 %v726, %v760
        %v777 = vadd.f32 %v727, %v761
        %v778 = vadd.f32 %v728, %v762
        %v779 = vadd.f32 %v729, %v763
        %v780 = vld [vmem:[%s300] sm:$0xfe]
        %v781 = vld [vmem:[%s300 + $0x8] sm:$0xfe]
        %v782 = vld [vmem:[%s300 + $0x10] sm:$0x1]
        %v783 = vld [vmem:[%s300 + $0x18] sm:$0x1]
        %v784 = vld [vmem:[%s300 + $0x20] sm:$0xfe]
        %v785 = vld [vmem:[%s300 + $0x28] sm:$0xfe]
        %v786 = vld [vmem:[%s300 + $0x30] sm:$0x1]
        %v787 = vld [vmem:[%s300 + $0x38] sm:$0x1]
        %v788 = vld [vmem:[%s300 + $0x40] sm:$0xfe]
        %v789 = vld [vmem:[%s300 + $0x48] sm:$0xfe]
        %v790 = vld [vmem:[%s300 + $0x50] sm:$0x1]
        %v791 = vld [vmem:[%s300 + $0x58] sm:$0x1]
        %v792 = vld [vmem:[%s300 + $0x60] sm:$0xfe]
        %v793 = vld [vmem:[%s300 + $0x68] sm:$0xfe]
        %v794 = vld [vmem:[%s300 + $0x70] sm:$0x1]
        %v795 = vld [vmem:[%s300 + $0x78] sm:$0x1]
        %v796 = vld [vmem:[%s300 + $0x80] sm:$0xfe]
        %v797 = vld [vmem:[%s300 + $0x88] sm:$0xfe]
        %v798 = vld [vmem:[%s300 + $0x90] sm:$0x1]
        %v799 = vld [vmem:[%s300 + $0x98] sm:$0x1]
        %v800 = vld [vmem:[%s300 + $0xa0] sm:$0xfe]
        %v801 = vld [vmem:[%s300 + $0xa8] sm:$0xfe]
        %v802 = vld [vmem:[%s300 + $0xb0] sm:$0x1]
        %v803 = vld [vmem:[%s300 + $0xb8] sm:$0x1]
        %v804 = vld [vmem:[%s300 + $0xc0] sm:$0xfe]
        %v805 = vld [vmem:[%s300 + $0xc8] sm:$0xfe]
        %v806 = vld [vmem:[%s300 + $0xd0] sm:$0x1]
        %v807 = vld [vmem:[%s300 + $0xd8] sm:$0x1]
        %v808 = vld [vmem:[%s300 + $0xe0] sm:$0xfe]
        %v809 = vld [vmem:[%s300 + $0xe8] sm:$0xfe]
        %v810 = vld [vmem:[%s300 + $0xf0] sm:$0x1]
        %v811 = vld [vmem:[%s300 + $0xf8] sm:$0x1]
        %v812 = vperm.slane %v333, 4
        %v813 = vperm.slane %v334, 4
        %v814 = vmul.f32 %v780, %v812
        %v815 = vmul.f32 %v781, %v813
        %v816 = vmul.f32 %v782, %v812
        %v817 = vmul.f32 %v783, %v813
        %v818 = vmul.f32 %v784, %v812
        %v819 = vmul.f32 %v785, %v813
        %v820 = vmul.f32 %v786, %v812
        %v821 = vmul.f32 %v787, %v813
        %v822 = vmul.f32 %v788, %v812
        %v823 = vmul.f32 %v789, %v813
        %v824 = vmul.f32 %v790, %v812
        %v825 = vmul.f32 %v791, %v813
        %v826 = vmul.f32 %v792, %v812
        %v827 = vmul.f32 %v793, %v813
        %v828 = vmul.f32 %v794, %v812
        %v829 = vmul.f32 %v795, %v813
        %v830 = vmul.f32 %v796, %v812
        %v831 = vmul.f32 %v797, %v813
        %v832 = vmul.f32 %v798, %v812
        %v833 = vmul.f32 %v799, %v813
        %v834 = vmul.f32 %v800, %v812
        %v835 = vmul.f32 %v801, %v813
        %v836 = vmul.f32 %v802, %v812
        %v837 = vmul.f32 %v803, %v813
        %v838 = vmul.f32 %v804, %v812
        %v839 = vmul.f32 %v805, %v813
        %v840 = vmul.f32 %v806, %v812
        %v841 = vmul.f32 %v807, %v813
        %v842 = vmul.f32 %v808, %v812
        %v843 = vmul.f32 %v809, %v813
        %v844 = vmul.f32 %v810, %v812
        %v845 = vmul.f32 %v811, %v813
        %v878 = vrot.slane %v814, 1
        %v879 = vrot.slane %v816, 1
        %v880 = vsel %vm470, %v878, %v879
        %v881 = vrot.slane %v815, 1
        %v882 = vrot.slane %v817, 1
        %v883 = vsel %vm470, %v881, %v882
        %v884 = vrot.slane %v818, 1
        %v885 = vrot.slane %v820, 1
        %v886 = vsel %vm470, %v884, %v885
        %v887 = vrot.slane %v819, 1
        %v888 = vrot.slane %v821, 1
        %v889 = vsel %vm470, %v887, %v888
        %v890 = vrot.slane %v822, 1
        %v891 = vrot.slane %v824, 1
        %v892 = vsel %vm470, %v890, %v891
        %v893 = vrot.slane %v823, 1
        %v894 = vrot.slane %v825, 1
        %v895 = vsel %vm470, %v893, %v894
        %v896 = vrot.slane %v826, 1
        %v897 = vrot.slane %v828, 1
        %v898 = vsel %vm470, %v896, %v897
        %v899 = vrot.slane %v827, 1
        %v900 = vrot.slane %v829, 1
        %v901 = vsel %vm470, %v899, %v900
        %v902 = vrot.slane %v830, 1
        %v903 = vrot.slane %v832, 1
        %v904 = vsel %vm470, %v902, %v903
        %v905 = vrot.slane %v831, 1
        %v906 = vrot.slane %v833, 1
        %v907 = vsel %vm470, %v905, %v906
        %v908 = vrot.slane %v834, 1
        %v909 = vrot.slane %v836, 1
        %v910 = vsel %vm470, %v908, %v909
        %v911 = vrot.slane %v835, 1
        %v912 = vrot.slane %v837, 1
        %v913 = vsel %vm470, %v911, %v912
        %v914 = vrot.slane %v838, 1
        %v915 = vrot.slane %v840, 1
        %v916 = vsel %vm470, %v914, %v915
        %v917 = vrot.slane %v839, 1
        %v918 = vrot.slane %v841, 1
        %v919 = vsel %vm470, %v917, %v918
        %v920 = vrot.slane %v842, 1
        %v921 = vrot.slane %v844, 1
        %v922 = vsel %vm470, %v920, %v921
        %v923 = vrot.slane %v843, 1
        %v924 = vrot.slane %v845, 1
        %v925 = vsel %vm470, %v923, %v924
        %v942 = vadd.f32 %v764, %v880
        %v943 = vadd.f32 %v765, %v883
        %v944 = vadd.f32 %v766, %v886
        %v945 = vadd.f32 %v767, %v889
        %v946 = vadd.f32 %v768, %v892
        %v947 = vadd.f32 %v769, %v895
        %v948 = vadd.f32 %v770, %v898
        %v949 = vadd.f32 %v771, %v901
        %v950 = vadd.f32 %v772, %v904
        %v951 = vadd.f32 %v773, %v907
        %v952 = vadd.f32 %v774, %v910
        %v953 = vadd.f32 %v775, %v913
        %v954 = vadd.f32 %v776, %v916
        %v955 = vadd.f32 %v777, %v919
        %v956 = vadd.f32 %v778, %v922
        %v957 = vadd.f32 %v779, %v925
        %v958 = vld [vmem:[%s300] sm:$0xfc]
        %v959 = vld [vmem:[%s300 + $0x8] sm:$0xfc]
        %v960 = vld [vmem:[%s300 + $0x10] sm:$0x3]
        %v961 = vld [vmem:[%s300 + $0x18] sm:$0x3]
        %v962 = vld [vmem:[%s300 + $0x20] sm:$0xfc]
        %v963 = vld [vmem:[%s300 + $0x28] sm:$0xfc]
        %v964 = vld [vmem:[%s300 + $0x30] sm:$0x3]
        %v965 = vld [vmem:[%s300 + $0x38] sm:$0x3]
        %v966 = vld [vmem:[%s300 + $0x40] sm:$0xfc]
        %v967 = vld [vmem:[%s300 + $0x48] sm:$0xfc]
        %v968 = vld [vmem:[%s300 + $0x50] sm:$0x3]
        %v969 = vld [vmem:[%s300 + $0x58] sm:$0x3]
        %v970 = vld [vmem:[%s300 + $0x60] sm:$0xfc]
        %v971 = vld [vmem:[%s300 + $0x68] sm:$0xfc]
        %v972 = vld [vmem:[%s300 + $0x70] sm:$0x3]
        %v973 = vld [vmem:[%s300 + $0x78] sm:$0x3]
        %v974 = vld [vmem:[%s300 + $0x80] sm:$0xfc]
        %v975 = vld [vmem:[%s300 + $0x88] sm:$0xfc]
        %v976 = vld [vmem:[%s300 + $0x90] sm:$0x3]
        %v977 = vld [vmem:[%s300 + $0x98] sm:$0x3]
        %v978 = vld [vmem:[%s300 + $0xa0] sm:$0xfc]
        %v979 = vld [vmem:[%s300 + $0xa8] sm:$0xfc]
        %v980 = vld [vmem:[%s300 + $0xb0] sm:$0x3]
        %v981 = vld [vmem:[%s300 + $0xb8] sm:$0x3]
        %v982 = vld [vmem:[%s300 + $0xc0] sm:$0xfc]
        %v983 = vld [vmem:[%s300 + $0xc8] sm:$0xfc]
        %v984 = vld [vmem:[%s300 + $0xd0] sm:$0x3]
        %v985 = vld [vmem:[%s300 + $0xd8] sm:$0x3]
        %v986 = vld [vmem:[%s300 + $0xe0] sm:$0xfc]
        %v987 = vld [vmem:[%s300 + $0xe8] sm:$0xfc]
        %v988 = vld [vmem:[%s300 + $0xf0] sm:$0x3]
        %v989 = vld [vmem:[%s300 + $0xf8] sm:$0x3]
        %v990 = vperm.slane %v333, 5
        %v991 = vperm.slane %v334, 5
        %v992 = vmul.f32 %v958, %v990
        %v993 = vmul.f32 %v959, %v991
        %v994 = vmul.f32 %v960, %v990
        %v995 = vmul.f32 %v961, %v991
        %v996 = vmul.f32 %v962, %v990
        %v997 = vmul.f32 %v963, %v991
        %v998 = vmul.f32 %v964, %v990
        %v999 = vmul.f32 %v965, %v991
        %v1000 = vmul.f32 %v966, %v990
        %v1001 = vmul.f32 %v967, %v991
        %v1002 = vmul.f32 %v968, %v990
        %v1003 = vmul.f32 %v969, %v991
        %v1004 = vmul.f32 %v970, %v990
        %v1005 = vmul.f32 %v971, %v991
        %v1006 = vmul.f32 %v972, %v990
        %v1007 = vmul.f32 %v973, %v991
        %v1008 = vmul.f32 %v974, %v990
        %v1009 = vmul.f32 %v975, %v991
        %v1010 = vmul.f32 %v976, %v990
        %v1011 = vmul.f32 %v977, %v991
        %v1012 = vmul.f32 %v978, %v990
        %v1013 = vmul.f32 %v979, %v991
        %v1014 = vmul.f32 %v980, %v990
        %v1015 = vmul.f32 %v981, %v991
        %v1016 = vmul.f32 %v982, %v990
        %v1017 = vmul.f32 %v983, %v991
        %v1018 = vmul.f32 %v984, %v990
        %v1019 = vmul.f32 %v985, %v991
        %v1020 = vmul.f32 %v986, %v990
        %v1021 = vmul.f32 %v987, %v991
        %v1022 = vmul.f32 %v988, %v990
        %v1023 = vmul.f32 %v989, %v991
        %v1056 = vrot.slane %v992, 2
        %v1057 = vrot.slane %v994, 2
        %v1058 = vsel %vm649, %v1056, %v1057
        %v1059 = vrot.slane %v993, 2
        %v1060 = vrot.slane %v995, 2
        %v1061 = vsel %vm649, %v1059, %v1060
        %v1062 = vrot.slane %v996, 2
        %v1063 = vrot.slane %v998, 2
        %v1064 = vsel %vm649, %v1062, %v1063
        %v1065 = vrot.slane %v997, 2
        %v1066 = vrot.slane %v999, 2
        %v1067 = vsel %vm649, %v1065, %v1066
        %v1068 = vrot.slane %v1000, 2
        %v1069 = vrot.slane %v1002, 2
        %v1070 = vsel %vm649, %v1068, %v1069
        %v1071 = vrot.slane %v1001, 2
        %v1072 = vrot.slane %v1003, 2
        %v1073 = vsel %vm649, %v1071, %v1072
        %v1074 = vrot.slane %v1004, 2
        %v1075 = vrot.slane %v1006, 2
        %v1076 = vsel %vm649, %v1074, %v1075
        %v1077 = vrot.slane %v1005, 2
        %v1078 = vrot.slane %v1007, 2
        %v1079 = vsel %vm649, %v1077, %v1078
        %v1080 = vrot.slane %v1008, 2
        %v1081 = vrot.slane %v1010, 2
        %v1082 = vsel %vm649, %v1080, %v1081
        %v1083 = vrot.slane %v1009, 2
        %v1084 = vrot.slane %v1011, 2
        %v1085 = vsel %vm649, %v1083, %v1084
        %v1086 = vrot.slane %v1012, 2
        %v1087 = vrot.slane %v1014, 2
        %v1088 = vsel %vm649, %v1086, %v1087
        %v1089 = vrot.slane %v1013, 2
        %v1090 = vrot.slane %v1015, 2
        %v1091 = vsel %vm649, %v1089, %v1090
        %v1092 = vrot.slane %v1016, 2
        %v1093 = vrot.slane %v1018, 2
        %v1094 = vsel %vm649, %v1092, %v1093
        %v1095 = vrot.slane %v1017, 2
        %v1096 = vrot.slane %v1019, 2
        %v1097 = vsel %vm649, %v1095, %v1096
        %v1098 = vrot.slane %v1020, 2
        %v1099 = vrot.slane %v1022, 2
        %v1100 = vsel %vm649, %v1098, %v1099
        %v1101 = vrot.slane %v1021, 2
        %v1102 = vrot.slane %v1023, 2
        %v1103 = vsel %vm649, %v1101, %v1102
        %v1120 = vadd.f32 %v942, %v1058
        %v1121 = vadd.f32 %v943, %v1061
        %v1122 = vadd.f32 %v944, %v1064
        %v1123 = vadd.f32 %v945, %v1067
        %v1124 = vadd.f32 %v946, %v1070
        %v1125 = vadd.f32 %v947, %v1073
        %v1126 = vadd.f32 %v948, %v1076
        %v1127 = vadd.f32 %v949, %v1079
        %v1128 = vadd.f32 %v950, %v1082
        %v1129 = vadd.f32 %v951, %v1085
        %v1130 = vadd.f32 %v952, %v1088
        %v1131 = vadd.f32 %v953, %v1091
        %v1132 = vadd.f32 %v954, %v1094
        %v1133 = vadd.f32 %v955, %v1097
        %v1134 = vadd.f32 %v956, %v1100
        %v1135 = vadd.f32 %v957, %v1103
        %s1136 = scalar_lea.vmem [#allocation2], 64
        %v1137 = vld [vmem:[%s1136] sm:$0xff]
        %v1138 = vld [vmem:[%s1136 + $0x8] sm:$0xff]
        %v1139 = vld [vmem:[%s1136 + $0x20] sm:$0xff]
        %v1140 = vld [vmem:[%s1136 + $0x28] sm:$0xff]
        %v1141 = vld [vmem:[%s1136 + $0x40] sm:$0xff]
        %v1142 = vld [vmem:[%s1136 + $0x48] sm:$0xff]
        %v1143 = vld [vmem:[%s1136 + $0x60] sm:$0xff]
        %v1144 = vld [vmem:[%s1136 + $0x68] sm:$0xff]
        %v1145 = vld [vmem:[%s1136 + $0x80] sm:$0xff]
        %v1146 = vld [vmem:[%s1136 + $0x88] sm:$0xff]
        %v1147 = vld [vmem:[%s1136 + $0xa0] sm:$0xff]
        %v1148 = vld [vmem:[%s1136 + $0xa8] sm:$0xff]
        %v1149 = vld [vmem:[%s1136 + $0xc0] sm:$0xff]
        %v1150 = vld [vmem:[%s1136 + $0xc8] sm:$0xff]
        %v1151 = vld [vmem:[%s1136 + $0xe0] sm:$0xff]
        %v1152 = vld [vmem:[%s1136 + $0xe8] sm:$0xff]
        %v1153 = vperm.slane %v333, 6
        %v1154 = vperm.slane %v334, 6
        %v1155 = vmul.f32 %v1137, %v1153
        %v1156 = vmul.f32 %v1138, %v1154
        %v1157 = vmul.f32 %v1139, %v1153
        %v1158 = vmul.f32 %v1140, %v1154
        %v1159 = vmul.f32 %v1141, %v1153
        %v1160 = vmul.f32 %v1142, %v1154
        %v1161 = vmul.f32 %v1143, %v1153
        %v1162 = vmul.f32 %v1144, %v1154
        %v1163 = vmul.f32 %v1145, %v1153
        %v1164 = vmul.f32 %v1146, %v1154
        %v1165 = vmul.f32 %v1147, %v1153
        %v1166 = vmul.f32 %v1148, %v1154
        %v1167 = vmul.f32 %v1149, %v1153
        %v1168 = vmul.f32 %v1150, %v1154
        %v1169 = vmul.f32 %v1151, %v1153
        %v1170 = vmul.f32 %v1152, %v1154
        %v1171 = vadd.f32 %v1120, %v1155
        %v1172 = vadd.f32 %v1121, %v1156
        %v1173 = vadd.f32 %v1122, %v1157
        %v1174 = vadd.f32 %v1123, %v1158
        %v1175 = vadd.f32 %v1124, %v1159
        %v1176 = vadd.f32 %v1125, %v1160
        %v1177 = vadd.f32 %v1126, %v1161
        %v1178 = vadd.f32 %v1127, %v1162
        %v1179 = vadd.f32 %v1128, %v1163
        %v1180 = vadd.f32 %v1129, %v1164
        %v1181 = vadd.f32 %v1130, %v1165
        %v1182 = vadd.f32 %v1131, %v1166
        %v1183 = vadd.f32 %v1132, %v1167
        %v1184 = vadd.f32 %v1133, %v1168
        %v1185 = vadd.f32 %v1134, %v1169
        %v1186 = vadd.f32 %v1135, %v1170
        %v1187 = vld [vmem:[%s1136] sm:$0xfe]
        %v1188 = vld [vmem:[%s1136 + $0x8] sm:$0xfe]
        %v1189 = vld [vmem:[%s1136 + $0x10] sm:$0x1]
        %v1190 = vld [vmem:[%s1136 + $0x18] sm:$0x1]
        %v1191 = vld [vmem:[%s1136 + $0x20] sm:$0xfe]
        %v1192 = vld [vmem:[%s1136 + $0x28] sm:$0xfe]
        %v1193 = vld [vmem:[%s1136 + $0x30] sm:$0x1]
        %v1194 = vld [vmem:[%s1136 + $0x38] sm:$0x1]
        %v1195 = vld [vmem:[%s1136 + $0x40] sm:$0xfe]
        %v1196 = vld [vmem:[%s1136 + $0x48] sm:$0xfe]
        %v1197 = vld [vmem:[%s1136 + $0x50] sm:$0x1]
        %v1198 = vld [vmem:[%s1136 + $0x58] sm:$0x1]
        %v1199 = vld [vmem:[%s1136 + $0x60] sm:$0xfe]
        %v1200 = vld [vmem:[%s1136 + $0x68] sm:$0xfe]
        %v1201 = vld [vmem:[%s1136 + $0x70] sm:$0x1]
        %v1202 = vld [vmem:[%s1136 + $0x78] sm:$0x1]
        %v1203 = vld [vmem:[%s1136 + $0x80] sm:$0xfe]
        %v1204 = vld [vmem:[%s1136 + $0x88] sm:$0xfe]
        %v1205 = vld [vmem:[%s1136 + $0x90] sm:$0x1]
        %v1206 = vld [vmem:[%s1136 + $0x98] sm:$0x1]
        %v1207 = vld [vmem:[%s1136 + $0xa0] sm:$0xfe]
        %v1208 = vld [vmem:[%s1136 + $0xa8] sm:$0xfe]
        %v1209 = vld [vmem:[%s1136 + $0xb0] sm:$0x1]
        %v1210 = vld [vmem:[%s1136 + $0xb8] sm:$0x1]
        %v1211 = vld [vmem:[%s1136 + $0xc0] sm:$0xfe]
        %v1212 = vld [vmem:[%s1136 + $0xc8] sm:$0xfe]
        %v1213 = vld [vmem:[%s1136 + $0xd0] sm:$0x1]
        %v1214 = vld [vmem:[%s1136 + $0xd8] sm:$0x1]
        %v1215 = vld [vmem:[%s1136 + $0xe0] sm:$0xfe]
        %v1216 = vld [vmem:[%s1136 + $0xe8] sm:$0xfe]
        %v1217 = vld [vmem:[%s1136 + $0xf0] sm:$0x1]
        %v1218 = vld [vmem:[%s1136 + $0xf8] sm:$0x1]
        %v1219 = vperm.slane %v333, 7
        %v1220 = vperm.slane %v334, 7
        %v1221 = vmul.f32 %v1187, %v1219
        %v1222 = vmul.f32 %v1188, %v1220
        %v1223 = vmul.f32 %v1189, %v1219
        %v1224 = vmul.f32 %v1190, %v1220
        %v1225 = vmul.f32 %v1191, %v1219
        %v1226 = vmul.f32 %v1192, %v1220
        %v1227 = vmul.f32 %v1193, %v1219
        %v1228 = vmul.f32 %v1194, %v1220
        %v1229 = vmul.f32 %v1195, %v1219
        %v1230 = vmul.f32 %v1196, %v1220
        %v1231 = vmul.f32 %v1197, %v1219
        %v1232 = vmul.f32 %v1198, %v1220
        %v1233 = vmul.f32 %v1199, %v1219
        %v1234 = vmul.f32 %v1200, %v1220
        %v1235 = vmul.f32 %v1201, %v1219
        %v1236 = vmul.f32 %v1202, %v1220
        %v1237 = vmul.f32 %v1203, %v1219
        %v1238 = vmul.f32 %v1204, %v1220
        %v1239 = vmul.f32 %v1205, %v1219
        %v1240 = vmul.f32 %v1206, %v1220
        %v1241 = vmul.f32 %v1207, %v1219
        %v1242 = vmul.f32 %v1208, %v1220
        %v1243 = vmul.f32 %v1209, %v1219
        %v1244 = vmul.f32 %v1210, %v1220
        %v1245 = vmul.f32 %v1211, %v1219
        %v1246 = vmul.f32 %v1212, %v1220
        %v1247 = vmul.f32 %v1213, %v1219
        %v1248 = vmul.f32 %v1214, %v1220
        %v1249 = vmul.f32 %v1215, %v1219
        %v1250 = vmul.f32 %v1216, %v1220
        %v1251 = vmul.f32 %v1217, %v1219
        %v1252 = vmul.f32 %v1218, %v1220
        %v1285 = vrot.slane %v1221, 1
        %v1286 = vrot.slane %v1223, 1
        %v1287 = vsel %vm470, %v1285, %v1286
        %v1288 = vrot.slane %v1222, 1
        %v1289 = vrot.slane %v1224, 1
        %v1290 = vsel %vm470, %v1288, %v1289
        %v1291 = vrot.slane %v1225, 1
        %v1292 = vrot.slane %v1227, 1
        %v1293 = vsel %vm470, %v1291, %v1292
        %v1294 = vrot.slane %v1226, 1
        %v1295 = vrot.slane %v1228, 1
        %v1296 = vsel %vm470, %v1294, %v1295
        %v1297 = vrot.slane %v1229, 1
        %v1298 = vrot.slane %v1231, 1
        %v1299 = vsel %vm470, %v1297, %v1298
        %v1300 = vrot.slane %v1230, 1
        %v1301 = vrot.slane %v1232, 1
        %v1302 = vsel %vm470, %v1300, %v1301
        %v1303 = vrot.slane %v1233, 1
        %v1304 = vrot.slane %v1235, 1
        %v1305 = vsel %vm470, %v1303, %v1304
        %v1306 = vrot.slane %v1234, 1
        %v1307 = vrot.slane %v1236, 1
        %v1308 = vsel %vm470, %v1306, %v1307
        %v1309 = vrot.slane %v1237, 1
        %v1310 = vrot.slane %v1239, 1
        %v1311 = vsel %vm470, %v1309, %v1310
        %v1312 = vrot.slane %v1238, 1
        %v1313 = vrot.slane %v1240, 1
        %v1314 = vsel %vm470, %v1312, %v1313
        %v1315 = vrot.slane %v1241, 1
        %v1316 = vrot.slane %v1243, 1
        %v1317 = vsel %vm470, %v1315, %v1316
        %v1318 = vrot.slane %v1242, 1
        %v1319 = vrot.slane %v1244, 1
        %v1320 = vsel %vm470, %v1318, %v1319
        %v1321 = vrot.slane %v1245, 1
        %v1322 = vrot.slane %v1247, 1
        %v1323 = vsel %vm470, %v1321, %v1322
        %v1324 = vrot.slane %v1246, 1
        %v1325 = vrot.slane %v1248, 1
        %v1326 = vsel %vm470, %v1324, %v1325
        %v1327 = vrot.slane %v1249, 1
        %v1328 = vrot.slane %v1251, 1
        %v1329 = vsel %vm470, %v1327, %v1328
        %v1330 = vrot.slane %v1250, 1
        %v1331 = vrot.slane %v1252, 1
        %v1332 = vsel %vm470, %v1330, %v1331
        %v1349 = vadd.f32 %v1171, %v1287
        %v1350 = vadd.f32 %v1172, %v1290
        %v1351 = vadd.f32 %v1173, %v1293
        %v1352 = vadd.f32 %v1174, %v1296
        %v1353 = vadd.f32 %v1175, %v1299
        %v1354 = vadd.f32 %v1176, %v1302
        %v1355 = vadd.f32 %v1177, %v1305
        %v1356 = vadd.f32 %v1178, %v1308
        %v1357 = vadd.f32 %v1179, %v1311
        %v1358 = vadd.f32 %v1180, %v1314
        %v1359 = vadd.f32 %v1181, %v1317
        %v1360 = vadd.f32 %v1182, %v1320
        %v1361 = vadd.f32 %v1183, %v1323
        %v1362 = vadd.f32 %v1184, %v1326
        %v1363 = vadd.f32 %v1185, %v1329
        %v1364 = vadd.f32 %v1186, %v1332
        %v1365 = vld [vmem:[%s1136] sm:$0xfc]
        %v1366 = vld [vmem:[%s1136 + $0x8] sm:$0xfc]
        %v1367 = vld [vmem:[%s1136 + $0x10] sm:$0x3]
        %v1368 = vld [vmem:[%s1136 + $0x18] sm:$0x3]
        %v1369 = vld [vmem:[%s1136 + $0x20] sm:$0xfc]
        %v1370 = vld [vmem:[%s1136 + $0x28] sm:$0xfc]
        %v1371 = vld [vmem:[%s1136 + $0x30] sm:$0x3]
        %v1372 = vld [vmem:[%s1136 + $0x38] sm:$0x3]
        %v1373 = vld [vmem:[%s1136 + $0x40] sm:$0xfc]
        %v1374 = vld [vmem:[%s1136 + $0x48] sm:$0xfc]
        %v1375 = vld [vmem:[%s1136 + $0x50] sm:$0x3]
        %v1376 = vld [vmem:[%s1136 + $0x58] sm:$0x3]
        %v1377 = vld [vmem:[%s1136 + $0x60] sm:$0xfc]
        %v1378 = vld [vmem:[%s1136 + $0x68] sm:$0xfc]
        %v1379 = vld [vmem:[%s1136 + $0x70] sm:$0x3]
        %v1380 = vld [vmem:[%s1136 + $0x78] sm:$0x3]
        %v1381 = vld [vmem:[%s1136 + $0x80] sm:$0xfc]
        %v1382 = vld [vmem:[%s1136 + $0x88] sm:$0xfc]
        %v1383 = vld [vmem:[%s1136 + $0x90] sm:$0x3]
        %v1384 = vld [vmem:[%s1136 + $0x98] sm:$0x3]
        %v1385 = vld [vmem:[%s1136 + $0xa0] sm:$0xfc]
        %v1386 = vld [vmem:[%s1136 + $0xa8] sm:$0xfc]
        %v1387 = vld [vmem:[%s1136 + $0xb0] sm:$0x3]
        %v1388 = vld [vmem:[%s1136 + $0xb8] sm:$0x3]
        %v1389 = vld [vmem:[%s1136 + $0xc0] sm:$0xfc]
        %v1390 = vld [vmem:[%s1136 + $0xc8] sm:$0xfc]
        %v1391 = vld [vmem:[%s1136 + $0xd0] sm:$0x3]
        %v1392 = vld [vmem:[%s1136 + $0xd8] sm:$0x3]
        %v1393 = vld [vmem:[%s1136 + $0xe0] sm:$0xfc]
        %v1394 = vld [vmem:[%s1136 + $0xe8] sm:$0xfc]
        %v1395 = vld [vmem:[%s1136 + $0xf0] sm:$0x3]
        %v1396 = vld [vmem:[%s1136 + $0xf8] sm:$0x3]
        %v1397 = vperm.slane %v335, 0
        %v1398 = vperm.slane %v336, 0
        %v1399 = vmul.f32 %v1365, %v1397
        %v1400 = vmul.f32 %v1366, %v1398
        %v1401 = vmul.f32 %v1367, %v1397
        %v1402 = vmul.f32 %v1368, %v1398
        %v1403 = vmul.f32 %v1369, %v1397
        %v1404 = vmul.f32 %v1370, %v1398
        %v1405 = vmul.f32 %v1371, %v1397
        %v1406 = vmul.f32 %v1372, %v1398
        %v1407 = vmul.f32 %v1373, %v1397
        %v1408 = vmul.f32 %v1374, %v1398
        %v1409 = vmul.f32 %v1375, %v1397
        %v1410 = vmul.f32 %v1376, %v1398
        %v1411 = vmul.f32 %v1377, %v1397
        %v1412 = vmul.f32 %v1378, %v1398
        %v1413 = vmul.f32 %v1379, %v1397
        %v1414 = vmul.f32 %v1380, %v1398
        %v1415 = vmul.f32 %v1381, %v1397
        %v1416 = vmul.f32 %v1382, %v1398
        %v1417 = vmul.f32 %v1383, %v1397
        %v1418 = vmul.f32 %v1384, %v1398
        %v1419 = vmul.f32 %v1385, %v1397
        %v1420 = vmul.f32 %v1386, %v1398
        %v1421 = vmul.f32 %v1387, %v1397
        %v1422 = vmul.f32 %v1388, %v1398
        %v1423 = vmul.f32 %v1389, %v1397
        %v1424 = vmul.f32 %v1390, %v1398
        %v1425 = vmul.f32 %v1391, %v1397
        %v1426 = vmul.f32 %v1392, %v1398
        %v1427 = vmul.f32 %v1393, %v1397
        %v1428 = vmul.f32 %v1394, %v1398
        %v1429 = vmul.f32 %v1395, %v1397
        %v1430 = vmul.f32 %v1396, %v1398
        %v1463 = vrot.slane %v1399, 2
        %v1464 = vrot.slane %v1401, 2
        %v1465 = vsel %vm649, %v1463, %v1464
        %v1466 = vrot.slane %v1400, 2
        %v1467 = vrot.slane %v1402, 2
        %v1468 = vsel %vm649, %v1466, %v1467
        %v1469 = vrot.slane %v1403, 2
        %v1470 = vrot.slane %v1405, 2
        %v1471 = vsel %vm649, %v1469, %v1470
        %v1472 = vrot.slane %v1404, 2
        %v1473 = vrot.slane %v1406, 2
        %v1474 = vsel %vm649, %v1472, %v1473
        %v1475 = vrot.slane %v1407, 2
        %v1476 = vrot.slane %v1409, 2
        %v1477 = vsel %vm649, %v1475, %v1476
        %v1478 = vrot.slane %v1408, 2
        %v1479 = vrot.slane %v1410, 2
        %v1480 = vsel %vm649, %v1478, %v1479
        %v1481 = vrot.slane %v1411, 2
        %v1482 = vrot.slane %v1413, 2
        %v1483 = vsel %vm649, %v1481, %v1482
        %v1484 = vrot.slane %v1412, 2
        %v1485 = vrot.slane %v1414, 2
        %v1486 = vsel %vm649, %v1484, %v1485
        %v1487 = vrot.slane %v1415, 2
        %v1488 = vrot.slane %v1417, 2
        %v1489 = vsel %vm649, %v1487, %v1488
        %v1490 = vrot.slane %v1416, 2
        %v1491 = vrot.slane %v1418, 2
        %v1492 = vsel %vm649, %v1490, %v1491
        %v1493 = vrot.slane %v1419, 2
        %v1494 = vrot.slane %v1421, 2
        %v1495 = vsel %vm649, %v1493, %v1494
        %v1496 = vrot.slane %v1420, 2
        %v1497 = vrot.slane %v1422, 2
        %v1498 = vsel %vm649, %v1496, %v1497
        %v1499 = vrot.slane %v1423, 2
        %v1500 = vrot.slane %v1425, 2
        %v1501 = vsel %vm649, %v1499, %v1500
        %v1502 = vrot.slane %v1424, 2
        %v1503 = vrot.slane %v1426, 2
        %v1504 = vsel %vm649, %v1502, %v1503
        %v1505 = vrot.slane %v1427, 2
        %v1506 = vrot.slane %v1429, 2
        %v1507 = vsel %vm649, %v1505, %v1506
        %v1508 = vrot.slane %v1428, 2
        %v1509 = vrot.slane %v1430, 2
        %v1510 = vsel %vm649, %v1508, %v1509
        %v1527 = vadd.f32 %v1349, %v1465
        %v1528 = vadd.f32 %v1350, %v1468
        %v1529 = vadd.f32 %v1351, %v1471
        %v1530 = vadd.f32 %v1352, %v1474
        %v1531 = vadd.f32 %v1353, %v1477
        %v1532 = vadd.f32 %v1354, %v1480
        %v1533 = vadd.f32 %v1355, %v1483
        %v1534 = vadd.f32 %v1356, %v1486
        %v1535 = vadd.f32 %v1357, %v1489
        %v1536 = vadd.f32 %v1358, %v1492
        %v1537 = vadd.f32 %v1359, %v1495
        %v1538 = vadd.f32 %v1360, %v1498
        %v1539 = vadd.f32 %v1361, %v1501
        %v1540 = vadd.f32 %v1362, %v1504
        %v1541 = vadd.f32 %v1363, %v1507
        %v1542 = vadd.f32 %v1364, %v1510
        %v1544 = vperm.slane %v337, 0
        %v1545 = vperm.slane %v337, 1
        %v1548 = vadd.f32 %v1527, %v1544
        %v1549 = vadd.f32 %v1528, %v1545
        %v1550 = vadd.f32 %v1529, %v1544
        %v1551 = vadd.f32 %v1530, %v1545
        %v1552 = vadd.f32 %v1531, %v1544
        %v1553 = vadd.f32 %v1532, %v1545
        %v1554 = vadd.f32 %v1533, %v1544
        %v1555 = vadd.f32 %v1534, %v1545
        %v1556 = vadd.f32 %v1535, %v1544
        %v1557 = vadd.f32 %v1536, %v1545
        %v1558 = vadd.f32 %v1537, %v1544
        %v1559 = vadd.f32 %v1538, %v1545
        %v1560 = vadd.f32 %v1539, %v1544
        %v1561 = vadd.f32 %v1540, %v1545
        %v1562 = vadd.f32 %v1541, %v1544
        %v1563 = vadd.f32 %v1542, %v1545
        %v1564 = vmul.f32 %v1548, 0.5
        %v1565 = vmul.f32 %v1549, 0.5
        %v1566 = vmul.f32 %v1550, 0.5
        %v1567 = vmul.f32 %v1551, 0.5
        %v1568 = vmul.f32 %v1552, 0.5
        %v1569 = vmul.f32 %v1553, 0.5
        %v1570 = vmul.f32 %v1554, 0.5
        %v1571 = vmul.f32 %v1555, 0.5
        %v1572 = vmul.f32 %v1556, 0.5
        %v1573 = vmul.f32 %v1557, 0.5
        %v1574 = vmul.f32 %v1558, 0.5
        %v1575 = vmul.f32 %v1559, 0.5
        %v1576 = vmul.f32 %v1560, 0.5
        %v1577 = vmul.f32 %v1561, 0.5
        %v1578 = vmul.f32 %v1562, 0.5
        %v1579 = vmul.f32 %v1563, 0.5
        %v1580 = vmul.f32 %v1548, 0.044715
        %v1581 = vmul.f32 %v1549, 0.044715
        %v1582 = vmul.f32 %v1550, 0.044715
        %v1583 = vmul.f32 %v1551, 0.044715
        %v1584 = vmul.f32 %v1552, 0.044715
        %v1585 = vmul.f32 %v1553, 0.044715
        %v1586 = vmul.f32 %v1554, 0.044715
        %v1587 = vmul.f32 %v1555, 0.044715
        %v1588 = vmul.f32 %v1556, 0.044715
        %v1589 = vmul.f32 %v1557, 0.044715
        %v1590 = vmul.f32 %v1558, 0.044715
        %v1591 = vmul.f32 %v1559, 0.044715
        %v1592 = vmul.f32 %v1560, 0.044715
        %v1593 = vmul.f32 %v1561, 0.044715
        %v1594 = vmul.f32 %v1562, 0.044715
        %v1595 = vmul.f32 %v1563, 0.044715
        %v1596 = vmul.f32 %v1580, %v1548
        %v1597 = vmul.f32 %v1581, %v1549
        %v1598 = vmul.f32 %v1582, %v1550
        %v1599 = vmul.f32 %v1583, %v1551
        %v1600 = vmul.f32 %v1584, %v1552
        %v1601 = vmul.f32 %v1585, %v1553
        %v1602 = vmul.f32 %v1586, %v1554
        %v1603 = vmul.f32 %v1587, %v1555
        %v1604 = vmul.f32 %v1588, %v1556
        %v1605 = vmul.f32 %v1589, %v1557
        %v1606 = vmul.f32 %v1590, %v1558
        %v1607 = vmul.f32 %v1591, %v1559
        %v1608 = vmul.f32 %v1592, %v1560
        %v1609 = vmul.f32 %v1593, %v1561
        %v1610 = vmul.f32 %v1594, %v1562
        %v1611 = vmul.f32 %v1595, %v1563
        %v1612 = vmul.f32 %v1596, %v1548
        %v1613 = vmul.f32 %v1597, %v1549
        %v1614 = vmul.f32 %v1598, %v1550
        %v1615 = vmul.f32 %v1599, %v1551
        %v1616 = vmul.f32 %v1600, %v1552
        %v1617 = vmul.f32 %v1601, %v1553
        %v1618 = vmul.f32 %v1602, %v1554
        %v1619 = vmul.f32 %v1603, %v1555
        %v1620 = vmul.f32 %v1604, %v1556
        %v1621 = vmul.f32 %v1605, %v1557
        %v1622 = vmul.f32 %v1606, %v1558
        %v1623 = vmul.f32 %v1607, %v1559
        %v1624 = vmul.f32 %v1608, %v1560
        %v1625 = vmul.f32 %v1609, %v1561
        %v1626 = vmul.f32 %v1610, %v1562
        %v1627 = vmul.f32 %v1611, %v1563
        %v1628 = vadd.f32 %v1548, %v1612
        %v1629 = vadd.f32 %v1549, %v1613
        %v1630 = vadd.f32 %v1550, %v1614
        %v1631 = vadd.f32 %v1551, %v1615
        %v1632 = vadd.f32 %v1552, %v1616
        %v1633 = vadd.f32 %v1553, %v1617
        %v1634 = vadd.f32 %v1554, %v1618
        %v1635 = vadd.f32 %v1555, %v1619
        %v1636 = vadd.f32 %v1556, %v1620
        %v1637 = vadd.f32 %v1557, %v1621
        %v1638 = vadd.f32 %v1558, %v1622
        %v1639 = vadd.f32 %v1559, %v1623
        %v1640 = vadd.f32 %v1560, %v1624
        %v1641 = vadd.f32 %v1561, %v1625
        %v1642 = vadd.f32 %v1562, %v1626
        %v1643 = vadd.f32 %v1563, %v1627
        %v1644 = vmul.f32 %v1628, 0.7978846
        %v1645 = vmul.f32 %v1629, 0.7978846
        %v1646 = vmul.f32 %v1630, 0.7978846
        %v1647 = vmul.f32 %v1631, 0.7978846
        %v1648 = vmul.f32 %v1632, 0.7978846
        %v1649 = vmul.f32 %v1633, 0.7978846
        %v1650 = vmul.f32 %v1634, 0.7978846
        %v1651 = vmul.f32 %v1635, 0.7978846
        %v1652 = vmul.f32 %v1636, 0.7978846
        %v1653 = vmul.f32 %v1637, 0.7978846
        %v1654 = vmul.f32 %v1638, 0.7978846
        %v1655 = vmul.f32 %v1639, 0.7978846
        %v1656 = vmul.f32 %v1640, 0.7978846
        %v1657 = vmul.f32 %v1641, 0.7978846
        %v1658 = vmul.f32 %v1642, 0.7978846
        %v1659 = vmul.f32 %v1643, 0.7978846
        %v1660 = vtanh.pop %v1644
        %v1661 = vtanh.pop %v1645
        %v1662 = vtanh.pop %v1646
        %v1663 = vtanh.pop %v1647
        %v1664 = vtanh.pop %v1648
        %v1665 = vtanh.pop %v1649
        %v1666 = vtanh.pop %v1650
        %v1667 = vtanh.pop %v1651
        %v1668 = vtanh.pop %v1652
        %v1669 = vtanh.pop %v1653
        %v1670 = vtanh.pop %v1654
        %v1671 = vtanh.pop %v1655
        %v1672 = vtanh.pop %v1656
        %v1673 = vtanh.pop %v1657
        %v1674 = vtanh.pop %v1658
        %v1675 = vtanh.pop %v1659
        %v1676 = vadd.f32 %v1660, 1.0
        %v1677 = vadd.f32 %v1661, 1.0
        %v1678 = vadd.f32 %v1662, 1.0
        %v1679 = vadd.f32 %v1663, 1.0
        %v1680 = vadd.f32 %v1664, 1.0
        %v1681 = vadd.f32 %v1665, 1.0
        %v1682 = vadd.f32 %v1666, 1.0
        %v1683 = vadd.f32 %v1667, 1.0
        %v1684 = vadd.f32 %v1668, 1.0
        %v1685 = vadd.f32 %v1669, 1.0
        %v1686 = vadd.f32 %v1670, 1.0
        %v1687 = vadd.f32 %v1671, 1.0
        %v1688 = vadd.f32 %v1672, 1.0
        %v1689 = vadd.f32 %v1673, 1.0
        %v1690 = vadd.f32 %v1674, 1.0
        %v1691 = vadd.f32 %v1675, 1.0
        %v1692 = vmul.f32 %v1564, %v1676
        %v1693 = vmul.f32 %v1565, %v1677
        %v1694 = vmul.f32 %v1566, %v1678
        %v1695 = vmul.f32 %v1567, %v1679
        %v1696 = vmul.f32 %v1568, %v1680
        %v1697 = vmul.f32 %v1569, %v1681
        %v1698 = vmul.f32 %v1570, %v1682
        %v1699 = vmul.f32 %v1571, %v1683
        %v1700 = vmul.f32 %v1572, %v1684
        %v1701 = vmul.f32 %v1573, %v1685
        %v1702 = vmul.f32 %v1574, %v1686
        %v1703 = vmul.f32 %v1575, %v1687
        %v1704 = vmul.f32 %v1576, %v1688
        %v1705 = vmul.f32 %v1577, %v1689
        %v1706 = vmul.f32 %v1578, %v1690
        %v1707 = vmul.f32 %v1579, %v1691
        %v1708 = vpack.c.bf16 %v1693, %v1692
        %v1709 = vpack.c.bf16 %v1695, %v1694
        %v1710 = vpack.c.bf16 %v1697, %v1696
        %v1711 = vpack.c.bf16 %v1699, %v1698
        %v1712 = vpack.c.bf16 %v1701, %v1700
        %v1713 = vpack.c.bf16 %v1703, %v1702
        %v1714 = vpack.c.bf16 %v1705, %v1704
        %v1715 = vpack.c.bf16 %v1707, %v1706
        %1716 = vst [vmem:[%s187] sm:$0xff] %v1708
        %1717 = vst [vmem:[%s187 + $0x8] sm:$0xff] %v1709
        %1718 = vst [vmem:[%s187 + $0x10] sm:$0xff] %v1710
        %1719 = vst [vmem:[%s187 + $0x18] sm:$0xff] %v1711
        %1720 = vst [vmem:[%s187 + $0x20] sm:$0xff] %v1712
        %1721 = vst [vmem:[%s187 + $0x28] sm:$0xff] %v1713
        %1722 = vst [vmem:[%s187 + $0x30] sm:$0xff] %v1714
        %1723 = vst [vmem:[%s187 + $0x38] sm:$0xff] %v1715
        %p1724 = scmp.lt.s32.totalorder %s15, 1
        %s1725 = scalar_select %p1724, %s15, 1
        %s1726 = smul.addr %s1725, 16
        %s1727 = smul.addr %s1726, 4
        %s1728 = scalar_lea.vmem %s3, %s1727
        // Predicated region
        $region37: #{mlp_forward.4} parent=31 // pred_check
          %p1729 = pneg %p101
        $region38: #{mlp_forward.4} parent=31 // pred_check_branch
          %1731 = sbr.rel (%p1729) target = $region40
        $region39: #{mlp_forward.4} parent=31 // pred_region
          _
        $region40: #{mlp_forward.4} parent=31 // pred_fallthru
          _
      $region32: #{mlp_forward.4} parent=5 // pred_fallthru
        _
      %p1732 = scmp.le.s32.totalorder 2, %s10
      // Predicated region
      $region41: #{mlp_forward.4} parent=5 // pred_check
        %p1733 = pneg %p1732
      $region42: #{mlp_forward.4} parent=5 // pred_check_branch
        %1735 = sbr.rel (%p1733) target = $region44
      $region43: #{mlp_forward.4} parent=5 // pred_region
        %s1736 = ssub.s32 %s10, 2
        // Predicated region
        $region45: #{mlp_forward.4} parent=43 // pred_check
          %p1737 = pneg %p107
        $region46: #{mlp_forward.4} parent=43 // pred_check_branch
          %1739 = sbr.rel (%p1737) target = $region48
        $region47: #{mlp_forward.4} parent=43 // pred_region
          %p1740 = scmp.lt.s32.totalorder %s16, 1
          %s1741 = scalar_select %p1740, %s16, 1
          %s1742 = smul.addr %s1741, 16
          %s1743 = smul.addr %s1742, 4
          %s1744 = scalar_lea.vmem %s3, %s1743
        $region48: #{mlp_forward.4} parent=43 // pred_fallthru
          _
      $region44: #{mlp_forward.4} parent=5 // pred_fallthru
        _
    $region6: #{mlp_forward.4} parent=1 // loop_footer
      %s14 = sadd.s32 1, %s10
    $region7: #{mlp_forward.4} parent=1 // loop_footer_branch
      %9 = sbr.rel target = $region3
    $region8: #{mlp_forward.4} parent=1 // loop_exit
      _
    %1745 = vsyncpa [#allocation4], 1
    %s1746 = scalar_lea.sflag [#allocation4], 1
    %1747 = vsyncpa %s1746, 1

</llo_original>
